<compile_context>
chip_gen: v7x
topology: tpu7x:2x2x1
jax: 0.10.0
libtpu: 0.0.40
codegen_flags: <defaults>
</compile_context>

<pallas_src>
import jax
import jax.numpy as jnp
from jax.experimental import pallas as pl
from jax.experimental.pallas import tpu as pltpu


# ----------------------------------------------------------------------------
# Kernel body (shared by the 2-D lane-dense path and the 1-D ragged path).
# ----------------------------------------------------------------------------
def _synapse_kernel(g_ref, e_ref, x_ref, s_ref, o_ref):
    # g_ref / e_ref: shape (1,) scalars in SMEM.
    g = g_ref[0]
    e = e_ref[0]
    x = x_ref[...].astype(jnp.float32)
    s = s_ref[...].astype(jnp.float32)
    act = jnp.clip(x, 0.0, 1.0)                     # ClampActivation
    o_ref[...] = ((g * act) * (e - s)).astype(o_ref.dtype)


# ----------------------------------------------------------------------------
# Tiling / budget helpers.
# ----------------------------------------------------------------------------
_MiB = 1024 * 1024
_MAX_LANE_COLS = 4096          # widest lane dimension we try
_MIN_LANE_COLS = 128
_SMALL_BYTES = 256 * 1024      # per-input escape-hatch threshold (plain jnp)


def _chip_budget():
    """(per-input block byte target, vmem_limit_bytes) tuned per TPU generation."""
    kind = ""
    try:
        kind = jax.devices()[0].device_kind.lower()
    except Exception:
        pass

    if "v7" in kind or "7x" in kind:
        # v7x: 64 MiB physical VMEM, fastest HBM -> bigger blocks matter most.
        # 3 arrays x 2 buffers x 4 MiB = 24 MiB pipeline footprint.
        block, limit = 4 * _MiB, 40 * _MiB
    elif "v6" in kind:
        # v6e: 128 MiB physical VMEM -> push blocks to 6 MiB/input (36 MiB pipeline).
        block, limit = 6 * _MiB, 64 * _MiB
    elif "v5" in kind:
        # v5e: low HBM BW, step overhead already small; 2 MiB blocks, explicit limit.
        block, limit = 2 * _MiB, 32 * _MiB
    else:
        block, limit = 2 * _MiB, 32 * _MiB

    # Guarded refinement: never ask for more than ~3/4 of physical VMEM.
    try:
        cap = getattr(pltpu.get_tpu_info(), "vmem_capacity_bytes", None)
        if cap:
            limit = min(limit, int(cap) * 3 // 4)
            block = max(512 * 1024, min(block, limit // 8))
    except Exception:
        pass
    return block, limit


def _pick_cols(n):
    """Largest multiple of 128 (<= 4096) that divides n exactly, else None."""
    for c in range(_MAX_LANE_COLS, _MIN_LANE_COLS - 1, -128):
        if n % c == 0:
            return c
    return None


def _pick_tile_rows(rows, cols, itemsize, target_bytes):
    """Rows per block targeting ~target_bytes/input; multiple of 8 unless full extent."""
    t = max(1, target_bytes // (cols * itemsize))
    if t >= rows:
        return rows                       # full extent -> no (8,128) constraint issue
    return max(8, (t // 8) * 8)           # sublane-aligned block


# ----------------------------------------------------------------------------
# pallas_call wrappers.
# ----------------------------------------------------------------------------
def _run_2d(x2d, s2d, conductance, reversal, tile_rows, vmem_limit):
    rows, cols = x2d.shape
    n = rows * cols
    itemsize = jnp.dtype(x2d.dtype).itemsize
    grid = (pl.cdiv(rows, tile_rows),)    # ragged final row-block handled by masking
    return pl.pallas_call(
        _synapse_kernel,
        out_shape=jax.ShapeDtypeStruct((rows, cols), x2d.dtype),
        grid_spec=pltpu.PrefetchScalarGridSpec(
            num_scalar_prefetch=0,
            grid=grid,
            in_specs=[
                pl.BlockSpec(memory_space=pltpu.SMEM),                # conductance (1,)
                pl.BlockSpec(memory_space=pltpu.SMEM),                # reversal    (1,)
                pl.BlockSpec((tile_rows, cols), lambda i: (i, 0)),    # x tile
                pl.BlockSpec((tile_rows, cols), lambda i: (i, 0)),    # state_post tile
            ],
            out_specs=pl.BlockSpec((tile_rows, cols), lambda i: (i, 0)),
        ),
        compiler_params=pltpu.CompilerParams(
            dimension_semantics=("parallel",),        # shards across v7x's 2 TCs
            vmem_limit_bytes=vmem_limit),
        cost_estimate=pl.CostEstimate(
            flops=3 * n, transcendentals=0, bytes_accessed=3 * n * itemsize),
    )(conductance, reversal, x2d, s2d)


def _run_1d(x1d, s1d, conductance, reversal, blk, vmem_limit):
    n = x1d.shape[0]
    itemsize = jnp.dtype(x1d.dtype).itemsize
    grid = (pl.cdiv(n, blk),)             # ragged final block handled by masking
    return pl.pallas_call(
        _synapse_kernel,
        out_shape=jax.ShapeDtypeStruct((n,), x1d.dtype),
        grid_spec=pltpu.PrefetchScalarGridSpec(
            num_scalar_prefetch=0,
            grid=grid,
            in_specs=[
                pl.BlockSpec(memory_space=pltpu.SMEM),        # conductance (1,)
                pl.BlockSpec(memory_space=pltpu.SMEM),        # reversal    (1,)
                pl.BlockSpec((blk,), lambda i: (i,)),         # x chunk
                pl.BlockSpec((blk,), lambda i: (i,)),         # state_post chunk
            ],
            out_specs=pl.BlockSpec((blk,), lambda i: (i,)),
        ),
        compiler_params=pltpu.CompilerParams(
            dimension_semantics=("parallel",),
            vmem_limit_bytes=vmem_limit),
        cost_estimate=pl.CostEstimate(
            flops=3 * n, transcendentals=0, bytes_accessed=3 * n * itemsize),
    )(conductance, reversal, x1d, s1d)


# ----------------------------------------------------------------------------
# Public entry point.
# ----------------------------------------------------------------------------
def nonspiking_chemical_synapse_elementwise(x, state_post, conductance, reversal):
    """Elementwise chemical synapse: conductance * clamp(x,0,1) * (reversal - state_post).

    x / state_post: arbitrary (e.g. NCHW) tensors of identical shape and dtype.
    conductance / reversal: shape-(1,) parameters. Compute is f32, output
    follows x.dtype.
    """
    assert x.shape == state_post.shape, "x and state_post must have the same shape"
    assert x.dtype == state_post.dtype, "x and state_post must have the same dtype"
    orig_shape = x.shape
    n = int(x.size)
    itemsize = jnp.dtype(x.dtype).itemsize

    conductance = conductance.astype(jnp.float32)
    reversal = reversal.astype(jnp.float32)

    # Small-tensor escape hatch: pallas_call launch + pipeline prologue dwarfs
    # the sub-us of HBM traffic; let XLA fuse the plain expression instead.
    if n * itemsize < _SMALL_BYTES or n < 1024:
        out = (conductance[0] * jnp.clip(x.astype(jnp.float32), 0.0, 1.0)
               * (reversal[0] - state_post.astype(jnp.float32)))
        return out.astype(x.dtype)

    target_block_bytes, vmem_limit = _chip_budget()

    cols = _pick_cols(n)
    if cols is not None:
        # Pad-free lane-dense path: n factors exactly into (rows, cols) with a
        # wide cols; DMAs and stores are big and unmasked (except a possible
        # ragged final row-block handled by the cdiv grid).
        rows = n // cols
        xf = x.reshape(rows, cols)
        sf = state_post.reshape(rows, cols)
        tile_rows = _pick_tile_rows(rows, cols, itemsize, target_block_bytes)
        out2d = _run_2d(xf, sf, conductance, reversal, tile_rows, vmem_limit)
        return out2d.reshape(orig_shape)

    # n not a multiple of 128: flat 1-D cdiv grid with (8*128)-granular blocks;
    # Pallas masks the ragged final block.  No jnp.pad / output slice -> no
    # extra full-array HBM passes.
    blk = max(1024, (target_block_bytes // itemsize) // 1024 * 1024)
    blk = min(blk, max(1024, (n // 1024) * 1024))
    xf = x.reshape(-1)
    sf = state_post.reshape(-1)
    out1d = _run_1d(xf, sf, conductance, reversal, blk, vmem_limit)
    return out1d.reshape(orig_shape)


# ----------------------------------------------------------------------------
# Self-test.
# ----------------------------------------------------------------------------
if __name__ == "__main__":
    key = jax.random.PRNGKey(0)
    k_g, k_e, k_x, k_s, k_x2, k_s2, k_x3, k_s3 = jax.random.split(key, 8)

    # Deterministic parameter init mirroring the PyTorch __init__:
    #   conductance ~ U[0,1), reversal ~ U[-1,1), both shape (1,)
    conductance = jax.random.uniform(k_g, (1,), dtype=jnp.float32)
    reversal = 2.0 * jax.random.uniform(k_e, (1,), dtype=jnp.float32) - 1.0

    def ref_fn(x, s):
        return conductance[0] * jnp.clip(x, 0.0, 1.0) * (reversal[0] - s)

    # 1) Main lane-dense 2-D path (element count multiple of 128, above the
    #    small-tensor threshold).  NCHW feature maps.
    B, C, H, W = 8, 4, 128, 128
    x = jax.random.normal(k_x, (B, C, H, W), dtype=jnp.float32)
    state_post = jax.random.normal(k_s, (B, C, H, W), dtype=jnp.float32)
    out = jax.block_until_ready(
        nonspiking_chemical_synapse_elementwise(x, state_post, conductance, reversal))
    assert out.shape == x.shape
    assert jnp.allclose(out, ref_fn(x, state_post), atol=1e-6, rtol=1e-6)

    # 2) Ragged 1-D path (element count not a multiple of 128, large enough to
    #    skip the escape hatch): exercises the masked final block.
    x2 = jax.random.normal(k_x2, (2, 3, 117, 117), dtype=jnp.float32)
    s2 = jax.random.normal(k_s2, (2, 3, 117, 117), dtype=jnp.float32)
    out2 = jax.block_until_ready(
        nonspiking_chemical_synapse_elementwise(x2, s2, conductance, reversal))
    assert out2.shape == x2.shape
    assert jnp.allclose(out2, ref_fn(x2, s2), atol=1e-6, rtol=1e-6)

    # 3) Small-tensor escape hatch (plain jnp / XLA fusion).
    x3 = jax.random.normal(k_x3, (2, 4, 16, 16), dtype=jnp.float32)
    s3 = jax.random.normal(k_s3, (2, 4, 16, 16), dtype=jnp.float32)
    out3 = jax.block_until_ready(
        nonspiking_chemical_synapse_elementwise(x3, s3, conductance, reversal))
    assert out3.shape == x3.shape
    assert jnp.allclose(out3, ref_fn(x3, s3), atol=1e-6, rtol=1e-6)

    print("KERNEL_OK")
</pallas_src>

<mosaic_0001>
module attributes {stable_mosaic.version = 11 : i64} {
  func.func @_synapse_kernel(%arg0: i32, %arg1: memref<1xf32, #tpu.memory_space<smem>>, %arg2: memref<1xf32, #tpu.memory_space<smem>>, %arg3: memref<128x4096xf32, #tpu.memory_space<vmem>>, %arg4: memref<128x4096xf32, #tpu.memory_space<vmem>>, %arg5: memref<128x4096xf32, #tpu.memory_space<vmem>>) attributes {dimension_semantics = [#tpu.dimension_semantics<parallel>], iteration_bounds = array<i64: 1>, scalar_prefetch = 0 : i64, scratch_operands = 0 : i64, tpu.core_type = #tpu.core_type<tc>, window_params = [{transform_indices = @transform_0, window_bounds = array<i64: 1>}, {transform_indices = @transform_1, window_bounds = array<i64: 1>}, {transform_indices = @transform_2, window_bounds = array<i64: 128, 4096>}, {transform_indices = @transform_3, window_bounds = array<i64: 128, 4096>}, {transform_indices = @transform_4, window_bounds = array<i64: 128, 4096>}]} {
    %c0 = arith.constant 0 : index
    %0 = memref.load %arg1[%c0] : memref<1xf32, #tpu.memory_space<smem>>
    %c0_0 = arith.constant 0 : index
    %1 = memref.load %arg2[%c0_0] : memref<1xf32, #tpu.memory_space<smem>>
    %c0_1 = arith.constant 0 : index
    %c0_2 = arith.constant 0 : index
    %2 = vector.load %arg3[%c0_1, %c0_2] : memref<128x4096xf32, #tpu.memory_space<vmem>>, vector<128x4096xf32>
    %c0_3 = arith.constant 0 : index
    %c0_4 = arith.constant 0 : index
    %3 = vector.load %arg4[%c0_3, %c0_4] : memref<128x4096xf32, #tpu.memory_space<vmem>>, vector<128x4096xf32>
    %cst = arith.constant 0.000000e+00 : f32
    %cst_5 = arith.constant 1.000000e+00 : f32
    %4 = vector.broadcast %cst : f32 to vector<128x4096xf32>
    %5 = arith.maximumf %4, %2 : vector<128x4096xf32>
    %6 = vector.broadcast %cst_5 : f32 to vector<128x4096xf32>
    %7 = arith.minimumf %6, %5 : vector<128x4096xf32>
    %8 = vector.broadcast %0 : f32 to vector<128x4096xf32>
    %9 = arith.mulf %8, %7 : vector<128x4096xf32>
    %10 = vector.broadcast %1 : f32 to vector<128x4096xf32>
    %11 = arith.subf %10, %3 : vector<128x4096xf32>
    %12 = arith.mulf %9, %11 : vector<128x4096xf32>
    %c0_6 = arith.constant 0 : index
    %c0_7 = arith.constant 0 : index
    %13 = vector.load %arg5[%c0_6, %c0_7] : memref<128x4096xf32, #tpu.memory_space<vmem>>, vector<128x4096xf32>
    tpu.vector_store %arg5[%c0_6, %c0_7], %12 {strides = array<i32>} : memref<128x4096xf32, #tpu.memory_space<vmem>>, vector<128x4096xf32>,
    return
  }
  func.func @transform_0(%arg0: i32) -> i32 {
    %c0_i32 = arith.constant 0 : i32
    %c0_i32_0 = arith.constant 0 : i32
    return %c0_i32 : i32
  }
  func.func @transform_1(%arg0: i32) -> i32 {
    %c0_i32 = arith.constant 0 : i32
    %c0_i32_0 = arith.constant 0 : i32
    return %c0_i32 : i32
  }
  func.func @transform_2(%arg0: i32) -> (i32, i32) {
    %c0_i32 = arith.constant 0 : i32
    %c0_i32_0 = arith.constant 0 : i32
    return %arg0, %c0_i32 : i32, i32
  }
  func.func @transform_3(%arg0: i32) -> (i32, i32) {
    %c0_i32 = arith.constant 0 : i32
    %c0_i32_0 = arith.constant 0 : i32
    return %arg0, %c0_i32 : i32, i32
  }
  func.func @transform_4(%arg0: i32) -> (i32, i32) {
    %c0_i32 = arith.constant 0 : i32
    %c0_i32_0 = arith.constant 0 : i32
    return %arg0, %c0_i32 : i32, i32
  }
}

</mosaic_0001>

<llo_original>
// kernel: tpu_custom_call.1
$region0: #{tpu_custom_call.1}
  #allocation0 [shape = 'u32[]', space=smem, size = 0x4, offset = 0x4, fixed_abs, tag = 'smem constant byte address 0x4 - core index']
  #allocation1 [shape = 'u32[144,128]{1,0:T(1,128)}', space=vmem, size = 0x12000, scoped, tag = 'internal scratch']
  #allocation2 [shape = 'f32[1]{0:T(128)S(6)}', space=smem, size = 0x200, scoped, tag = 'scoped memory for tpu_custom_call.1']
  #allocation3 [shape = 'f32[1]{0:T(128)S(6)}', space=smem, size = 0x200, scoped, tag = 'scoped memory for tpu_custom_call.1']
  %s0 = inlined_call_operand.<no memory space> [shape: f32[1], index: 0, kind: input, shape index: {}]
  %s1 = inlined_call_operand.<no memory space> [shape: f32[1], index: 1, kind: input, shape index: {}]
  %s2 = inlined_call_operand.hbm [shape: f32[128,4096], index: 2, kind: input, shape index: {}]
  %s3 = inlined_call_operand.hbm [shape: f32[128,4096], index: 3, kind: input, shape index: {}]
  %s4 = inlined_call_operand.hbm [shape: f32[128,4096], index: 4, kind: output, shape index: {}]
  %s5 = sld [smem:[#allocation0]]
  $region34: #{tpu_custom_call.1} parent=0
    _
  %s7 = ssub.s32 1, %s5
  %s8 = scalar_select 0, %s7, %s5
  %9 = sst [smem:[#allocation2]] %s0
  %10 = sst [smem:[#allocation3]] %s1
  $region1: #{tpu_custom_call.1} parent=0
    #allocation4 [shape = 'u8[2097152]{0}', space=vmem, size = 0x200000, scoped, tag = 'input window, operand 2, single buffered']
    #allocation5 [shape = 's32[1]{0}', space=sflag, size = 0x4, scoped, tag = 'scoped memory for tpu_custom_call.1']
    #allocation6 [shape = 's32[1]{0}', space=sflag, size = 0x4, scoped, tag = 'scoped memory for tpu_custom_call.1']
    #allocation7 [shape = 'u8[2097152]{0}', space=vmem, size = 0x200000, scoped, tag = 'input window, operand 3, single buffered']
    #allocation8 [shape = 's32[1]{0}', space=sflag, size = 0x4, scoped, tag = 'scoped memory for tpu_custom_call.1']
    #allocation9 [shape = 'u8[2097152]{0}', space=vmem, size = 0x200000, scoped, tag = 'output window, operand 0, single buffered']
    %11 = vsyncpa [#allocation5], 0
    %12 = vsyncpa [#allocation8], 0
    %13 = vsyncpa [#allocation6], 0
    // Predicated region
    $region2: #{tpu_custom_call.1} parent=1 // pred_check
      _
    $region3: #{tpu_custom_call.1} parent=1 // pred_check_branch
      %15 = sbr.rel (0) target = $region5
    $region4: #{tpu_custom_call.1} parent=1 // pred_region
      _
    $region5: #{tpu_custom_call.1} parent=1 // pred_fallthru
      _
    // Predicated region
    $region6: #{tpu_custom_call.1} parent=1 // pred_check
      _
    $region7: #{tpu_custom_call.1} parent=1 // pred_check_branch
      %17 = sbr.rel (0) target = $region9
    $region8: #{tpu_custom_call.1} parent=1 // pred_region
      _
    $region9: #{tpu_custom_call.1} parent=1 // pred_fallthru
      _
    // Predicated region
    $region10: #{tpu_custom_call.1} parent=1 // pred_check
      _
    $region11: #{tpu_custom_call.1} parent=1 // pred_check_branch
      %19 = sbr.rel (0) target = $region13
    $region12: #{tpu_custom_call.1} parent=1 // pred_region
      %s21 = ssub.s32 65536, 65536
      %22 = vsyncadd [#allocation5], %s21
      %s23 = sshll.u32 [#allocation4], 4
      %s24 = int_to_ptr.vmem [resolvable:$true] %s23
      %29 = dma.hbm_to_vmem [thread:$0]  %s2, 65536, %s24, [#allocation5], 4096, 4096, 256
    $region13: #{tpu_custom_call.1} parent=1 // pred_fallthru
      _
    // Predicated region
    $region14: #{tpu_custom_call.1} parent=1 // pred_check
      _
    $region15: #{tpu_custom_call.1} parent=1 // pred_check_branch
      %31 = sbr.rel (0) target = $region17
    $region16: #{tpu_custom_call.1} parent=1 // pred_region
      %s33 = ssub.s32 65536, 65536
      %34 = vsyncadd [#allocation8], %s33
      %s35 = sshll.u32 [#allocation7], 4
      %s36 = int_to_ptr.vmem [resolvable:$true] %s35
      %41 = dma.hbm_to_vmem [thread:$0]  %s3, 65536, %s36, [#allocation8], 4096, 4096, 256
    $region17: #{tpu_custom_call.1} parent=1 // pred_fallthru
      _
    // Predicated region
    $region18: #{tpu_custom_call.1} parent=1 // pred_check
      _
    $region19: #{tpu_custom_call.1} parent=1 // pred_check_branch
      %43 = sbr.rel (0) target = $region21
    $region20: #{tpu_custom_call.1} parent=1 // pred_region
      %44 = dma.done [#allocation5], 65536
    $region21: #{tpu_custom_call.1} parent=1 // pred_fallthru
      _
    // Predicated region
    $region22: #{tpu_custom_call.1} parent=1 // pred_check
      _
    $region23: #{tpu_custom_call.1} parent=1 // pred_check_branch
      %46 = sbr.rel (0) target = $region25
    $region24: #{tpu_custom_call.1} parent=1 // pred_region
      %47 = dma.done [#allocation8], 65536
    $region25: #{tpu_custom_call.1} parent=1 // pred_fallthru
      _
    %s48 = sld [smem:[#allocation2]]
    %s49 = sld [smem:[#allocation3]]
    %v50 = vld [vmem:[#allocation4] sm:$0xff]
    %v51 = vld [vmem:[#allocation4 + $0x8] sm:$0xff]
    %v52 = vld [vmem:[#allocation4 + $0x10] sm:$0xff]
    %v53 = vld [vmem:[#allocation4 + $0x18] sm:$0xff]
    %v54 = vld [vmem:[#allocation4 + $0x20] sm:$0xff]
    %v55 = vld [vmem:[#allocation4 + $0x28] sm:$0xff]
    %v56 = vld [vmem:[#allocation4 + $0x30] sm:$0xff]
    %v57 = vld [vmem:[#allocation4 + $0x38] sm:$0xff]
    %v58 = vld [vmem:[#allocation4 + $0x40] sm:$0xff]
    %v59 = vld [vmem:[#allocation4 + $0x48] sm:$0xff]
    %v60 = vld [vmem:[#allocation4 + $0x50] sm:$0xff]
    %v61 = vld [vmem:[#allocation4 + $0x58] sm:$0xff]
    %v62 = vld [vmem:[#allocation4 + $0x60] sm:$0xff]
    %v63 = vld [vmem:[#allocation4 + $0x68] sm:$0xff]
    %v64 = vld [vmem:[#allocation4 + $0x70] sm:$0xff]
    %v65 = vld [vmem:[#allocation4 + $0x78] sm:$0xff]
    %v66 = vld [vmem:[#allocation4 + $0x80] sm:$0xff]
    %v67 = vld [vmem:[#allocation4 + $0x88] sm:$0xff]
    %v68 = vld [vmem:[#allocation4 + $0x90] sm:$0xff]
    %v69 = vld [vmem:[#allocation4 + $0x98] sm:$0xff]
    %v70 = vld [vmem:[#allocation4 + $0xa0] sm:$0xff]
    %v71 = vld [vmem:[#allocation4 + $0xa8] sm:$0xff]
    %v72 = vld [vmem:[#allocation4 + $0xb0] sm:$0xff]
    %v73 = vld [vmem:[#allocation4 + $0xb8] sm:$0xff]
    %v74 = vld [vmem:[#allocation4 + $0xc0] sm:$0xff]
    %v75 = vld [vmem:[#allocation4 + $0xc8] sm:$0xff]
    %v76 = vld [vmem:[#allocation4 + $0xd0] sm:$0xff]
    %v77 = vld [vmem:[#allocation4 + $0xd8] sm:$0xff]
    %v78 = vld [vmem:[#allocation4 + $0xe0] sm:$0xff]
    %v79 = vld [vmem:[#allocation4 + $0xe8] sm:$0xff]
    %v80 = vld [vmem:[#allocation4 + $0xf0] sm:$0xff]
    %v81 = vld [vmem:[#allocation4 + $0xf8] sm:$0xff]
    %v82 = vld [vmem:[#allocation4 + $0x100] sm:$0xff]
    %v83 = vld [vmem:[#allocation4 + $0x108] sm:$0xff]
    %v84 = vld [vmem:[#allocation4 + $0x110] sm:$0xff]
    %v85 = vld [vmem:[#allocation4 + $0x118] sm:$0xff]
    %v86 = vld [vmem:[#allocation4 + $0x120] sm:$0xff]
    %v87 = vld [vmem:[#allocation4 + $0x128] sm:$0xff]
    %v88 = vld [vmem:[#allocation4 + $0x130] sm:$0xff]
    %v89 = vld [vmem:[#allocation4 + $0x138] sm:$0xff]
    %v90 = vld [vmem:[#allocation4 + $0x140] sm:$0xff]
    %v91 = vld [vmem:[#allocation4 + $0x148] sm:$0xff]
    %v92 = vld [vmem:[#allocation4 + $0x150] sm:$0xff]
    %v93 = vld [vmem:[#allocation4 + $0x158] sm:$0xff]
    %v94 = vld [vmem:[#allocation4 + $0x160] sm:$0xff]
    %v95 = vld [vmem:[#allocation4 + $0x168] sm:$0xff]
    %v96 = vld [vmem:[#allocation4 + $0x170] sm:$0xff]
    %v97 = vld [vmem:[#allocation4 + $0x178] sm:$0xff]
    %v98 = vld [vmem:[#allocation4 + $0x180] sm:$0xff]
    %v99 = vld [vmem:[#allocation4 + $0x188] sm:$0xff]
    %v100 = vld [vmem:[#allocation4 + $0x190] sm:$0xff]
    %v101 = vld [vmem:[#allocation4 + $0x198] sm:$0xff]
    %v102 = vld [vmem:[#allocation4 + $0x1a0] sm:$0xff]
    %v103 = vld [vmem:[#allocation4 + $0x1a8] sm:$0xff]
    %v104 = vld [vmem:[#allocation4 + $0x1b0] sm:$0xff]
    %v105 = vld [vmem:[#allocation4 + $0x1b8] sm:$0xff]
    %v106 = vld [vmem:[#allocation4 + $0x1c0] sm:$0xff]
    %v107 = vld [vmem:[#allocation4 + $0x1c8] sm:$0xff]
    %v108 = vld [vmem:[#allocation4 + $0x1d0] sm:$0xff]
    %v109 = vld [vmem:[#allocation4 + $0x1d8] sm:$0xff]
    %v110 = vld [vmem:[#allocation4 + $0x1e0] sm:$0xff]
    %v111 = vld [vmem:[#allocation4 + $0x1e8] sm:$0xff]
    %v112 = vld [vmem:[#allocation4 + $0x1f0] sm:$0xff]
    %v113 = vld [vmem:[#allocation4 + $0x1f8] sm:$0xff]
    %v114 = vld [vmem:[#allocation4 + $0x200] sm:$0xff]
    %v115 = vld [vmem:[#allocation4 + $0x208] sm:$0xff]
    %v116 = vld [vmem:[#allocation4 + $0x210] sm:$0xff]
    %v117 = vld [vmem:[#allocation4 + $0x218] sm:$0xff]
    %v118 = vld [vmem:[#allocation4 + $0x220] sm:$0xff]
    %v119 = vld [vmem:[#allocation4 + $0x228] sm:$0xff]
    %v120 = vld [vmem:[#allocation4 + $0x230] sm:$0xff]
    %v121 = vld [vmem:[#allocation4 + $0x238] sm:$0xff]
    %v122 = vld [vmem:[#allocation4 + $0x240] sm:$0xff]
    %v123 = vld [vmem:[#allocation4 + $0x248] sm:$0xff]
    %v124 = vld [vmem:[#allocation4 + $0x250] sm:$0xff]
    %v125 = vld [vmem:[#allocation4 + $0x258] sm:$0xff]
    %v126 = vld [vmem:[#allocation4 + $0x260] sm:$0xff]
    %v127 = vld [vmem:[#allocation4 + $0x268] sm:$0xff]
    %v128 = vld [vmem:[#allocation4 + $0x270] sm:$0xff]
    %v129 = vld [vmem:[#allocation4 + $0x278] sm:$0xff]
    %v130 = vld [vmem:[#allocation4 + $0x280] sm:$0xff]
    %v131 = vld [vmem:[#allocation4 + $0x288] sm:$0xff]
    %v132 = vld [vmem:[#allocation4 + $0x290] sm:$0xff]
    %v133 = vld [vmem:[#allocation4 + $0x298] sm:$0xff]
    %v134 = vld [vmem:[#allocation4 + $0x2a0] sm:$0xff]
    %v135 = vld [vmem:[#allocation4 + $0x2a8] sm:$0xff]
    %v136 = vld [vmem:[#allocation4 + $0x2b0] sm:$0xff]
    %v137 = vld [vmem:[#allocation4 + $0x2b8] sm:$0xff]
    %v138 = vld [vmem:[#allocation4 + $0x2c0] sm:$0xff]
    %v139 = vld [vmem:[#allocation4 + $0x2c8] sm:$0xff]
    %v140 = vld [vmem:[#allocation4 + $0x2d0] sm:$0xff]
    %v141 = vld [vmem:[#allocation4 + $0x2d8] sm:$0xff]
    %v142 = vld [vmem:[#allocation4 + $0x2e0] sm:$0xff]
    %v143 = vld [vmem:[#allocation4 + $0x2e8] sm:$0xff]
    %v144 = vld [vmem:[#allocation4 + $0x2f0] sm:$0xff]
    %v145 = vld [vmem:[#allocation4 + $0x2f8] sm:$0xff]
    %v146 = vld [vmem:[#allocation4 + $0x300] sm:$0xff]
    %v147 = vld [vmem:[#allocation4 + $0x308] sm:$0xff]
    %v148 = vld [vmem:[#allocation4 + $0x310] sm:$0xff]
    %v149 = vld [vmem:[#allocation4 + $0x318] sm:$0xff]
    %v150 = vld [vmem:[#allocation4 + $0x320] sm:$0xff]
    %v151 = vld [vmem:[#allocation4 + $0x328] sm:$0xff]
    %v152 = vld [vmem:[#allocation4 + $0x330] sm:$0xff]
    %v153 = vld [vmem:[#allocation4 + $0x338] sm:$0xff]
    %v154 = vld [vmem:[#allocation4 + $0x340] sm:$0xff]
    %v155 = vld [vmem:[#allocation4 + $0x348] sm:$0xff]
    %v156 = vld [vmem:[#allocation4 + $0x350] sm:$0xff]
    %v157 = vld [vmem:[#allocation4 + $0x358] sm:$0xff]
    %v158 = vld [vmem:[#allocation4 + $0x360] sm:$0xff]
    %v159 = vld [vmem:[#allocation4 + $0x368] sm:$0xff]
    %v160 = vld [vmem:[#allocation4 + $0x370] sm:$0xff]
    %v161 = vld [vmem:[#allocation4 + $0x378] sm:$0xff]
    %v162 = vld [vmem:[#allocation4 + $0x380] sm:$0xff]
    %v163 = vld [vmem:[#allocation4 + $0x388] sm:$0xff]
    %v164 = vld [vmem:[#allocation4 + $0x390] sm:$0xff]
    %v165 = vld [vmem:[#allocation4 + $0x398] sm:$0xff]
    %v166 = vld [vmem:[#allocation4 + $0x3a0] sm:$0xff]
    %v167 = vld [vmem:[#allocation4 + $0x3a8] sm:$0xff]
    %v168 = vld [vmem:[#allocation4 + $0x3b0] sm:$0xff]
    %v169 = vld [vmem:[#allocation4 + $0x3b8] sm:$0xff]
    %v170 = vld [vmem:[#allocation4 + $0x3c0] sm:$0xff]
    %v171 = vld [vmem:[#allocation4 + $0x3c8] sm:$0xff]
    %v172 = vld [vmem:[#allocation4 + $0x3d0] sm:$0xff]
    %v173 = vld [vmem:[#allocation4 + $0x3d8] sm:$0xff]
    %v174 = vld [vmem:[#allocation4 + $0x3e0] sm:$0xff]
    %v175 = vld [vmem:[#allocation4 + $0x3e8] sm:$0xff]
    %v176 = vld [vmem:[#allocation4 + $0x3f0] sm:$0xff]
    %v177 = vld [vmem:[#allocation4 + $0x3f8] sm:$0xff]
    %v178 = vld [vmem:[#allocation4 + $0x400] sm:$0xff]
    %v179 = vld [vmem:[#allocation4 + $0x408] sm:$0xff]
    %v180 = vld [vmem:[#allocation4 + $0x410] sm:$0xff]
    %v181 = vld [vmem:[#allocation4 + $0x418] sm:$0xff]
    %v182 = vld [vmem:[#allocation4 + $0x420] sm:$0xff]
    %v183 = vld [vmem:[#allocation4 + $0x428] sm:$0xff]
    %v184 = vld [vmem:[#allocation4 + $0x430] sm:$0xff]
    %v185 = vld [vmem:[#allocation4 + $0x438] sm:$0xff]
    %v186 = vld [vmem:[#allocation4 + $0x440] sm:$0xff]
    %v187 = vld [vmem:[#allocation4 + $0x448] sm:$0xff]
    %v188 = vld [vmem:[#allocation4 + $0x450] sm:$0xff]
    %v189 = vld [vmem:[#allocation4 + $0x458] sm:$0xff]
    %v190 = vld [vmem:[#allocation4 + $0x460] sm:$0xff]
    %v191 = vld [vmem:[#allocation4 + $0x468] sm:$0xff]
    %v192 = vld [vmem:[#allocation4 + $0x470] sm:$0xff]
    %v193 = vld [vmem:[#allocation4 + $0x478] sm:$0xff]
    %v194 = vld [vmem:[#allocation4 + $0x480] sm:$0xff]
    %v195 = vld [vmem:[#allocation4 + $0x488] sm:$0xff]
    %v196 = vld [vmem:[#allocation4 + $0x490] sm:$0xff]
    %v197 = vld [vmem:[#allocation4 + $0x498] sm:$0xff]
    %v198 = vld [vmem:[#allocation4 + $0x4a0] sm:$0xff]
    %v199 = vld [vmem:[#allocation4 + $0x4a8] sm:$0xff]
    %v200 = vld [vmem:[#allocation4 + $0x4b0] sm:$0xff]
    %v201 = vld [vmem:[#allocation4 + $0x4b8] sm:$0xff]
    %v202 = vld [vmem:[#allocation4 + $0x4c0] sm:$0xff]
    %v203 = vld [vmem:[#allocation4 + $0x4c8] sm:$0xff]
    %v204 = vld [vmem:[#allocation4 + $0x4d0] sm:$0xff]
    %v205 = vld [vmem:[#allocation4 + $0x4d8] sm:$0xff]
    %v206 = vld [vmem:[#allocation4 + $0x4e0] sm:$0xff]
    %v207 = vld [vmem:[#allocation4 + $0x4e8] sm:$0xff]
    %v208 = vld [vmem:[#allocation4 + $0x4f0] sm:$0xff]
    %v209 = vld [vmem:[#allocation4 + $0x4f8] sm:$0xff]
    %v210 = vld [vmem:[#allocation4 + $0x500] sm:$0xff]
    %v211 = vld [vmem:[#allocation4 + $0x508] sm:$0xff]
    %v212 = vld [vmem:[#allocation4 + $0x510] sm:$0xff]
    %v213 = vld [vmem:[#allocation4 + $0x518] sm:$0xff]
    %v214 = vld [vmem:[#allocation4 + $0x520] sm:$0xff]
    %v215 = vld [vmem:[#allocation4 + $0x528] sm:$0xff]
    %v216 = vld [vmem:[#allocation4 + $0x530] sm:$0xff]
    %v217 = vld [vmem:[#allocation4 + $0x538] sm:$0xff]
    %v218 = vld [vmem:[#allocation4 + $0x540] sm:$0xff]
    %v219 = vld [vmem:[#allocation4 + $0x548] sm:$0xff]
    %v220 = vld [vmem:[#allocation4 + $0x550] sm:$0xff]
    %v221 = vld [vmem:[#allocation4 + $0x558] sm:$0xff]
    %v222 = vld [vmem:[#allocation4 + $0x560] sm:$0xff]
    %v223 = vld [vmem:[#allocation4 + $0x568] sm:$0xff]
    %v224 = vld [vmem:[#allocation4 + $0x570] sm:$0xff]
    %v225 = vld [vmem:[#allocation4 + $0x578] sm:$0xff]
    %v226 = vld [vmem:[#allocation4 + $0x580] sm:$0xff]
    %v227 = vld [vmem:[#allocation4 + $0x588] sm:$0xff]
    %v228 = vld [vmem:[#allocation4 + $0x590] sm:$0xff]
    %v229 = vld [vmem:[#allocation4 + $0x598] sm:$0xff]
    %v230 = vld [vmem:[#allocation4 + $0x5a0] sm:$0xff]
    %v231 = vld [vmem:[#allocation4 + $0x5a8] sm:$0xff]
    %v232 = vld [vmem:[#allocation4 + $0x5b0] sm:$0xff]
    %v233 = vld [vmem:[#allocation4 + $0x5b8] sm:$0xff]
    %v234 = vld [vmem:[#allocation4 + $0x5c0] sm:$0xff]
    %v235 = vld [vmem:[#allocation4 + $0x5c8] sm:$0xff]
    %v236 = vld [vmem:[#allocation4 + $0x5d0] sm:$0xff]
    %v237 = vld [vmem:[#allocation4 + $0x5d8] sm:$0xff]
    %v238 = vld [vmem:[#allocation4 + $0x5e0] sm:$0xff]
    %v239 = vld [vmem:[#allocation4 + $0x5e8] sm:$0xff]
    %v240 = vld [vmem:[#allocation4 + $0x5f0] sm:$0xff]
    %v241 = vld [vmem:[#allocation4 + $0x5f8] sm:$0xff]
    %v242 = vld [vmem:[#allocation4 + $0x600] sm:$0xff]
    %v243 = vld [vmem:[#allocation4 + $0x608] sm:$0xff]
    %v244 = vld [vmem:[#allocation4 + $0x610] sm:$0xff]
    %v245 = vld [vmem:[#allocation4 + $0x618] sm:$0xff]
    %v246 = vld [vmem:[#allocation4 + $0x620] sm:$0xff]
    %v247 = vld [vmem:[#allocation4 + $0x628] sm:$0xff]
    %v248 = vld [vmem:[#allocation4 + $0x630] sm:$0xff]
    %v249 = vld [vmem:[#allocation4 + $0x638] sm:$0xff]
    %v250 = vld [vmem:[#allocation4 + $0x640] sm:$0xff]
    %v251 = vld [vmem:[#allocation4 + $0x648] sm:$0xff]
    %v252 = vld [vmem:[#allocation4 + $0x650] sm:$0xff]
    %v253 = vld [vmem:[#allocation4 + $0x658] sm:$0xff]
    %v254 = vld [vmem:[#allocation4 + $0x660] sm:$0xff]
    %v255 = vld [vmem:[#allocation4 + $0x668] sm:$0xff]
    %v256 = vld [vmem:[#allocation4 + $0x670] sm:$0xff]
    %v257 = vld [vmem:[#allocation4 + $0x678] sm:$0xff]
    %v258 = vld [vmem:[#allocation4 + $0x680] sm:$0xff]
    %v259 = vld [vmem:[#allocation4 + $0x688] sm:$0xff]
    %v260 = vld [vmem:[#allocation4 + $0x690] sm:$0xff]
    %v261 = vld [vmem:[#allocation4 + $0x698] sm:$0xff]
    %v262 = vld [vmem:[#allocation4 + $0x6a0] sm:$0xff]
    %v263 = vld [vmem:[#allocation4 + $0x6a8] sm:$0xff]
    %v264 = vld [vmem:[#allocation4 + $0x6b0] sm:$0xff]
    %v265 = vld [vmem:[#allocation4 + $0x6b8] sm:$0xff]
    %v266 = vld [vmem:[#allocation4 + $0x6c0] sm:$0xff]
    %v267 = vld [vmem:[#allocation4 + $0x6c8] sm:$0xff]
    %v268 = vld [vmem:[#allocation4 + $0x6d0] sm:$0xff]
    %v269 = vld [vmem:[#allocation4 + $0x6d8] sm:$0xff]
    %v270 = vld [vmem:[#allocation4 + $0x6e0] sm:$0xff]
    %v271 = vld [vmem:[#allocation4 + $0x6e8] sm:$0xff]
    %v272 = vld [vmem:[#allocation4 + $0x6f0] sm:$0xff]
    %v273 = vld [vmem:[#allocation4 + $0x6f8] sm:$0xff]
    %v274 = vld [vmem:[#allocation4 + $0x700] sm:$0xff]
    %v275 = vld [vmem:[#allocation4 + $0x708] sm:$0xff]
    %v276 = vld [vmem:[#allocation4 + $0x710] sm:$0xff]
    %v277 = vld [vmem:[#allocation4 + $0x718] sm:$0xff]
    %v278 = vld [vmem:[#allocation4 + $0x720] sm:$0xff]
    %v279 = vld [vmem:[#allocation4 + $0x728] sm:$0xff]
    %v280 = vld [vmem:[#allocation4 + $0x730] sm:$0xff]
    %v281 = vld [vmem:[#allocation4 + $0x738] sm:$0xff]
    %v282 = vld [vmem:[#allocation4 + $0x740] sm:$0xff]
    %v283 = vld [vmem:[#allocation4 + $0x748] sm:$0xff]
    %v284 = vld [vmem:[#allocation4 + $0x750] sm:$0xff]
    %v285 = vld [vmem:[#allocation4 + $0x758] sm:$0xff]
    %v286 = vld [vmem:[#allocation4 + $0x760] sm:$0xff]
    %v287 = vld [vmem:[#allocation4 + $0x768] sm:$0xff]
    %v288 = vld [vmem:[#allocation4 + $0x770] sm:$0xff]
    %v289 = vld [vmem:[#allocation4 + $0x778] sm:$0xff]
    %v290 = vld [vmem:[#allocation4 + $0x780] sm:$0xff]
    %v291 = vld [vmem:[#allocation4 + $0x788] sm:$0xff]
    %v292 = vld [vmem:[#allocation4 + $0x790] sm:$0xff]
    %v293 = vld [vmem:[#allocation4 + $0x798] sm:$0xff]
    %v294 = vld [vmem:[#allocation4 + $0x7a0] sm:$0xff]
    %v295 = vld [vmem:[#allocation4 + $0x7a8] sm:$0xff]
    %v296 = vld [vmem:[#allocation4 + $0x7b0] sm:$0xff]
    %v297 = vld [vmem:[#allocation4 + $0x7b8] sm:$0xff]
    %v298 = vld [vmem:[#allocation4 + $0x7c0] sm:$0xff]
    %v299 = vld [vmem:[#allocation4 + $0x7c8] sm:$0xff]
    %v300 = vld [vmem:[#allocation4 + $0x7d0] sm:$0xff]
    %v301 = vld [vmem:[#allocation4 + $0x7d8] sm:$0xff]
    %v302 = vld [vmem:[#allocation4 + $0x7e0] sm:$0xff]
    %v303 = vld [vmem:[#allocation4 + $0x7e8] sm:$0xff]
    %v304 = vld [vmem:[#allocation4 + $0x7f0] sm:$0xff]
    %v305 = vld [vmem:[#allocation4 + $0x7f8] sm:$0xff]
    %v306 = vld [vmem:[#allocation4 + $0x800] sm:$0xff]
    %v307 = vld [vmem:[#allocation4 + $0x808] sm:$0xff]
    %v308 = vld [vmem:[#allocation4 + $0x810] sm:$0xff]
    %v309 = vld [vmem:[#allocation4 + $0x818] sm:$0xff]
    %v310 = vld [vmem:[#allocation4 + $0x820] sm:$0xff]
    %v311 = vld [vmem:[#allocation4 + $0x828] sm:$0xff]
    %v312 = vld [vmem:[#allocation4 + $0x830] sm:$0xff]
    %v313 = vld [vmem:[#allocation4 + $0x838] sm:$0xff]
    %v314 = vld [vmem:[#allocation4 + $0x840] sm:$0xff]
    %v315 = vld [vmem:[#allocation4 + $0x848] sm:$0xff]
    %v316 = vld [vmem:[#allocation4 + $0x850] sm:$0xff]
    %v317 = vld [vmem:[#allocation4 + $0x858] sm:$0xff]
    %v318 = vld [vmem:[#allocation4 + $0x860] sm:$0xff]
    %v319 = vld [vmem:[#allocation4 + $0x868] sm:$0xff]
    %v320 = vld [vmem:[#allocation4 + $0x870] sm:$0xff]
    %v321 = vld [vmem:[#allocation4 + $0x878] sm:$0xff]
    %v322 = vld [vmem:[#allocation4 + $0x880] sm:$0xff]
    %v323 = vld [vmem:[#allocation4 + $0x888] sm:$0xff]
    %v324 = vld [vmem:[#allocation4 + $0x890] sm:$0xff]
    %v325 = vld [vmem:[#allocation4 + $0x898] sm:$0xff]
    %v326 = vld [vmem:[#allocation4 + $0x8a0] sm:$0xff]
    %v327 = vld [vmem:[#allocation4 + $0x8a8] sm:$0xff]
    %v328 = vld [vmem:[#allocation4 + $0x8b0] sm:$0xff]
    %v329 = vld [vmem:[#allocation4 + $0x8b8] sm:$0xff]
    %v330 = vld [vmem:[#allocation4 + $0x8c0] sm:$0xff]
    %v331 = vld [vmem:[#allocation4 + $0x8c8] sm:$0xff]
    %v332 = vld [vmem:[#allocation4 + $0x8d0] sm:$0xff]
    %v333 = vld [vmem:[#allocation4 + $0x8d8] sm:$0xff]
    %v334 = vld [vmem:[#allocation4 + $0x8e0] sm:$0xff]
    %v335 = vld [vmem:[#allocation4 + $0x8e8] sm:$0xff]
    %v336 = vld [vmem:[#allocation4 + $0x8f0] sm:$0xff]
    %v337 = vld [vmem:[#allocation4 + $0x8f8] sm:$0xff]
    %v338 = vld [vmem:[#allocation4 + $0x900] sm:$0xff]
    %v339 = vld [vmem:[#allocation4 + $0x908] sm:$0xff]
    %v340 = vld [vmem:[#allocation4 + $0x910] sm:$0xff]
    %v341 = vld [vmem:[#allocation4 + $0x918] sm:$0xff]
    %v342 = vld [vmem:[#allocation4 + $0x920] sm:$0xff]
    %v343 = vld [vmem:[#allocation4 + $0x928] sm:$0xff]
    %v344 = vld [vmem:[#allocation4 + $0x930] sm:$0xff]
    %v345 = vld [vmem:[#allocation4 + $0x938] sm:$0xff]
    %v346 = vld [vmem:[#allocation4 + $0x940] sm:$0xff]
    %v347 = vld [vmem:[#allocation4 + $0x948] sm:$0xff]
    %v348 = vld [vmem:[#allocation4 + $0x950] sm:$0xff]
    %v349 = vld [vmem:[#allocation4 + $0x958] sm:$0xff]
    %v350 = vld [vmem:[#allocation4 + $0x960] sm:$0xff]
    %v351 = vld [vmem:[#allocation4 + $0x968] sm:$0xff]
    %v352 = vld [vmem:[#allocation4 + $0x970] sm:$0xff]
    %v353 = vld [vmem:[#allocation4 + $0x978] sm:$0xff]
    %v354 = vld [vmem:[#allocation4 + $0x980] sm:$0xff]
    %v355 = vld [vmem:[#allocation4 + $0x988] sm:$0xff]
    %v356 = vld [vmem:[#allocation4 + $0x990] sm:$0xff]
    %v357 = vld [vmem:[#allocation4 + $0x998] sm:$0xff]
    %v358 = vld [vmem:[#allocation4 + $0x9a0] sm:$0xff]
    %v359 = vld [vmem:[#allocation4 + $0x9a8] sm:$0xff]
    %v360 = vld [vmem:[#allocation4 + $0x9b0] sm:$0xff]
    %v361 = vld [vmem:[#allocation4 + $0x9b8] sm:$0xff]
    %v362 = vld [vmem:[#allocation4 + $0x9c0] sm:$0xff]
    %v363 = vld [vmem:[#allocation4 + $0x9c8] sm:$0xff]
    %v364 = vld [vmem:[#allocation4 + $0x9d0] sm:$0xff]
    %v365 = vld [vmem:[#allocation4 + $0x9d8] sm:$0xff]
    %v366 = vld [vmem:[#allocation4 + $0x9e0] sm:$0xff]
    %v367 = vld [vmem:[#allocation4 + $0x9e8] sm:$0xff]
    %v368 = vld [vmem:[#allocation4 + $0x9f0] sm:$0xff]
    %v369 = vld [vmem:[#allocation4 + $0x9f8] sm:$0xff]
    %v370 = vld [vmem:[#allocation4 + $0xa00] sm:$0xff]
    %v371 = vld [vmem:[#allocation4 + $0xa08] sm:$0xff]
    %v372 = vld [vmem:[#allocation4 + $0xa10] sm:$0xff]
    %v373 = vld [vmem:[#allocation4 + $0xa18] sm:$0xff]
    %v374 = vld [vmem:[#allocation4 + $0xa20] sm:$0xff]
    %v375 = vld [vmem:[#allocation4 + $0xa28] sm:$0xff]
    %v376 = vld [vmem:[#allocation4 + $0xa30] sm:$0xff]
    %v377 = vld [vmem:[#allocation4 + $0xa38] sm:$0xff]
    %v378 = vld [vmem:[#allocation4 + $0xa40] sm:$0xff]
    %v379 = vld [vmem:[#allocation4 + $0xa48] sm:$0xff]
    %v380 = vld [vmem:[#allocation4 + $0xa50] sm:$0xff]
    %v381 = vld [vmem:[#allocation4 + $0xa58] sm:$0xff]
    %v382 = vld [vmem:[#allocation4 + $0xa60] sm:$0xff]
    %v383 = vld [vmem:[#allocation4 + $0xa68] sm:$0xff]
    %v384 = vld [vmem:[#allocation4 + $0xa70] sm:$0xff]
    %v385 = vld [vmem:[#allocation4 + $0xa78] sm:$0xff]
    %v386 = vld [vmem:[#allocation4 + $0xa80] sm:$0xff]
    %v387 = vld [vmem:[#allocation4 + $0xa88] sm:$0xff]
    %v388 = vld [vmem:[#allocation4 + $0xa90] sm:$0xff]
    %v389 = vld [vmem:[#allocation4 + $0xa98] sm:$0xff]
    %v390 = vld [vmem:[#allocation4 + $0xaa0] sm:$0xff]
    %v391 = vld [vmem:[#allocation4 + $0xaa8] sm:$0xff]
    %v392 = vld [vmem:[#allocation4 + $0xab0] sm:$0xff]
    %v393 = vld [vmem:[#allocation4 + $0xab8] sm:$0xff]
    %v394 = vld [vmem:[#allocation4 + $0xac0] sm:$0xff]
    %v395 = vld [vmem:[#allocation4 + $0xac8] sm:$0xff]
    %v396 = vld [vmem:[#allocation4 + $0xad0] sm:$0xff]
    %v397 = vld [vmem:[#allocation4 + $0xad8] sm:$0xff]
    %v398 = vld [vmem:[#allocation4 + $0xae0] sm:$0xff]
    %v399 = vld [vmem:[#allocation4 + $0xae8] sm:$0xff]
    %v400 = vld [vmem:[#allocation4 + $0xaf0] sm:$0xff]
    %v401 = vld [vmem:[#allocation4 + $0xaf8] sm:$0xff]
    %v402 = vld [vmem:[#allocation4 + $0xb00] sm:$0xff]
    %v403 = vld [vmem:[#allocation4 + $0xb08] sm:$0xff]
    %v404 = vld [vmem:[#allocation4 + $0xb10] sm:$0xff]
    %v405 = vld [vmem:[#allocation4 + $0xb18] sm:$0xff]
    %v406 = vld [vmem:[#allocation4 + $0xb20] sm:$0xff]
    %v407 = vld [vmem:[#allocation4 + $0xb28] sm:$0xff]
    %v408 = vld [vmem:[#allocation4 + $0xb30] sm:$0xff]
    %v409 = vld [vmem:[#allocation4 + $0xb38] sm:$0xff]
    %v410 = vld [vmem:[#allocation4 + $0xb40] sm:$0xff]
    %v411 = vld [vmem:[#allocation4 + $0xb48] sm:$0xff]
    %v412 = vld [vmem:[#allocation4 + $0xb50] sm:$0xff]
    %v413 = vld [vmem:[#allocation4 + $0xb58] sm:$0xff]
    %v414 = vld [vmem:[#allocation4 + $0xb60] sm:$0xff]
    %v415 = vld [vmem:[#allocation4 + $0xb68] sm:$0xff]
    %v416 = vld [vmem:[#allocation4 + $0xb70] sm:$0xff]
    %v417 = vld [vmem:[#allocation4 + $0xb78] sm:$0xff]
    %v418 = vld [vmem:[#allocation4 + $0xb80] sm:$0xff]
    %v419 = vld [vmem:[#allocation4 + $0xb88] sm:$0xff]
    %v420 = vld [vmem:[#allocation4 + $0xb90] sm:$0xff]
    %v421 = vld [vmem:[#allocation4 + $0xb98] sm:$0xff]
    %v422 = vld [vmem:[#allocation4 + $0xba0] sm:$0xff]
    %v423 = vld [vmem:[#allocation4 + $0xba8] sm:$0xff]
    %v424 = vld [vmem:[#allocation4 + $0xbb0] sm:$0xff]
    %v425 = vld [vmem:[#allocation4 + $0xbb8] sm:$0xff]
    %v426 = vld [vmem:[#allocation4 + $0xbc0] sm:$0xff]
    %v427 = vld [vmem:[#allocation4 + $0xbc8] sm:$0xff]
    %v428 = vld [vmem:[#allocation4 + $0xbd0] sm:$0xff]
    %v429 = vld [vmem:[#allocation4 + $0xbd8] sm:$0xff]
    %v430 = vld [vmem:[#allocation4 + $0xbe0] sm:$0xff]
    %v431 = vld [vmem:[#allocation4 + $0xbe8] sm:$0xff]
    %v432 = vld [vmem:[#allocation4 + $0xbf0] sm:$0xff]
    %v433 = vld [vmem:[#allocation4 + $0xbf8] sm:$0xff]
    %v434 = vld [vmem:[#allocation4 + $0xc00] sm:$0xff]
    %v435 = vld [vmem:[#allocation4 + $0xc08] sm:$0xff]
    %v436 = vld [vmem:[#allocation4 + $0xc10] sm:$0xff]
    %v437 = vld [vmem:[#allocation4 + $0xc18] sm:$0xff]
    %v438 = vld [vmem:[#allocation4 + $0xc20] sm:$0xff]
    %v439 = vld [vmem:[#allocation4 + $0xc28] sm:$0xff]
    %v440 = vld [vmem:[#allocation4 + $0xc30] sm:$0xff]
    %v441 = vld [vmem:[#allocation4 + $0xc38] sm:$0xff]
    %v442 = vld [vmem:[#allocation4 + $0xc40] sm:$0xff]
    %v443 = vld [vmem:[#allocation4 + $0xc48] sm:$0xff]
    %v444 = vld [vmem:[#allocation4 + $0xc50] sm:$0xff]
    %v445 = vld [vmem:[#allocation4 + $0xc58] sm:$0xff]
    %v446 = vld [vmem:[#allocation4 + $0xc60] sm:$0xff]
    %v447 = vld [vmem:[#allocation4 + $0xc68] sm:$0xff]
    %v448 = vld [vmem:[#allocation4 + $0xc70] sm:$0xff]
    %v449 = vld [vmem:[#allocation4 + $0xc78] sm:$0xff]
    %v450 = vld [vmem:[#allocation4 + $0xc80] sm:$0xff]
    %v451 = vld [vmem:[#allocation4 + $0xc88] sm:$0xff]
    %v452 = vld [vmem:[#allocation4 + $0xc90] sm:$0xff]
    %v453 = vld [vmem:[#allocation4 + $0xc98] sm:$0xff]
    %v454 = vld [vmem:[#allocation4 + $0xca0] sm:$0xff]
    %v455 = vld [vmem:[#allocation4 + $0xca8] sm:$0xff]
    %v456 = vld [vmem:[#allocation4 + $0xcb0] sm:$0xff]
    %v457 = vld [vmem:[#allocation4 + $0xcb8] sm:$0xff]
    %v458 = vld [vmem:[#allocation4 + $0xcc0] sm:$0xff]
    %v459 = vld [vmem:[#allocation4 + $0xcc8] sm:$0xff]
    %v460 = vld [vmem:[#allocation4 + $0xcd0] sm:$0xff]
    %v461 = vld [vmem:[#allocation4 + $0xcd8] sm:$0xff]
    %v462 = vld [vmem:[#allocation4 + $0xce0] sm:$0xff]
    %v463 = vld [vmem:[#allocation4 + $0xce8] sm:$0xff]
    %v464 = vld [vmem:[#allocation4 + $0xcf0] sm:$0xff]
    %v465 = vld [vmem:[#allocation4 + $0xcf8] sm:$0xff]
    %v466 = vld [vmem:[#allocation4 + $0xd00] sm:$0xff]
    %v467 = vld [vmem:[#allocation4 + $0xd08] sm:$0xff]
    %v468 = vld [vmem:[#allocation4 + $0xd10] sm:$0xff]
    %v469 = vld [vmem:[#allocation4 + $0xd18] sm:$0xff]
    %v470 = vld [vmem:[#allocation4 + $0xd20] sm:$0xff]
    %v471 = vld [vmem:[#allocation4 + $0xd28] sm:$0xff]
    %v472 = vld [vmem:[#allocation4 + $0xd30] sm:$0xff]
    %v473 = vld [vmem:[#allocation4 + $0xd38] sm:$0xff]
    %v474 = vld [vmem:[#allocation4 + $0xd40] sm:$0xff]
    %v475 = vld [vmem:[#allocation4 + $0xd48] sm:$0xff]
    %v476 = vld [vmem:[#allocation4 + $0xd50] sm:$0xff]
    %v477 = vld [vmem:[#allocation4 + $0xd58] sm:$0xff]
    %v478 = vld [vmem:[#allocation4 + $0xd60] sm:$0xff]
    %v479 = vld [vmem:[#allocation4 + $0xd68] sm:$0xff]
    %v480 = vld [vmem:[#allocation4 + $0xd70] sm:$0xff]
    %v481 = vld [vmem:[#allocation4 + $0xd78] sm:$0xff]
    %v482 = vld [vmem:[#allocation4 + $0xd80] sm:$0xff]
    %v483 = vld [vmem:[#allocation4 + $0xd88] sm:$0xff]
    %v484 = vld [vmem:[#allocation4 + $0xd90] sm:$0xff]
    %v485 = vld [vmem:[#allocation4 + $0xd98] sm:$0xff]
    %v486 = vld [vmem:[#allocation4 + $0xda0] sm:$0xff]
    %v487 = vld [vmem:[#allocation4 + $0xda8] sm:$0xff]
    %v488 = vld [vmem:[#allocation4 + $0xdb0] sm:$0xff]
    %v489 = vld [vmem:[#allocation4 + $0xdb8] sm:$0xff]
    %v490 = vld [vmem:[#allocation4 + $0xdc0] sm:$0xff]
    %v491 = vld [vmem:[#allocation4 + $0xdc8] sm:$0xff]
    %v492 = vld [vmem:[#allocation4 + $0xdd0] sm:$0xff]
    %v493 = vld [vmem:[#allocation4 + $0xdd8] sm:$0xff]
    %v494 = vld [vmem:[#allocation4 + $0xde0] sm:$0xff]
    %v495 = vld [vmem:[#allocation4 + $0xde8] sm:$0xff]
    %v496 = vld [vmem:[#allocation4 + $0xdf0] sm:$0xff]
    %v497 = vld [vmem:[#allocation4 + $0xdf8] sm:$0xff]
    %v498 = vld [vmem:[#allocation4 + $0xe00] sm:$0xff]
    %v499 = vld [vmem:[#allocation4 + $0xe08] sm:$0xff]
    %v500 = vld [vmem:[#allocation4 + $0xe10] sm:$0xff]
    %v501 = vld [vmem:[#allocation4 + $0xe18] sm:$0xff]
    %v502 = vld [vmem:[#allocation4 + $0xe20] sm:$0xff]
    %v503 = vld [vmem:[#allocation4 + $0xe28] sm:$0xff]
    %v504 = vld [vmem:[#allocation4 + $0xe30] sm:$0xff]
    %v505 = vld [vmem:[#allocation4 + $0xe38] sm:$0xff]
    %v506 = vld [vmem:[#allocation4 + $0xe40] sm:$0xff]
    %v507 = vld [vmem:[#allocation4 + $0xe48] sm:$0xff]
    %v508 = vld [vmem:[#allocation4 + $0xe50] sm:$0xff]
    %v509 = vld [vmem:[#allocation4 + $0xe58] sm:$0xff]
    %v510 = vld [vmem:[#allocation4 + $0xe60] sm:$0xff]
    %v511 = vld [vmem:[#allocation4 + $0xe68] sm:$0xff]
    %v512 = vld [vmem:[#allocation4 + $0xe70] sm:$0xff]
    %v513 = vld [vmem:[#allocation4 + $0xe78] sm:$0xff]
    %v514 = vld [vmem:[#allocation4 + $0xe80] sm:$0xff]
    %v515 = vld [vmem:[#allocation4 + $0xe88] sm:$0xff]
    %v516 = vld [vmem:[#allocation4 + $0xe90] sm:$0xff]
    %v517 = vld [vmem:[#allocation4 + $0xe98] sm:$0xff]
    %v518 = vld [vmem:[#allocation4 + $0xea0] sm:$0xff]
    %v519 = vld [vmem:[#allocation4 + $0xea8] sm:$0xff]
    %v520 = vld [vmem:[#allocation4 + $0xeb0] sm:$0xff]
    %v521 = vld [vmem:[#allocation4 + $0xeb8] sm:$0xff]
    %v522 = vld [vmem:[#allocation4 + $0xec0] sm:$0xff]
    %v523 = vld [vmem:[#allocation4 + $0xec8] sm:$0xff]
    %v524 = vld [vmem:[#allocation4 + $0xed0] sm:$0xff]
    %v525 = vld [vmem:[#allocation4 + $0xed8] sm:$0xff]
    %v526 = vld [vmem:[#allocation4 + $0xee0] sm:$0xff]
    %v527 = vld [vmem:[#allocation4 + $0xee8] sm:$0xff]
    %v528 = vld [vmem:[#allocation4 + $0xef0] sm:$0xff]
    %v529 = vld [vmem:[#allocation4 + $0xef8] sm:$0xff]
    %v530 = vld [vmem:[#allocation4 + $0xf00] sm:$0xff]
    %v531 = vld [vmem:[#allocation4 + $0xf08] sm:$0xff]
    %v532 = vld [vmem:[#allocation4 + $0xf10] sm:$0xff]
    %v533 = vld [vmem:[#allocation4 + $0xf18] sm:$0xff]
    %v534 = vld [vmem:[#allocation4 + $0xf20] sm:$0xff]
    %v535 = vld [vmem:[#allocation4 + $0xf28] sm:$0xff]
    %v536 = vld [vmem:[#allocation4 + $0xf30] sm:$0xff]
    %v537 = vld [vmem:[#allocation4 + $0xf38] sm:$0xff]
    %v538 = vld [vmem:[#allocation4 + $0xf40] sm:$0xff]
    %v539 = vld [vmem:[#allocation4 + $0xf48] sm:$0xff]
    %v540 = vld [vmem:[#allocation4 + $0xf50] sm:$0xff]
    %v541 = vld [vmem:[#allocation4 + $0xf58] sm:$0xff]
    %v542 = vld [vmem:[#allocation4 + $0xf60] sm:$0xff]
    %v543 = vld [vmem:[#allocation4 + $0xf68] sm:$0xff]
    %v544 = vld [vmem:[#allocation4 + $0xf70] sm:$0xff]
    %v545 = vld [vmem:[#allocation4 + $0xf78] sm:$0xff]
    %v546 = vld [vmem:[#allocation4 + $0xf80] sm:$0xff]
    %v547 = vld [vmem:[#allocation4 + $0xf88] sm:$0xff]
    %v548 = vld [vmem:[#allocation4 + $0xf90] sm:$0xff]
    %v549 = vld [vmem:[#allocation4 + $0xf98] sm:$0xff]
    %v550 = vld [vmem:[#allocation4 + $0xfa0] sm:$0xff]
    %v551 = vld [vmem:[#allocation4 + $0xfa8] sm:$0xff]
    %v552 = vld [vmem:[#allocation4 + $0xfb0] sm:$0xff]
    %v553 = vld [vmem:[#allocation4 + $0xfb8] sm:$0xff]
    %v554 = vld [vmem:[#allocation4 + $0xfc0] sm:$0xff]
    %v555 = vld [vmem:[#allocation4 + $0xfc8] sm:$0xff]
    %v556 = vld [vmem:[#allocation4 + $0xfd0] sm:$0xff]
    %v557 = vld [vmem:[#allocation4 + $0xfd8] sm:$0xff]
    %v558 = vld [vmem:[#allocation4 + $0xfe0] sm:$0xff]
    %v559 = vld [vmem:[#allocation4 + $0xfe8] sm:$0xff]
    %v560 = vld [vmem:[#allocation4 + $0xff0] sm:$0xff]
    %v561 = vld [vmem:[#allocation4 + $0xff8] sm:$0xff]
    %v562 = vld [vmem:[#allocation7] sm:$0xff]
    %v563 = vld [vmem:[#allocation7 + $0x8] sm:$0xff]
    %v564 = vld [vmem:[#allocation7 + $0x10] sm:$0xff]
    %v565 = vld [vmem:[#allocation7 + $0x18] sm:$0xff]
    %v566 = vld [vmem:[#allocation7 + $0x20] sm:$0xff]
    %v567 = vld [vmem:[#allocation7 + $0x28] sm:$0xff]
    %v568 = vld [vmem:[#allocation7 + $0x30] sm:$0xff]
    %v569 = vld [vmem:[#allocation7 + $0x38] sm:$0xff]
    %v570 = vld [vmem:[#allocation7 + $0x40] sm:$0xff]
    %v571 = vld [vmem:[#allocation7 + $0x48] sm:$0xff]
    %v572 = vld [vmem:[#allocation7 + $0x50] sm:$0xff]
    %v573 = vld [vmem:[#allocation7 + $0x58] sm:$0xff]
    %v574 = vld [vmem:[#allocation7 + $0x60] sm:$0xff]
    %v575 = vld [vmem:[#allocation7 + $0x68] sm:$0xff]
    %v576 = vld [vmem:[#allocation7 + $0x70] sm:$0xff]
    %v577 = vld [vmem:[#allocation7 + $0x78] sm:$0xff]
    %v578 = vld [vmem:[#allocation7 + $0x80] sm:$0xff]
    %v579 = vld [vmem:[#allocation7 + $0x88] sm:$0xff]
    %v580 = vld [vmem:[#allocation7 + $0x90] sm:$0xff]
    %v581 = vld [vmem:[#allocation7 + $0x98] sm:$0xff]
    %v582 = vld [vmem:[#allocation7 + $0xa0] sm:$0xff]
    %v583 = vld [vmem:[#allocation7 + $0xa8] sm:$0xff]
    %v584 = vld [vmem:[#allocation7 + $0xb0] sm:$0xff]
    %v585 = vld [vmem:[#allocation7 + $0xb8] sm:$0xff]
    %v586 = vld [vmem:[#allocation7 + $0xc0] sm:$0xff]
    %v587 = vld [vmem:[#allocation7 + $0xc8] sm:$0xff]
    %v588 = vld [vmem:[#allocation7 + $0xd0] sm:$0xff]
    %v589 = vld [vmem:[#allocation7 + $0xd8] sm:$0xff]
    %v590 = vld [vmem:[#allocation7 + $0xe0] sm:$0xff]
    %v591 = vld [vmem:[#allocation7 + $0xe8] sm:$0xff]
    %v592 = vld [vmem:[#allocation7 + $0xf0] sm:$0xff]
    %v593 = vld [vmem:[#allocation7 + $0xf8] sm:$0xff]
    %v594 = vld [vmem:[#allocation7 + $0x100] sm:$0xff]
    %v595 = vld [vmem:[#allocation7 + $0x108] sm:$0xff]
    %v596 = vld [vmem:[#allocation7 + $0x110] sm:$0xff]
    %v597 = vld [vmem:[#allocation7 + $0x118] sm:$0xff]
    %v598 = vld [vmem:[#allocation7 + $0x120] sm:$0xff]
    %v599 = vld [vmem:[#allocation7 + $0x128] sm:$0xff]
    %v600 = vld [vmem:[#allocation7 + $0x130] sm:$0xff]
    %v601 = vld [vmem:[#allocation7 + $0x138] sm:$0xff]
    %v602 = vld [vmem:[#allocation7 + $0x140] sm:$0xff]
    %v603 = vld [vmem:[#allocation7 + $0x148] sm:$0xff]
    %v604 = vld [vmem:[#allocation7 + $0x150] sm:$0xff]
    %v605 = vld [vmem:[#allocation7 + $0x158] sm:$0xff]
    %v606 = vld [vmem:[#allocation7 + $0x160] sm:$0xff]
    %v607 = vld [vmem:[#allocation7 + $0x168] sm:$0xff]
    %v608 = vld [vmem:[#allocation7 + $0x170] sm:$0xff]
    %v609 = vld [vmem:[#allocation7 + $0x178] sm:$0xff]
    %v610 = vld [vmem:[#allocation7 + $0x180] sm:$0xff]
    %v611 = vld [vmem:[#allocation7 + $0x188] sm:$0xff]
    %v612 = vld [vmem:[#allocation7 + $0x190] sm:$0xff]
    %v613 = vld [vmem:[#allocation7 + $0x198] sm:$0xff]
    %v614 = vld [vmem:[#allocation7 + $0x1a0] sm:$0xff]
    %v615 = vld [vmem:[#allocation7 + $0x1a8] sm:$0xff]
    %v616 = vld [vmem:[#allocation7 + $0x1b0] sm:$0xff]
    %v617 = vld [vmem:[#allocation7 + $0x1b8] sm:$0xff]
    %v618 = vld [vmem:[#allocation7 + $0x1c0] sm:$0xff]
    %v619 = vld [vmem:[#allocation7 + $0x1c8] sm:$0xff]
    %v620 = vld [vmem:[#allocation7 + $0x1d0] sm:$0xff]
    %v621 = vld [vmem:[#allocation7 + $0x1d8] sm:$0xff]
    %v622 = vld [vmem:[#allocation7 + $0x1e0] sm:$0xff]
    %v623 = vld [vmem:[#allocation7 + $0x1e8] sm:$0xff]
    %v624 = vld [vmem:[#allocation7 + $0x1f0] sm:$0xff]
    %v625 = vld [vmem:[#allocation7 + $0x1f8] sm:$0xff]
    %v626 = vld [vmem:[#allocation7 + $0x200] sm:$0xff]
    %v627 = vld [vmem:[#allocation7 + $0x208] sm:$0xff]
    %v628 = vld [vmem:[#allocation7 + $0x210] sm:$0xff]
    %v629 = vld [vmem:[#allocation7 + $0x218] sm:$0xff]
    %v630 = vld [vmem:[#allocation7 + $0x220] sm:$0xff]
    %v631 = vld [vmem:[#allocation7 + $0x228] sm:$0xff]
    %v632 = vld [vmem:[#allocation7 + $0x230] sm:$0xff]
    %v633 = vld [vmem:[#allocation7 + $0x238] sm:$0xff]
    %v634 = vld [vmem:[#allocation7 + $0x240] sm:$0xff]
    %v635 = vld [vmem:[#allocation7 + $0x248] sm:$0xff]
    %v636 = vld [vmem:[#allocation7 + $0x250] sm:$0xff]
    %v637 = vld [vmem:[#allocation7 + $0x258] sm:$0xff]
    %v638 = vld [vmem:[#allocation7 + $0x260] sm:$0xff]
    %v639 = vld [vmem:[#allocation7 + $0x268] sm:$0xff]
    %v640 = vld [vmem:[#allocation7 + $0x270] sm:$0xff]
    %v641 = vld [vmem:[#allocation7 + $0x278] sm:$0xff]
    %v642 = vld [vmem:[#allocation7 + $0x280] sm:$0xff]
    %v643 = vld [vmem:[#allocation7 + $0x288] sm:$0xff]
    %v644 = vld [vmem:[#allocation7 + $0x290] sm:$0xff]
    %v645 = vld [vmem:[#allocation7 + $0x298] sm:$0xff]
    %v646 = vld [vmem:[#allocation7 + $0x2a0] sm:$0xff]
    %v647 = vld [vmem:[#allocation7 + $0x2a8] sm:$0xff]
    %v648 = vld [vmem:[#allocation7 + $0x2b0] sm:$0xff]
    %v649 = vld [vmem:[#allocation7 + $0x2b8] sm:$0xff]
    %v650 = vld [vmem:[#allocation7 + $0x2c0] sm:$0xff]
    %v651 = vld [vmem:[#allocation7 + $0x2c8] sm:$0xff]
    %v652 = vld [vmem:[#allocation7 + $0x2d0] sm:$0xff]
    %v653 = vld [vmem:[#allocation7 + $0x2d8] sm:$0xff]
    %v654 = vld [vmem:[#allocation7 + $0x2e0] sm:$0xff]
    %v655 = vld [vmem:[#allocation7 + $0x2e8] sm:$0xff]
    %v656 = vld [vmem:[#allocation7 + $0x2f0] sm:$0xff]
    %v657 = vld [vmem:[#allocation7 + $0x2f8] sm:$0xff]
    %v658 = vld [vmem:[#allocation7 + $0x300] sm:$0xff]
    %v659 = vld [vmem:[#allocation7 + $0x308] sm:$0xff]
    %v660 = vld [vmem:[#allocation7 + $0x310] sm:$0xff]
    %v661 = vld [vmem:[#allocation7 + $0x318] sm:$0xff]
    %v662 = vld [vmem:[#allocation7 + $0x320] sm:$0xff]
    %v663 = vld [vmem:[#allocation7 + $0x328] sm:$0xff]
    %v664 = vld [vmem:[#allocation7 + $0x330] sm:$0xff]
    %v665 = vld [vmem:[#allocation7 + $0x338] sm:$0xff]
    %v666 = vld [vmem:[#allocation7 + $0x340] sm:$0xff]
    %v667 = vld [vmem:[#allocation7 + $0x348] sm:$0xff]
    %v668 = vld [vmem:[#allocation7 + $0x350] sm:$0xff]
    %v669 = vld [vmem:[#allocation7 + $0x358] sm:$0xff]
    %v670 = vld [vmem:[#allocation7 + $0x360] sm:$0xff]
    %v671 = vld [vmem:[#allocation7 + $0x368] sm:$0xff]
    %v672 = vld [vmem:[#allocation7 + $0x370] sm:$0xff]
    %v673 = vld [vmem:[#allocation7 + $0x378] sm:$0xff]
    %v674 = vld [vmem:[#allocation7 + $0x380] sm:$0xff]
    %v675 = vld [vmem:[#allocation7 + $0x388] sm:$0xff]
    %v676 = vld [vmem:[#allocation7 + $0x390] sm:$0xff]
    %v677 = vld [vmem:[#allocation7 + $0x398] sm:$0xff]
    %v678 = vld [vmem:[#allocation7 + $0x3a0] sm:$0xff]
    %v679 = vld [vmem:[#allocation7 + $0x3a8] sm:$0xff]
    %v680 = vld [vmem:[#allocation7 + $0x3b0] sm:$0xff]
    %v681 = vld [vmem:[#allocation7 + $0x3b8] sm:$0xff]
    %v682 = vld [vmem:[#allocation7 + $0x3c0] sm:$0xff]
    %v683 = vld [vmem:[#allocation7 + $0x3c8] sm:$0xff]
    %v684 = vld [vmem:[#allocation7 + $0x3d0] sm:$0xff]
    %v685 = vld [vmem:[#allocation7 + $0x3d8] sm:$0xff]
    %v686 = vld [vmem:[#allocation7 + $0x3e0] sm:$0xff]
    %v687 = vld [vmem:[#allocation7 + $0x3e8] sm:$0xff]
    %v688 = vld [vmem:[#allocation7 + $0x3f0] sm:$0xff]
    %v689 = vld [vmem:[#allocation7 + $0x3f8] sm:$0xff]
    %v690 = vld [vmem:[#allocation7 + $0x400] sm:$0xff]
    %v691 = vld [vmem:[#allocation7 + $0x408] sm:$0xff]
    %v692 = vld [vmem:[#allocation7 + $0x410] sm:$0xff]
    %v693 = vld [vmem:[#allocation7 + $0x418] sm:$0xff]
    %v694 = vld [vmem:[#allocation7 + $0x420] sm:$0xff]
    %v695 = vld [vmem:[#allocation7 + $0x428] sm:$0xff]
    %v696 = vld [vmem:[#allocation7 + $0x430] sm:$0xff]
    %v697 = vld [vmem:[#allocation7 + $0x438] sm:$0xff]
    %v698 = vld [vmem:[#allocation7 + $0x440] sm:$0xff]
    %v699 = vld [vmem:[#allocation7 + $0x448] sm:$0xff]
    %v700 = vld [vmem:[#allocation7 + $0x450] sm:$0xff]
    %v701 = vld [vmem:[#allocation7 + $0x458] sm:$0xff]
    %v702 = vld [vmem:[#allocation7 + $0x460] sm:$0xff]
    %v703 = vld [vmem:[#allocation7 + $0x468] sm:$0xff]
    %v704 = vld [vmem:[#allocation7 + $0x470] sm:$0xff]
    %v705 = vld [vmem:[#allocation7 + $0x478] sm:$0xff]
    %v706 = vld [vmem:[#allocation7 + $0x480] sm:$0xff]
    %v707 = vld [vmem:[#allocation7 + $0x488] sm:$0xff]
    %v708 = vld [vmem:[#allocation7 + $0x490] sm:$0xff]
    %v709 = vld [vmem:[#allocation7 + $0x498] sm:$0xff]
    %v710 = vld [vmem:[#allocation7 + $0x4a0] sm:$0xff]
    %v711 = vld [vmem:[#allocation7 + $0x4a8] sm:$0xff]
    %v712 = vld [vmem:[#allocation7 + $0x4b0] sm:$0xff]
    %v713 = vld [vmem:[#allocation7 + $0x4b8] sm:$0xff]
    %v714 = vld [vmem:[#allocation7 + $0x4c0] sm:$0xff]
    %v715 = vld [vmem:[#allocation7 + $0x4c8] sm:$0xff]
    %v716 = vld [vmem:[#allocation7 + $0x4d0] sm:$0xff]
    %v717 = vld [vmem:[#allocation7 + $0x4d8] sm:$0xff]
    %v718 = vld [vmem:[#allocation7 + $0x4e0] sm:$0xff]
    %v719 = vld [vmem:[#allocation7 + $0x4e8] sm:$0xff]
    %v720 = vld [vmem:[#allocation7 + $0x4f0] sm:$0xff]
    %v721 = vld [vmem:[#allocation7 + $0x4f8] sm:$0xff]
    %v722 = vld [vmem:[#allocation7 + $0x500] sm:$0xff]
    %v723 = vld [vmem:[#allocation7 + $0x508] sm:$0xff]
    %v724 = vld [vmem:[#allocation7 + $0x510] sm:$0xff]
    %v725 = vld [vmem:[#allocation7 + $0x518] sm:$0xff]
    %v726 = vld [vmem:[#allocation7 + $0x520] sm:$0xff]
    %v727 = vld [vmem:[#allocation7 + $0x528] sm:$0xff]
    %v728 = vld [vmem:[#allocation7 + $0x530] sm:$0xff]
    %v729 = vld [vmem:[#allocation7 + $0x538] sm:$0xff]
    %v730 = vld [vmem:[#allocation7 + $0x540] sm:$0xff]
    %v731 = vld [vmem:[#allocation7 + $0x548] sm:$0xff]
    %v732 = vld [vmem:[#allocation7 + $0x550] sm:$0xff]
    %v733 = vld [vmem:[#allocation7 + $0x558] sm:$0xff]
    %v734 = vld [vmem:[#allocation7 + $0x560] sm:$0xff]
    %v735 = vld [vmem:[#allocation7 + $0x568] sm:$0xff]
    %v736 = vld [vmem:[#allocation7 + $0x570] sm:$0xff]
    %v737 = vld [vmem:[#allocation7 + $0x578] sm:$0xff]
    %v738 = vld [vmem:[#allocation7 + $0x580] sm:$0xff]
    %v739 = vld [vmem:[#allocation7 + $0x588] sm:$0xff]
    %v740 = vld [vmem:[#allocation7 + $0x590] sm:$0xff]
    %v741 = vld [vmem:[#allocation7 + $0x598] sm:$0xff]
    %v742 = vld [vmem:[#allocation7 + $0x5a0] sm:$0xff]
    %v743 = vld [vmem:[#allocation7 + $0x5a8] sm:$0xff]
    %v744 = vld [vmem:[#allocation7 + $0x5b0] sm:$0xff]
    %v745 = vld [vmem:[#allocation7 + $0x5b8] sm:$0xff]
    %v746 = vld [vmem:[#allocation7 + $0x5c0] sm:$0xff]
    %v747 = vld [vmem:[#allocation7 + $0x5c8] sm:$0xff]
    %v748 = vld [vmem:[#allocation7 + $0x5d0] sm:$0xff]
    %v749 = vld [vmem:[#allocation7 + $0x5d8] sm:$0xff]
    %v750 = vld [vmem:[#allocation7 + $0x5e0] sm:$0xff]
    %v751 = vld [vmem:[#allocation7 + $0x5e8] sm:$0xff]
    %v752 = vld [vmem:[#allocation7 + $0x5f0] sm:$0xff]
    %v753 = vld [vmem:[#allocation7 + $0x5f8] sm:$0xff]
    %v754 = vld [vmem:[#allocation7 + $0x600] sm:$0xff]
    %v755 = vld [vmem:[#allocation7 + $0x608] sm:$0xff]
    %v756 = vld [vmem:[#allocation7 + $0x610] sm:$0xff]
    %v757 = vld [vmem:[#allocation7 + $0x618] sm:$0xff]
    %v758 = vld [vmem:[#allocation7 + $0x620] sm:$0xff]
    %v759 = vld [vmem:[#allocation7 + $0x628] sm:$0xff]
    %v760 = vld [vmem:[#allocation7 + $0x630] sm:$0xff]
    %v761 = vld [vmem:[#allocation7 + $0x638] sm:$0xff]
    %v762 = vld [vmem:[#allocation7 + $0x640] sm:$0xff]
    %v763 = vld [vmem:[#allocation7 + $0x648] sm:$0xff]
    %v764 = vld [vmem:[#allocation7 + $0x650] sm:$0xff]
    %v765 = vld [vmem:[#allocation7 + $0x658] sm:$0xff]
    %v766 = vld [vmem:[#allocation7 + $0x660] sm:$0xff]
    %v767 = vld [vmem:[#allocation7 + $0x668] sm:$0xff]
    %v768 = vld [vmem:[#allocation7 + $0x670] sm:$0xff]
    %v769 = vld [vmem:[#allocation7 + $0x678] sm:$0xff]
    %v770 = vld [vmem:[#allocation7 + $0x680] sm:$0xff]
    %v771 = vld [vmem:[#allocation7 + $0x688] sm:$0xff]
    %v772 = vld [vmem:[#allocation7 + $0x690] sm:$0xff]
    %v773 = vld [vmem:[#allocation7 + $0x698] sm:$0xff]
    %v774 = vld [vmem:[#allocation7 + $0x6a0] sm:$0xff]
    %v775 = vld [vmem:[#allocation7 + $0x6a8] sm:$0xff]
    %v776 = vld [vmem:[#allocation7 + $0x6b0] sm:$0xff]
    %v777 = vld [vmem:[#allocation7 + $0x6b8] sm:$0xff]
    %v778 = vld [vmem:[#allocation7 + $0x6c0] sm:$0xff]
    %v779 = vld [vmem:[#allocation7 + $0x6c8] sm:$0xff]
    %v780 = vld [vmem:[#allocation7 + $0x6d0] sm:$0xff]
    %v781 = vld [vmem:[#allocation7 + $0x6d8] sm:$0xff]
    %v782 = vld [vmem:[#allocation7 + $0x6e0] sm:$0xff]
    %v783 = vld [vmem:[#allocation7 + $0x6e8] sm:$0xff]
    %v784 = vld [vmem:[#allocation7 + $0x6f0] sm:$0xff]
    %v785 = vld [vmem:[#allocation7 + $0x6f8] sm:$0xff]
    %v786 = vld [vmem:[#allocation7 + $0x700] sm:$0xff]
    %v787 = vld [vmem:[#allocation7 + $0x708] sm:$0xff]
    %v788 = vld [vmem:[#allocation7 + $0x710] sm:$0xff]
    %v789 = vld [vmem:[#allocation7 + $0x718] sm:$0xff]
    %v790 = vld [vmem:[#allocation7 + $0x720] sm:$0xff]
    %v791 = vld [vmem:[#allocation7 + $0x728] sm:$0xff]
    %v792 = vld [vmem:[#allocation7 + $0x730] sm:$0xff]
    %v793 = vld [vmem:[#allocation7 + $0x738] sm:$0xff]
    %v794 = vld [vmem:[#allocation7 + $0x740] sm:$0xff]
    %v795 = vld [vmem:[#allocation7 + $0x748] sm:$0xff]
    %v796 = vld [vmem:[#allocation7 + $0x750] sm:$0xff]
    %v797 = vld [vmem:[#allocation7 + $0x758] sm:$0xff]
    %v798 = vld [vmem:[#allocation7 + $0x760] sm:$0xff]
    %v799 = vld [vmem:[#allocation7 + $0x768] sm:$0xff]
    %v800 = vld [vmem:[#allocation7 + $0x770] sm:$0xff]
    %v801 = vld [vmem:[#allocation7 + $0x778] sm:$0xff]
    %v802 = vld [vmem:[#allocation7 + $0x780] sm:$0xff]
    %v803 = vld [vmem:[#allocation7 + $0x788] sm:$0xff]
    %v804 = vld [vmem:[#allocation7 + $0x790] sm:$0xff]
    %v805 = vld [vmem:[#allocation7 + $0x798] sm:$0xff]
    %v806 = vld [vmem:[#allocation7 + $0x7a0] sm:$0xff]
    %v807 = vld [vmem:[#allocation7 + $0x7a8] sm:$0xff]
    %v808 = vld [vmem:[#allocation7 + $0x7b0] sm:$0xff]
    %v809 = vld [vmem:[#allocation7 + $0x7b8] sm:$0xff]
    %v810 = vld [vmem:[#allocation7 + $0x7c0] sm:$0xff]
    %v811 = vld [vmem:[#allocation7 + $0x7c8] sm:$0xff]
    %v812 = vld [vmem:[#allocation7 + $0x7d0] sm:$0xff]
    %v813 = vld [vmem:[#allocation7 + $0x7d8] sm:$0xff]
    %v814 = vld [vmem:[#allocation7 + $0x7e0] sm:$0xff]
    %v815 = vld [vmem:[#allocation7 + $0x7e8] sm:$0xff]
    %v816 = vld [vmem:[#allocation7 + $0x7f0] sm:$0xff]
    %v817 = vld [vmem:[#allocation7 + $0x7f8] sm:$0xff]
    %v818 = vld [vmem:[#allocation7 + $0x800] sm:$0xff]
    %v819 = vld [vmem:[#allocation7 + $0x808] sm:$0xff]
    %v820 = vld [vmem:[#allocation7 + $0x810] sm:$0xff]
    %v821 = vld [vmem:[#allocation7 + $0x818] sm:$0xff]
    %v822 = vld [vmem:[#allocation7 + $0x820] sm:$0xff]
    %v823 = vld [vmem:[#allocation7 + $0x828] sm:$0xff]
    %v824 = vld [vmem:[#allocation7 + $0x830] sm:$0xff]
    %v825 = vld [vmem:[#allocation7 + $0x838] sm:$0xff]
    %v826 = vld [vmem:[#allocation7 + $0x840] sm:$0xff]
    %v827 = vld [vmem:[#allocation7 + $0x848] sm:$0xff]
    %v828 = vld [vmem:[#allocation7 + $0x850] sm:$0xff]
    %v829 = vld [vmem:[#allocation7 + $0x858] sm:$0xff]
    %v830 = vld [vmem:[#allocation7 + $0x860] sm:$0xff]
    %v831 = vld [vmem:[#allocation7 + $0x868] sm:$0xff]
    %v832 = vld [vmem:[#allocation7 + $0x870] sm:$0xff]
    %v833 = vld [vmem:[#allocation7 + $0x878] sm:$0xff]
    %v834 = vld [vmem:[#allocation7 + $0x880] sm:$0xff]
    %v835 = vld [vmem:[#allocation7 + $0x888] sm:$0xff]
    %v836 = vld [vmem:[#allocation7 + $0x890] sm:$0xff]
    %v837 = vld [vmem:[#allocation7 + $0x898] sm:$0xff]
    %v838 = vld [vmem:[#allocation7 + $0x8a0] sm:$0xff]
    %v839 = vld [vmem:[#allocation7 + $0x8a8] sm:$0xff]
    %v840 = vld [vmem:[#allocation7 + $0x8b0] sm:$0xff]
    %v841 = vld [vmem:[#allocation7 + $0x8b8] sm:$0xff]
    %v842 = vld [vmem:[#allocation7 + $0x8c0] sm:$0xff]
    %v843 = vld [vmem:[#allocation7 + $0x8c8] sm:$0xff]
    %v844 = vld [vmem:[#allocation7 + $0x8d0] sm:$0xff]
    %v845 = vld [vmem:[#allocation7 + $0x8d8] sm:$0xff]
    %v846 = vld [vmem:[#allocation7 + $0x8e0] sm:$0xff]
    %v847 = vld [vmem:[#allocation7 + $0x8e8] sm:$0xff]
    %v848 = vld [vmem:[#allocation7 + $0x8f0] sm:$0xff]
    %v849 = vld [vmem:[#allocation7 + $0x8f8] sm:$0xff]
    %v850 = vld [vmem:[#allocation7 + $0x900] sm:$0xff]
    %v851 = vld [vmem:[#allocation7 + $0x908] sm:$0xff]
    %v852 = vld [vmem:[#allocation7 + $0x910] sm:$0xff]
    %v853 = vld [vmem:[#allocation7 + $0x918] sm:$0xff]
    %v854 = vld [vmem:[#allocation7 + $0x920] sm:$0xff]
    %v855 = vld [vmem:[#allocation7 + $0x928] sm:$0xff]
    %v856 = vld [vmem:[#allocation7 + $0x930] sm:$0xff]
    %v857 = vld [vmem:[#allocation7 + $0x938] sm:$0xff]
    %v858 = vld [vmem:[#allocation7 + $0x940] sm:$0xff]
    %v859 = vld [vmem:[#allocation7 + $0x948] sm:$0xff]
    %v860 = vld [vmem:[#allocation7 + $0x950] sm:$0xff]
    %v861 = vld [vmem:[#allocation7 + $0x958] sm:$0xff]
    %v862 = vld [vmem:[#allocation7 + $0x960] sm:$0xff]
    %v863 = vld [vmem:[#allocation7 + $0x968] sm:$0xff]
    %v864 = vld [vmem:[#allocation7 + $0x970] sm:$0xff]
    %v865 = vld [vmem:[#allocation7 + $0x978] sm:$0xff]
    %v866 = vld [vmem:[#allocation7 + $0x980] sm:$0xff]
    %v867 = vld [vmem:[#allocation7 + $0x988] sm:$0xff]
    %v868 = vld [vmem:[#allocation7 + $0x990] sm:$0xff]
    %v869 = vld [vmem:[#allocation7 + $0x998] sm:$0xff]
    %v870 = vld [vmem:[#allocation7 + $0x9a0] sm:$0xff]
    %v871 = vld [vmem:[#allocation7 + $0x9a8] sm:$0xff]
    %v872 = vld [vmem:[#allocation7 + $0x9b0] sm:$0xff]
    %v873 = vld [vmem:[#allocation7 + $0x9b8] sm:$0xff]
    %v874 = vld [vmem:[#allocation7 + $0x9c0] sm:$0xff]
    %v875 = vld [vmem:[#allocation7 + $0x9c8] sm:$0xff]
    %v876 = vld [vmem:[#allocation7 + $0x9d0] sm:$0xff]
    %v877 = vld [vmem:[#allocation7 + $0x9d8] sm:$0xff]
    %v878 = vld [vmem:[#allocation7 + $0x9e0] sm:$0xff]
    %v879 = vld [vmem:[#allocation7 + $0x9e8] sm:$0xff]
    %v880 = vld [vmem:[#allocation7 + $0x9f0] sm:$0xff]
    %v881 = vld [vmem:[#allocation7 + $0x9f8] sm:$0xff]
    %v882 = vld [vmem:[#allocation7 + $0xa00] sm:$0xff]
    %v883 = vld [vmem:[#allocation7 + $0xa08] sm:$0xff]
    %v884 = vld [vmem:[#allocation7 + $0xa10] sm:$0xff]
    %v885 = vld [vmem:[#allocation7 + $0xa18] sm:$0xff]
    %v886 = vld [vmem:[#allocation7 + $0xa20] sm:$0xff]
    %v887 = vld [vmem:[#allocation7 + $0xa28] sm:$0xff]
    %v888 = vld [vmem:[#allocation7 + $0xa30] sm:$0xff]
    %v889 = vld [vmem:[#allocation7 + $0xa38] sm:$0xff]
    %v890 = vld [vmem:[#allocation7 + $0xa40] sm:$0xff]
    %v891 = vld [vmem:[#allocation7 + $0xa48] sm:$0xff]
    %v892 = vld [vmem:[#allocation7 + $0xa50] sm:$0xff]
    %v893 = vld [vmem:[#allocation7 + $0xa58] sm:$0xff]
    %v894 = vld [vmem:[#allocation7 + $0xa60] sm:$0xff]
    %v895 = vld [vmem:[#allocation7 + $0xa68] sm:$0xff]
    %v896 = vld [vmem:[#allocation7 + $0xa70] sm:$0xff]
    %v897 = vld [vmem:[#allocation7 + $0xa78] sm:$0xff]
    %v898 = vld [vmem:[#allocation7 + $0xa80] sm:$0xff]
    %v899 = vld [vmem:[#allocation7 + $0xa88] sm:$0xff]
    %v900 = vld [vmem:[#allocation7 + $0xa90] sm:$0xff]
    %v901 = vld [vmem:[#allocation7 + $0xa98] sm:$0xff]
    %v902 = vld [vmem:[#allocation7 + $0xaa0] sm:$0xff]
    %v903 = vld [vmem:[#allocation7 + $0xaa8] sm:$0xff]
    %v904 = vld [vmem:[#allocation7 + $0xab0] sm:$0xff]
    %v905 = vld [vmem:[#allocation7 + $0xab8] sm:$0xff]
    %v906 = vld [vmem:[#allocation7 + $0xac0] sm:$0xff]
    %v907 = vld [vmem:[#allocation7 + $0xac8] sm:$0xff]
    %v908 = vld [vmem:[#allocation7 + $0xad0] sm:$0xff]
    %v909 = vld [vmem:[#allocation7 + $0xad8] sm:$0xff]
    %v910 = vld [vmem:[#allocation7 + $0xae0] sm:$0xff]
    %v911 = vld [vmem:[#allocation7 + $0xae8] sm:$0xff]
    %v912 = vld [vmem:[#allocation7 + $0xaf0] sm:$0xff]
    %v913 = vld [vmem:[#allocation7 + $0xaf8] sm:$0xff]
    %v914 = vld [vmem:[#allocation7 + $0xb00] sm:$0xff]
    %v915 = vld [vmem:[#allocation7 + $0xb08] sm:$0xff]
    %v916 = vld [vmem:[#allocation7 + $0xb10] sm:$0xff]
    %v917 = vld [vmem:[#allocation7 + $0xb18] sm:$0xff]
    %v918 = vld [vmem:[#allocation7 + $0xb20] sm:$0xff]
    %v919 = vld [vmem:[#allocation7 + $0xb28] sm:$0xff]
    %v920 = vld [vmem:[#allocation7 + $0xb30] sm:$0xff]
    %v921 = vld [vmem:[#allocation7 + $0xb38] sm:$0xff]
    %v922 = vld [vmem:[#allocation7 + $0xb40] sm:$0xff]
    %v923 = vld [vmem:[#allocation7 + $0xb48] sm:$0xff]
    %v924 = vld [vmem:[#allocation7 + $0xb50] sm:$0xff]
    %v925 = vld [vmem:[#allocation7 + $0xb58] sm:$0xff]
    %v926 = vld [vmem:[#allocation7 + $0xb60] sm:$0xff]
    %v927 = vld [vmem:[#allocation7 + $0xb68] sm:$0xff]
    %v928 = vld [vmem:[#allocation7 + $0xb70] sm:$0xff]
    %v929 = vld [vmem:[#allocation7 + $0xb78] sm:$0xff]
    %v930 = vld [vmem:[#allocation7 + $0xb80] sm:$0xff]
    %v931 = vld [vmem:[#allocation7 + $0xb88] sm:$0xff]
    %v932 = vld [vmem:[#allocation7 + $0xb90] sm:$0xff]
    %v933 = vld [vmem:[#allocation7 + $0xb98] sm:$0xff]
    %v934 = vld [vmem:[#allocation7 + $0xba0] sm:$0xff]
    %v935 = vld [vmem:[#allocation7 + $0xba8] sm:$0xff]
    %v936 = vld [vmem:[#allocation7 + $0xbb0] sm:$0xff]
    %v937 = vld [vmem:[#allocation7 + $0xbb8] sm:$0xff]
    %v938 = vld [vmem:[#allocation7 + $0xbc0] sm:$0xff]
    %v939 = vld [vmem:[#allocation7 + $0xbc8] sm:$0xff]
    %v940 = vld [vmem:[#allocation7 + $0xbd0] sm:$0xff]
    %v941 = vld [vmem:[#allocation7 + $0xbd8] sm:$0xff]
    %v942 = vld [vmem:[#allocation7 + $0xbe0] sm:$0xff]
    %v943 = vld [vmem:[#allocation7 + $0xbe8] sm:$0xff]
    %v944 = vld [vmem:[#allocation7 + $0xbf0] sm:$0xff]
    %v945 = vld [vmem:[#allocation7 + $0xbf8] sm:$0xff]
    %v946 = vld [vmem:[#allocation7 + $0xc00] sm:$0xff]
    %v947 = vld [vmem:[#allocation7 + $0xc08] sm:$0xff]
    %v948 = vld [vmem:[#allocation7 + $0xc10] sm:$0xff]
    %v949 = vld [vmem:[#allocation7 + $0xc18] sm:$0xff]
    %v950 = vld [vmem:[#allocation7 + $0xc20] sm:$0xff]
    %v951 = vld [vmem:[#allocation7 + $0xc28] sm:$0xff]
    %v952 = vld [vmem:[#allocation7 + $0xc30] sm:$0xff]
    %v953 = vld [vmem:[#allocation7 + $0xc38] sm:$0xff]
    %v954 = vld [vmem:[#allocation7 + $0xc40] sm:$0xff]
    %v955 = vld [vmem:[#allocation7 + $0xc48] sm:$0xff]
    %v956 = vld [vmem:[#allocation7 + $0xc50] sm:$0xff]
    %v957 = vld [vmem:[#allocation7 + $0xc58] sm:$0xff]
    %v958 = vld [vmem:[#allocation7 + $0xc60] sm:$0xff]
    %v959 = vld [vmem:[#allocation7 + $0xc68] sm:$0xff]
    %v960 = vld [vmem:[#allocation7 + $0xc70] sm:$0xff]
    %v961 = vld [vmem:[#allocation7 + $0xc78] sm:$0xff]
    %v962 = vld [vmem:[#allocation7 + $0xc80] sm:$0xff]
    %v963 = vld [vmem:[#allocation7 + $0xc88] sm:$0xff]
    %v964 = vld [vmem:[#allocation7 + $0xc90] sm:$0xff]
    %v965 = vld [vmem:[#allocation7 + $0xc98] sm:$0xff]
    %v966 = vld [vmem:[#allocation7 + $0xca0] sm:$0xff]
    %v967 = vld [vmem:[#allocation7 + $0xca8] sm:$0xff]
    %v968 = vld [vmem:[#allocation7 + $0xcb0] sm:$0xff]
    %v969 = vld [vmem:[#allocation7 + $0xcb8] sm:$0xff]
    %v970 = vld [vmem:[#allocation7 + $0xcc0] sm:$0xff]
    %v971 = vld [vmem:[#allocation7 + $0xcc8] sm:$0xff]
    %v972 = vld [vmem:[#allocation7 + $0xcd0] sm:$0xff]
    %v973 = vld [vmem:[#allocation7 + $0xcd8] sm:$0xff]
    %v974 = vld [vmem:[#allocation7 + $0xce0] sm:$0xff]
    %v975 = vld [vmem:[#allocation7 + $0xce8] sm:$0xff]
    %v976 = vld [vmem:[#allocation7 + $0xcf0] sm:$0xff]
    %v977 = vld [vmem:[#allocation7 + $0xcf8] sm:$0xff]
    %v978 = vld [vmem:[#allocation7 + $0xd00] sm:$0xff]
    %v979 = vld [vmem:[#allocation7 + $0xd08] sm:$0xff]
    %v980 = vld [vmem:[#allocation7 + $0xd10] sm:$0xff]
    %v981 = vld [vmem:[#allocation7 + $0xd18] sm:$0xff]
    %v982 = vld [vmem:[#allocation7 + $0xd20] sm:$0xff]
    %v983 = vld [vmem:[#allocation7 + $0xd28] sm:$0xff]
    %v984 = vld [vmem:[#allocation7 + $0xd30] sm:$0xff]
    %v985 = vld [vmem:[#allocation7 + $0xd38] sm:$0xff]
    %v986 = vld [vmem:[#allocation7 + $0xd40] sm:$0xff]
    %v987 = vld [vmem:[#allocation7 + $0xd48] sm:$0xff]
    %v988 = vld [vmem:[#allocation7 + $0xd50] sm:$0xff]
    %v989 = vld [vmem:[#allocation7 + $0xd58] sm:$0xff]
    %v990 = vld [vmem:[#allocation7 + $0xd60] sm:$0xff]
    %v991 = vld [vmem:[#allocation7 + $0xd68] sm:$0xff]
    %v992 = vld [vmem:[#allocation7 + $0xd70] sm:$0xff]
    %v993 = vld [vmem:[#allocation7 + $0xd78] sm:$0xff]
    %v994 = vld [vmem:[#allocation7 + $0xd80] sm:$0xff]
    %v995 = vld [vmem:[#allocation7 + $0xd88] sm:$0xff]
    %v996 = vld [vmem:[#allocation7 + $0xd90] sm:$0xff]
    %v997 = vld [vmem:[#allocation7 + $0xd98] sm:$0xff]
    %v998 = vld [vmem:[#allocation7 + $0xda0] sm:$0xff]
    %v999 = vld [vmem:[#allocation7 + $0xda8] sm:$0xff]
    %v1000 = vld [vmem:[#allocation7 + $0xdb0] sm:$0xff]
    %v1001 = vld [vmem:[#allocation7 + $0xdb8] sm:$0xff]
    %v1002 = vld [vmem:[#allocation7 + $0xdc0] sm:$0xff]
    %v1003 = vld [vmem:[#allocation7 + $0xdc8] sm:$0xff]
    %v1004 = vld [vmem:[#allocation7 + $0xdd0] sm:$0xff]
    %v1005 = vld [vmem:[#allocation7 + $0xdd8] sm:$0xff]
    %v1006 = vld [vmem:[#allocation7 + $0xde0] sm:$0xff]
    %v1007 = vld [vmem:[#allocation7 + $0xde8] sm:$0xff]
    %v1008 = vld [vmem:[#allocation7 + $0xdf0] sm:$0xff]
    %v1009 = vld [vmem:[#allocation7 + $0xdf8] sm:$0xff]
    %v1010 = vld [vmem:[#allocation7 + $0xe00] sm:$0xff]
    %v1011 = vld [vmem:[#allocation7 + $0xe08] sm:$0xff]
    %v1012 = vld [vmem:[#allocation7 + $0xe10] sm:$0xff]
    %v1013 = vld [vmem:[#allocation7 + $0xe18] sm:$0xff]
    %v1014 = vld [vmem:[#allocation7 + $0xe20] sm:$0xff]
    %v1015 = vld [vmem:[#allocation7 + $0xe28] sm:$0xff]
    %v1016 = vld [vmem:[#allocation7 + $0xe30] sm:$0xff]
    %v1017 = vld [vmem:[#allocation7 + $0xe38] sm:$0xff]
    %v1018 = vld [vmem:[#allocation7 + $0xe40] sm:$0xff]
    %v1019 = vld [vmem:[#allocation7 + $0xe48] sm:$0xff]
    %v1020 = vld [vmem:[#allocation7 + $0xe50] sm:$0xff]
    %v1021 = vld [vmem:[#allocation7 + $0xe58] sm:$0xff]
    %v1022 = vld [vmem:[#allocation7 + $0xe60] sm:$0xff]
    %v1023 = vld [vmem:[#allocation7 + $0xe68] sm:$0xff]
    %v1024 = vld [vmem:[#allocation7 + $0xe70] sm:$0xff]
    %v1025 = vld [vmem:[#allocation7 + $0xe78] sm:$0xff]
    %v1026 = vld [vmem:[#allocation7 + $0xe80] sm:$0xff]
    %v1027 = vld [vmem:[#allocation7 + $0xe88] sm:$0xff]
    %v1028 = vld [vmem:[#allocation7 + $0xe90] sm:$0xff]
    %v1029 = vld [vmem:[#allocation7 + $0xe98] sm:$0xff]
    %v1030 = vld [vmem:[#allocation7 + $0xea0] sm:$0xff]
    %v1031 = vld [vmem:[#allocation7 + $0xea8] sm:$0xff]
    %v1032 = vld [vmem:[#allocation7 + $0xeb0] sm:$0xff]
    %v1033 = vld [vmem:[#allocation7 + $0xeb8] sm:$0xff]
    %v1034 = vld [vmem:[#allocation7 + $0xec0] sm:$0xff]
    %v1035 = vld [vmem:[#allocation7 + $0xec8] sm:$0xff]
    %v1036 = vld [vmem:[#allocation7 + $0xed0] sm:$0xff]
    %v1037 = vld [vmem:[#allocation7 + $0xed8] sm:$0xff]
    %v1038 = vld [vmem:[#allocation7 + $0xee0] sm:$0xff]
    %v1039 = vld [vmem:[#allocation7 + $0xee8] sm:$0xff]
    %v1040 = vld [vmem:[#allocation7 + $0xef0] sm:$0xff]
    %v1041 = vld [vmem:[#allocation7 + $0xef8] sm:$0xff]
    %v1042 = vld [vmem:[#allocation7 + $0xf00] sm:$0xff]
    %v1043 = vld [vmem:[#allocation7 + $0xf08] sm:$0xff]
    %v1044 = vld [vmem:[#allocation7 + $0xf10] sm:$0xff]
    %v1045 = vld [vmem:[#allocation7 + $0xf18] sm:$0xff]
    %v1046 = vld [vmem:[#allocation7 + $0xf20] sm:$0xff]
    %v1047 = vld [vmem:[#allocation7 + $0xf28] sm:$0xff]
    %v1048 = vld [vmem:[#allocation7 + $0xf30] sm:$0xff]
    %v1049 = vld [vmem:[#allocation7 + $0xf38] sm:$0xff]
    %v1050 = vld [vmem:[#allocation7 + $0xf40] sm:$0xff]
    %v1051 = vld [vmem:[#allocation7 + $0xf48] sm:$0xff]
    %v1052 = vld [vmem:[#allocation7 + $0xf50] sm:$0xff]
    %v1053 = vld [vmem:[#allocation7 + $0xf58] sm:$0xff]
    %v1054 = vld [vmem:[#allocation7 + $0xf60] sm:$0xff]
    %v1055 = vld [vmem:[#allocation7 + $0xf68] sm:$0xff]
    %v1056 = vld [vmem:[#allocation7 + $0xf70] sm:$0xff]
    %v1057 = vld [vmem:[#allocation7 + $0xf78] sm:$0xff]
    %v1058 = vld [vmem:[#allocation7 + $0xf80] sm:$0xff]
    %v1059 = vld [vmem:[#allocation7 + $0xf88] sm:$0xff]
    %v1060 = vld [vmem:[#allocation7 + $0xf90] sm:$0xff]
    %v1061 = vld [vmem:[#allocation7 + $0xf98] sm:$0xff]
    %v1062 = vld [vmem:[#allocation7 + $0xfa0] sm:$0xff]
    %v1063 = vld [vmem:[#allocation7 + $0xfa8] sm:$0xff]
    %v1064 = vld [vmem:[#allocation7 + $0xfb0] sm:$0xff]
    %v1065 = vld [vmem:[#allocation7 + $0xfb8] sm:$0xff]
    %v1066 = vld [vmem:[#allocation7 + $0xfc0] sm:$0xff]
    %v1067 = vld [vmem:[#allocation7 + $0xfc8] sm:$0xff]
    %v1068 = vld [vmem:[#allocation7 + $0xfd0] sm:$0xff]
    %v1069 = vld [vmem:[#allocation7 + $0xfd8] sm:$0xff]
    %v1070 = vld [vmem:[#allocation7 + $0xfe0] sm:$0xff]
    %v1071 = vld [vmem:[#allocation7 + $0xfe8] sm:$0xff]
    %v1072 = vld [vmem:[#allocation7 + $0xff0] sm:$0xff]
    %v1073 = vld [vmem:[#allocation7 + $0xff8] sm:$0xff]
    %v1074 = vmax.f32 %v50, 0.0
    %v1075 = vmax.f32 %v51, 0.0
    %v1076 = vmax.f32 %v52, 0.0
    %v1077 = vmax.f32 %v53, 0.0
    %v1078 = vmax.f32 %v54, 0.0
    %v1079 = vmax.f32 %v55, 0.0
    %v1080 = vmax.f32 %v56, 0.0
    %v1081 = vmax.f32 %v57, 0.0
    %v1082 = vmax.f32 %v58, 0.0
    %v1083 = vmax.f32 %v59, 0.0
    %v1084 = vmax.f32 %v60, 0.0
    %v1085 = vmax.f32 %v61, 0.0
    %v1086 = vmax.f32 %v62, 0.0
    %v1087 = vmax.f32 %v63, 0.0
    %v1088 = vmax.f32 %v64, 0.0
    %v1089 = vmax.f32 %v65, 0.0
    %v1090 = vmax.f32 %v66, 0.0
    %v1091 = vmax.f32 %v67, 0.0
    %v1092 = vmax.f32 %v68, 0.0
    %v1093 = vmax.f32 %v69, 0.0
    %v1094 = vmax.f32 %v70, 0.0
    %v1095 = vmax.f32 %v71, 0.0
    %v1096 = vmax.f32 %v72, 0.0
    %v1097 = vmax.f32 %v73, 0.0
    %v1098 = vmax.f32 %v74, 0.0
    %v1099 = vmax.f32 %v75, 0.0
    %v1100 = vmax.f32 %v76, 0.0
    %v1101 = vmax.f32 %v77, 0.0
    %v1102 = vmax.f32 %v78, 0.0
    %v1103 = vmax.f32 %v79, 0.0
    %v1104 = vmax.f32 %v80, 0.0
    %v1105 = vmax.f32 %v81, 0.0
    %v1106 = vmax.f32 %v82, 0.0
    %v1107 = vmax.f32 %v83, 0.0
    %v1108 = vmax.f32 %v84, 0.0
    %v1109 = vmax.f32 %v85, 0.0
    %v1110 = vmax.f32 %v86, 0.0
    %v1111 = vmax.f32 %v87, 0.0
    %v1112 = vmax.f32 %v88, 0.0
    %v1113 = vmax.f32 %v89, 0.0
    %v1114 = vmax.f32 %v90, 0.0
    %v1115 = vmax.f32 %v91, 0.0
    %v1116 = vmax.f32 %v92, 0.0
    %v1117 = vmax.f32 %v93, 0.0
    %v1118 = vmax.f32 %v94, 0.0
    %v1119 = vmax.f32 %v95, 0.0
    %v1120 = vmax.f32 %v96, 0.0
    %v1121 = vmax.f32 %v97, 0.0
    %v1122 = vmax.f32 %v98, 0.0
    %v1123 = vmax.f32 %v99, 0.0
    %v1124 = vmax.f32 %v100, 0.0
    %v1125 = vmax.f32 %v101, 0.0
    %v1126 = vmax.f32 %v102, 0.0
    %v1127 = vmax.f32 %v103, 0.0
    %v1128 = vmax.f32 %v104, 0.0
    %v1129 = vmax.f32 %v105, 0.0
    %v1130 = vmax.f32 %v106, 0.0
    %v1131 = vmax.f32 %v107, 0.0
    %v1132 = vmax.f32 %v108, 0.0
    %v1133 = vmax.f32 %v109, 0.0
    %v1134 = vmax.f32 %v110, 0.0
    %v1135 = vmax.f32 %v111, 0.0
    %v1136 = vmax.f32 %v112, 0.0
    %v1137 = vmax.f32 %v113, 0.0
    %v1138 = vmax.f32 %v114, 0.0
    %v1139 = vmax.f32 %v115, 0.0
    %v1140 = vmax.f32 %v116, 0.0
    %v1141 = vmax.f32 %v117, 0.0
    %v1142 = vmax.f32 %v118, 0.0
    %v1143 = vmax.f32 %v119, 0.0
    %v1144 = vmax.f32 %v120, 0.0
    %v1145 = vmax.f32 %v121, 0.0
    %v1146 = vmax.f32 %v122, 0.0
    %v1147 = vmax.f32 %v123, 0.0
    %v1148 = vmax.f32 %v124, 0.0
    %v1149 = vmax.f32 %v125, 0.0
    %v1150 = vmax.f32 %v126, 0.0
    %v1151 = vmax.f32 %v127, 0.0
    %v1152 = vmax.f32 %v128, 0.0
    %v1153 = vmax.f32 %v129, 0.0
    %v1154 = vmax.f32 %v130, 0.0
    %v1155 = vmax.f32 %v131, 0.0
    %v1156 = vmax.f32 %v132, 0.0
    %v1157 = vmax.f32 %v133, 0.0
    %v1158 = vmax.f32 %v134, 0.0
    %v1159 = vmax.f32 %v135, 0.0
    %v1160 = vmax.f32 %v136, 0.0
    %v1161 = vmax.f32 %v137, 0.0
    %v1162 = vmax.f32 %v138, 0.0
    %v1163 = vmax.f32 %v139, 0.0
    %v1164 = vmax.f32 %v140, 0.0
    %v1165 = vmax.f32 %v141, 0.0
    %v1166 = vmax.f32 %v142, 0.0
    %v1167 = vmax.f32 %v143, 0.0
    %v1168 = vmax.f32 %v144, 0.0
    %v1169 = vmax.f32 %v145, 0.0
    %v1170 = vmax.f32 %v146, 0.0
    %v1171 = vmax.f32 %v147, 0.0
    %v1172 = vmax.f32 %v148, 0.0
    %v1173 = vmax.f32 %v149, 0.0
    %v1174 = vmax.f32 %v150, 0.0
    %v1175 = vmax.f32 %v151, 0.0
    %v1176 = vmax.f32 %v152, 0.0
    %v1177 = vmax.f32 %v153, 0.0
    %v1178 = vmax.f32 %v154, 0.0
    %v1179 = vmax.f32 %v155, 0.0
    %v1180 = vmax.f32 %v156, 0.0
    %v1181 = vmax.f32 %v157, 0.0
    %v1182 = vmax.f32 %v158, 0.0
    %v1183 = vmax.f32 %v159, 0.0
    %v1184 = vmax.f32 %v160, 0.0
    %v1185 = vmax.f32 %v161, 0.0
    %v1186 = vmax.f32 %v162, 0.0
    %v1187 = vmax.f32 %v163, 0.0
    %v1188 = vmax.f32 %v164, 0.0
    %v1189 = vmax.f32 %v165, 0.0
    %v1190 = vmax.f32 %v166, 0.0
    %v1191 = vmax.f32 %v167, 0.0
    %v1192 = vmax.f32 %v168, 0.0
    %v1193 = vmax.f32 %v169, 0.0
    %v1194 = vmax.f32 %v170, 0.0
    %v1195 = vmax.f32 %v171, 0.0
    %v1196 = vmax.f32 %v172, 0.0
    %v1197 = vmax.f32 %v173, 0.0
    %v1198 = vmax.f32 %v174, 0.0
    %v1199 = vmax.f32 %v175, 0.0
    %v1200 = vmax.f32 %v176, 0.0
    %v1201 = vmax.f32 %v177, 0.0
    %v1202 = vmax.f32 %v178, 0.0
    %v1203 = vmax.f32 %v179, 0.0
    %v1204 = vmax.f32 %v180, 0.0
    %v1205 = vmax.f32 %v181, 0.0
    %v1206 = vmax.f32 %v182, 0.0
    %v1207 = vmax.f32 %v183, 0.0
    %v1208 = vmax.f32 %v184, 0.0
    %v1209 = vmax.f32 %v185, 0.0
    %v1210 = vmax.f32 %v186, 0.0
    %v1211 = vmax.f32 %v187, 0.0
    %v1212 = vmax.f32 %v188, 0.0
    %v1213 = vmax.f32 %v189, 0.0
    %v1214 = vmax.f32 %v190, 0.0
    %v1215 = vmax.f32 %v191, 0.0
    %v1216 = vmax.f32 %v192, 0.0
    %v1217 = vmax.f32 %v193, 0.0
    %v1218 = vmax.f32 %v194, 0.0
    %v1219 = vmax.f32 %v195, 0.0
    %v1220 = vmax.f32 %v196, 0.0
    %v1221 = vmax.f32 %v197, 0.0
    %v1222 = vmax.f32 %v198, 0.0
    %v1223 = vmax.f32 %v199, 0.0
    %v1224 = vmax.f32 %v200, 0.0
    %v1225 = vmax.f32 %v201, 0.0
    %v1226 = vmax.f32 %v202, 0.0
    %v1227 = vmax.f32 %v203, 0.0
    %v1228 = vmax.f32 %v204, 0.0
    %v1229 = vmax.f32 %v205, 0.0
    %v1230 = vmax.f32 %v206, 0.0
    %v1231 = vmax.f32 %v207, 0.0
    %v1232 = vmax.f32 %v208, 0.0
    %v1233 = vmax.f32 %v209, 0.0
    %v1234 = vmax.f32 %v210, 0.0
    %v1235 = vmax.f32 %v211, 0.0
    %v1236 = vmax.f32 %v212, 0.0
    %v1237 = vmax.f32 %v213, 0.0
    %v1238 = vmax.f32 %v214, 0.0
    %v1239 = vmax.f32 %v215, 0.0
    %v1240 = vmax.f32 %v216, 0.0
    %v1241 = vmax.f32 %v217, 0.0
    %v1242 = vmax.f32 %v218, 0.0
    %v1243 = vmax.f32 %v219, 0.0
    %v1244 = vmax.f32 %v220, 0.0
    %v1245 = vmax.f32 %v221, 0.0
    %v1246 = vmax.f32 %v222, 0.0
    %v1247 = vmax.f32 %v223, 0.0
    %v1248 = vmax.f32 %v224, 0.0
    %v1249 = vmax.f32 %v225, 0.0
    %v1250 = vmax.f32 %v226, 0.0
    %v1251 = vmax.f32 %v227, 0.0
    %v1252 = vmax.f32 %v228, 0.0
    %v1253 = vmax.f32 %v229, 0.0
    %v1254 = vmax.f32 %v230, 0.0
    %v1255 = vmax.f32 %v231, 0.0
    %v1256 = vmax.f32 %v232, 0.0
    %v1257 = vmax.f32 %v233, 0.0
    %v1258 = vmax.f32 %v234, 0.0
    %v1259 = vmax.f32 %v235, 0.0
    %v1260 = vmax.f32 %v236, 0.0
    %v1261 = vmax.f32 %v237, 0.0
    %v1262 = vmax.f32 %v238, 0.0
    %v1263 = vmax.f32 %v239, 0.0
    %v1264 = vmax.f32 %v240, 0.0
    %v1265 = vmax.f32 %v241, 0.0
    %v1266 = vmax.f32 %v242, 0.0
    %v1267 = vmax.f32 %v243, 0.0
    %v1268 = vmax.f32 %v244, 0.0
    %v1269 = vmax.f32 %v245, 0.0
    %v1270 = vmax.f32 %v246, 0.0
    %v1271 = vmax.f32 %v247, 0.0
    %v1272 = vmax.f32 %v248, 0.0
    %v1273 = vmax.f32 %v249, 0.0
    %v1274 = vmax.f32 %v250, 0.0
    %v1275 = vmax.f32 %v251, 0.0
    %v1276 = vmax.f32 %v252, 0.0
    %v1277 = vmax.f32 %v253, 0.0
    %v1278 = vmax.f32 %v254, 0.0
    %v1279 = vmax.f32 %v255, 0.0
    %v1280 = vmax.f32 %v256, 0.0
    %v1281 = vmax.f32 %v257, 0.0
    %v1282 = vmax.f32 %v258, 0.0
    %v1283 = vmax.f32 %v259, 0.0
    %v1284 = vmax.f32 %v260, 0.0
    %v1285 = vmax.f32 %v261, 0.0
    %v1286 = vmax.f32 %v262, 0.0
    %v1287 = vmax.f32 %v263, 0.0
    %v1288 = vmax.f32 %v264, 0.0
    %v1289 = vmax.f32 %v265, 0.0
    %v1290 = vmax.f32 %v266, 0.0
    %v1291 = vmax.f32 %v267, 0.0
    %v1292 = vmax.f32 %v268, 0.0
    %v1293 = vmax.f32 %v269, 0.0
    %v1294 = vmax.f32 %v270, 0.0
    %v1295 = vmax.f32 %v271, 0.0
    %v1296 = vmax.f32 %v272, 0.0
    %v1297 = vmax.f32 %v273, 0.0
    %v1298 = vmax.f32 %v274, 0.0
    %v1299 = vmax.f32 %v275, 0.0
    %v1300 = vmax.f32 %v276, 0.0
    %v1301 = vmax.f32 %v277, 0.0
    %v1302 = vmax.f32 %v278, 0.0
    %v1303 = vmax.f32 %v279, 0.0
    %v1304 = vmax.f32 %v280, 0.0
    %v1305 = vmax.f32 %v281, 0.0
    %v1306 = vmax.f32 %v282, 0.0
    %v1307 = vmax.f32 %v283, 0.0
    %v1308 = vmax.f32 %v284, 0.0
    %v1309 = vmax.f32 %v285, 0.0
    %v1310 = vmax.f32 %v286, 0.0
    %v1311 = vmax.f32 %v287, 0.0
    %v1312 = vmax.f32 %v288, 0.0
    %v1313 = vmax.f32 %v289, 0.0
    %v1314 = vmax.f32 %v290, 0.0
    %v1315 = vmax.f32 %v291, 0.0
    %v1316 = vmax.f32 %v292, 0.0
    %v1317 = vmax.f32 %v293, 0.0
    %v1318 = vmax.f32 %v294, 0.0
    %v1319 = vmax.f32 %v295, 0.0
    %v1320 = vmax.f32 %v296, 0.0
    %v1321 = vmax.f32 %v297, 0.0
    %v1322 = vmax.f32 %v298, 0.0
    %v1323 = vmax.f32 %v299, 0.0
    %v1324 = vmax.f32 %v300, 0.0
    %v1325 = vmax.f32 %v301, 0.0
    %v1326 = vmax.f32 %v302, 0.0
    %v1327 = vmax.f32 %v303, 0.0
    %v1328 = vmax.f32 %v304, 0.0
    %v1329 = vmax.f32 %v305, 0.0
    %v1330 = vmax.f32 %v306, 0.0
    %v1331 = vmax.f32 %v307, 0.0
    %v1332 = vmax.f32 %v308, 0.0
    %v1333 = vmax.f32 %v309, 0.0
    %v1334 = vmax.f32 %v310, 0.0
    %v1335 = vmax.f32 %v311, 0.0
    %v1336 = vmax.f32 %v312, 0.0
    %v1337 = vmax.f32 %v313, 0.0
    %v1338 = vmax.f32 %v314, 0.0
    %v1339 = vmax.f32 %v315, 0.0
    %v1340 = vmax.f32 %v316, 0.0
    %v1341 = vmax.f32 %v317, 0.0
    %v1342 = vmax.f32 %v318, 0.0
    %v1343 = vmax.f32 %v319, 0.0
    %v1344 = vmax.f32 %v320, 0.0
    %v1345 = vmax.f32 %v321, 0.0
    %v1346 = vmax.f32 %v322, 0.0
    %v1347 = vmax.f32 %v323, 0.0
    %v1348 = vmax.f32 %v324, 0.0
    %v1349 = vmax.f32 %v325, 0.0
    %v1350 = vmax.f32 %v326, 0.0
    %v1351 = vmax.f32 %v327, 0.0
    %v1352 = vmax.f32 %v328, 0.0
    %v1353 = vmax.f32 %v329, 0.0
    %v1354 = vmax.f32 %v330, 0.0
    %v1355 = vmax.f32 %v331, 0.0
    %v1356 = vmax.f32 %v332, 0.0
    %v1357 = vmax.f32 %v333, 0.0
    %v1358 = vmax.f32 %v334, 0.0
    %v1359 = vmax.f32 %v335, 0.0
    %v1360 = vmax.f32 %v336, 0.0
    %v1361 = vmax.f32 %v337, 0.0
    %v1362 = vmax.f32 %v338, 0.0
    %v1363 = vmax.f32 %v339, 0.0
    %v1364 = vmax.f32 %v340, 0.0
    %v1365 = vmax.f32 %v341, 0.0
    %v1366 = vmax.f32 %v342, 0.0
    %v1367 = vmax.f32 %v343, 0.0
    %v1368 = vmax.f32 %v344, 0.0
    %v1369 = vmax.f32 %v345, 0.0
    %v1370 = vmax.f32 %v346, 0.0
    %v1371 = vmax.f32 %v347, 0.0
    %v1372 = vmax.f32 %v348, 0.0
    %v1373 = vmax.f32 %v349, 0.0
    %v1374 = vmax.f32 %v350, 0.0
    %v1375 = vmax.f32 %v351, 0.0
    %v1376 = vmax.f32 %v352, 0.0
    %v1377 = vmax.f32 %v353, 0.0
    %v1378 = vmax.f32 %v354, 0.0
    %v1379 = vmax.f32 %v355, 0.0
    %v1380 = vmax.f32 %v356, 0.0
    %v1381 = vmax.f32 %v357, 0.0
    %v1382 = vmax.f32 %v358, 0.0
    %v1383 = vmax.f32 %v359, 0.0
    %v1384 = vmax.f32 %v360, 0.0
    %v1385 = vmax.f32 %v361, 0.0
    %v1386 = vmax.f32 %v362, 0.0
    %v1387 = vmax.f32 %v363, 0.0
    %v1388 = vmax.f32 %v364, 0.0
    %v1389 = vmax.f32 %v365, 0.0
    %v1390 = vmax.f32 %v366, 0.0
    %v1391 = vmax.f32 %v367, 0.0
    %v1392 = vmax.f32 %v368, 0.0
    %v1393 = vmax.f32 %v369, 0.0
    %v1394 = vmax.f32 %v370, 0.0
    %v1395 = vmax.f32 %v371, 0.0
    %v1396 = vmax.f32 %v372, 0.0
    %v1397 = vmax.f32 %v373, 0.0
    %v1398 = vmax.f32 %v374, 0.0
    %v1399 = vmax.f32 %v375, 0.0
    %v1400 = vmax.f32 %v376, 0.0
    %v1401 = vmax.f32 %v377, 0.0
    %v1402 = vmax.f32 %v378, 0.0
    %v1403 = vmax.f32 %v379, 0.0
    %v1404 = vmax.f32 %v380, 0.0
    %v1405 = vmax.f32 %v381, 0.0
    %v1406 = vmax.f32 %v382, 0.0
    %v1407 = vmax.f32 %v383, 0.0
    %v1408 = vmax.f32 %v384, 0.0
    %v1409 = vmax.f32 %v385, 0.0
    %v1410 = vmax.f32 %v386, 0.0
    %v1411 = vmax.f32 %v387, 0.0
    %v1412 = vmax.f32 %v388, 0.0
    %v1413 = vmax.f32 %v389, 0.0
    %v1414 = vmax.f32 %v390, 0.0
    %v1415 = vmax.f32 %v391, 0.0
    %v1416 = vmax.f32 %v392, 0.0
    %v1417 = vmax.f32 %v393, 0.0
    %v1418 = vmax.f32 %v394, 0.0
    %v1419 = vmax.f32 %v395, 0.0
    %v1420 = vmax.f32 %v396, 0.0
    %v1421 = vmax.f32 %v397, 0.0
    %v1422 = vmax.f32 %v398, 0.0
    %v1423 = vmax.f32 %v399, 0.0
    %v1424 = vmax.f32 %v400, 0.0
    %v1425 = vmax.f32 %v401, 0.0
    %v1426 = vmax.f32 %v402, 0.0
    %v1427 = vmax.f32 %v403, 0.0
    %v1428 = vmax.f32 %v404, 0.0
    %v1429 = vmax.f32 %v405, 0.0
    %v1430 = vmax.f32 %v406, 0.0
    %v1431 = vmax.f32 %v407, 0.0
    %v1432 = vmax.f32 %v408, 0.0
    %v1433 = vmax.f32 %v409, 0.0
    %v1434 = vmax.f32 %v410, 0.0
    %v1435 = vmax.f32 %v411, 0.0
    %v1436 = vmax.f32 %v412, 0.0
    %v1437 = vmax.f32 %v413, 0.0
    %v1438 = vmax.f32 %v414, 0.0
    %v1439 = vmax.f32 %v415, 0.0
    %v1440 = vmax.f32 %v416, 0.0
    %v1441 = vmax.f32 %v417, 0.0
    %v1442 = vmax.f32 %v418, 0.0
    %v1443 = vmax.f32 %v419, 0.0
    %v1444 = vmax.f32 %v420, 0.0
    %v1445 = vmax.f32 %v421, 0.0
    %v1446 = vmax.f32 %v422, 0.0
    %v1447 = vmax.f32 %v423, 0.0
    %v1448 = vmax.f32 %v424, 0.0
    %v1449 = vmax.f32 %v425, 0.0
    %v1450 = vmax.f32 %v426, 0.0
    %v1451 = vmax.f32 %v427, 0.0
    %v1452 = vmax.f32 %v428, 0.0
    %v1453 = vmax.f32 %v429, 0.0
    %v1454 = vmax.f32 %v430, 0.0
    %v1455 = vmax.f32 %v431, 0.0
    %v1456 = vmax.f32 %v432, 0.0
    %v1457 = vmax.f32 %v433, 0.0
    %v1458 = vmax.f32 %v434, 0.0
    %v1459 = vmax.f32 %v435, 0.0
    %v1460 = vmax.f32 %v436, 0.0
    %v1461 = vmax.f32 %v437, 0.0
    %v1462 = vmax.f32 %v438, 0.0
    %v1463 = vmax.f32 %v439, 0.0
    %v1464 = vmax.f32 %v440, 0.0
    %v1465 = vmax.f32 %v441, 0.0
    %v1466 = vmax.f32 %v442, 0.0
    %v1467 = vmax.f32 %v443, 0.0
    %v1468 = vmax.f32 %v444, 0.0
    %v1469 = vmax.f32 %v445, 0.0
    %v1470 = vmax.f32 %v446, 0.0
    %v1471 = vmax.f32 %v447, 0.0
    %v1472 = vmax.f32 %v448, 0.0
    %v1473 = vmax.f32 %v449, 0.0
    %v1474 = vmax.f32 %v450, 0.0
    %v1475 = vmax.f32 %v451, 0.0
    %v1476 = vmax.f32 %v452, 0.0
    %v1477 = vmax.f32 %v453, 0.0
    %v1478 = vmax.f32 %v454, 0.0
    %v1479 = vmax.f32 %v455, 0.0
    %v1480 = vmax.f32 %v456, 0.0
    %v1481 = vmax.f32 %v457, 0.0
    %v1482 = vmax.f32 %v458, 0.0
    %v1483 = vmax.f32 %v459, 0.0
    %v1484 = vmax.f32 %v460, 0.0
    %v1485 = vmax.f32 %v461, 0.0
    %v1486 = vmax.f32 %v462, 0.0
    %v1487 = vmax.f32 %v463, 0.0
    %v1488 = vmax.f32 %v464, 0.0
    %v1489 = vmax.f32 %v465, 0.0
    %v1490 = vmax.f32 %v466, 0.0
    %v1491 = vmax.f32 %v467, 0.0
    %v1492 = vmax.f32 %v468, 0.0
    %v1493 = vmax.f32 %v469, 0.0
    %v1494 = vmax.f32 %v470, 0.0
    %v1495 = vmax.f32 %v471, 0.0
    %v1496 = vmax.f32 %v472, 0.0
    %v1497 = vmax.f32 %v473, 0.0
    %v1498 = vmax.f32 %v474, 0.0
    %v1499 = vmax.f32 %v475, 0.0
    %v1500 = vmax.f32 %v476, 0.0
    %v1501 = vmax.f32 %v477, 0.0
    %v1502 = vmax.f32 %v478, 0.0
    %v1503 = vmax.f32 %v479, 0.0
    %v1504 = vmax.f32 %v480, 0.0
    %v1505 = vmax.f32 %v481, 0.0
    %v1506 = vmax.f32 %v482, 0.0
    %v1507 = vmax.f32 %v483, 0.0
    %v1508 = vmax.f32 %v484, 0.0
    %v1509 = vmax.f32 %v485, 0.0
    %v1510 = vmax.f32 %v486, 0.0
    %v1511 = vmax.f32 %v487, 0.0
    %v1512 = vmax.f32 %v488, 0.0
    %v1513 = vmax.f32 %v489, 0.0
    %v1514 = vmax.f32 %v490, 0.0
    %v1515 = vmax.f32 %v491, 0.0
    %v1516 = vmax.f32 %v492, 0.0
    %v1517 = vmax.f32 %v493, 0.0
    %v1518 = vmax.f32 %v494, 0.0
    %v1519 = vmax.f32 %v495, 0.0
    %v1520 = vmax.f32 %v496, 0.0
    %v1521 = vmax.f32 %v497, 0.0
    %v1522 = vmax.f32 %v498, 0.0
    %v1523 = vmax.f32 %v499, 0.0
    %v1524 = vmax.f32 %v500, 0.0
    %v1525 = vmax.f32 %v501, 0.0
    %v1526 = vmax.f32 %v502, 0.0
    %v1527 = vmax.f32 %v503, 0.0
    %v1528 = vmax.f32 %v504, 0.0
    %v1529 = vmax.f32 %v505, 0.0
    %v1530 = vmax.f32 %v506, 0.0
    %v1531 = vmax.f32 %v507, 0.0
    %v1532 = vmax.f32 %v508, 0.0
    %v1533 = vmax.f32 %v509, 0.0
    %v1534 = vmax.f32 %v510, 0.0
    %v1535 = vmax.f32 %v511, 0.0
    %v1536 = vmax.f32 %v512, 0.0
    %v1537 = vmax.f32 %v513, 0.0
    %v1538 = vmax.f32 %v514, 0.0
    %v1539 = vmax.f32 %v515, 0.0
    %v1540 = vmax.f32 %v516, 0.0
    %v1541 = vmax.f32 %v517, 0.0
    %v1542 = vmax.f32 %v518, 0.0
    %v1543 = vmax.f32 %v519, 0.0
    %v1544 = vmax.f32 %v520, 0.0
    %v1545 = vmax.f32 %v521, 0.0
    %v1546 = vmax.f32 %v522, 0.0
    %v1547 = vmax.f32 %v523, 0.0
    %v1548 = vmax.f32 %v524, 0.0
    %v1549 = vmax.f32 %v525, 0.0
    %v1550 = vmax.f32 %v526, 0.0
    %v1551 = vmax.f32 %v527, 0.0
    %v1552 = vmax.f32 %v528, 0.0
    %v1553 = vmax.f32 %v529, 0.0
    %v1554 = vmax.f32 %v530, 0.0
    %v1555 = vmax.f32 %v531, 0.0
    %v1556 = vmax.f32 %v532, 0.0
    %v1557 = vmax.f32 %v533, 0.0
    %v1558 = vmax.f32 %v534, 0.0
    %v1559 = vmax.f32 %v535, 0.0
    %v1560 = vmax.f32 %v536, 0.0
    %v1561 = vmax.f32 %v537, 0.0
    %v1562 = vmax.f32 %v538, 0.0
    %v1563 = vmax.f32 %v539, 0.0
    %v1564 = vmax.f32 %v540, 0.0
    %v1565 = vmax.f32 %v541, 0.0
    %v1566 = vmax.f32 %v542, 0.0
    %v1567 = vmax.f32 %v543, 0.0
    %v1568 = vmax.f32 %v544, 0.0
    %v1569 = vmax.f32 %v545, 0.0
    %v1570 = vmax.f32 %v546, 0.0
    %v1571 = vmax.f32 %v547, 0.0
    %v1572 = vmax.f32 %v548, 0.0
    %v1573 = vmax.f32 %v549, 0.0
    %v1574 = vmax.f32 %v550, 0.0
    %v1575 = vmax.f32 %v551, 0.0
    %v1576 = vmax.f32 %v552, 0.0
    %v1577 = vmax.f32 %v553, 0.0
    %v1578 = vmax.f32 %v554, 0.0
    %v1579 = vmax.f32 %v555, 0.0
    %v1580 = vmax.f32 %v556, 0.0
    %v1581 = vmax.f32 %v557, 0.0
    %v1582 = vmax.f32 %v558, 0.0
    %v1583 = vmax.f32 %v559, 0.0
    %v1584 = vmax.f32 %v560, 0.0
    %v1585 = vmax.f32 %v561, 0.0
    %v1586 = vmin.f32 %v1074, 1.0
    %v1587 = vmin.f32 %v1075, 1.0
    %v1588 = vmin.f32 %v1076, 1.0
    %v1589 = vmin.f32 %v1077, 1.0
    %v1590 = vmin.f32 %v1078, 1.0
    %v1591 = vmin.f32 %v1079, 1.0
    %v1592 = vmin.f32 %v1080, 1.0
    %v1593 = vmin.f32 %v1081, 1.0
    %v1594 = vmin.f32 %v1082, 1.0
    %v1595 = vmin.f32 %v1083, 1.0
    %v1596 = vmin.f32 %v1084, 1.0
    %v1597 = vmin.f32 %v1085, 1.0
    %v1598 = vmin.f32 %v1086, 1.0
    %v1599 = vmin.f32 %v1087, 1.0
    %v1600 = vmin.f32 %v1088, 1.0
    %v1601 = vmin.f32 %v1089, 1.0
    %v1602 = vmin.f32 %v1090, 1.0
    %v1603 = vmin.f32 %v1091, 1.0
    %v1604 = vmin.f32 %v1092, 1.0
    %v1605 = vmin.f32 %v1093, 1.0
    %v1606 = vmin.f32 %v1094, 1.0
    %v1607 = vmin.f32 %v1095, 1.0
    %v1608 = vmin.f32 %v1096, 1.0
    %v1609 = vmin.f32 %v1097, 1.0
    %v1610 = vmin.f32 %v1098, 1.0
    %v1611 = vmin.f32 %v1099, 1.0
    %v1612 = vmin.f32 %v1100, 1.0
    %v1613 = vmin.f32 %v1101, 1.0
    %v1614 = vmin.f32 %v1102, 1.0
    %v1615 = vmin.f32 %v1103, 1.0
    %v1616 = vmin.f32 %v1104, 1.0
    %v1617 = vmin.f32 %v1105, 1.0
    %v1618 = vmin.f32 %v1106, 1.0
    %v1619 = vmin.f32 %v1107, 1.0
    %v1620 = vmin.f32 %v1108, 1.0
    %v1621 = vmin.f32 %v1109, 1.0
    %v1622 = vmin.f32 %v1110, 1.0
    %v1623 = vmin.f32 %v1111, 1.0
    %v1624 = vmin.f32 %v1112, 1.0
    %v1625 = vmin.f32 %v1113, 1.0
    %v1626 = vmin.f32 %v1114, 1.0
    %v1627 = vmin.f32 %v1115, 1.0
    %v1628 = vmin.f32 %v1116, 1.0
    %v1629 = vmin.f32 %v1117, 1.0
    %v1630 = vmin.f32 %v1118, 1.0
    %v1631 = vmin.f32 %v1119, 1.0
    %v1632 = vmin.f32 %v1120, 1.0
    %v1633 = vmin.f32 %v1121, 1.0
    %v1634 = vmin.f32 %v1122, 1.0
    %v1635 = vmin.f32 %v1123, 1.0
    %v1636 = vmin.f32 %v1124, 1.0
    %v1637 = vmin.f32 %v1125, 1.0
    %v1638 = vmin.f32 %v1126, 1.0
    %v1639 = vmin.f32 %v1127, 1.0
    %v1640 = vmin.f32 %v1128, 1.0
    %v1641 = vmin.f32 %v1129, 1.0
    %v1642 = vmin.f32 %v1130, 1.0
    %v1643 = vmin.f32 %v1131, 1.0
    %v1644 = vmin.f32 %v1132, 1.0
    %v1645 = vmin.f32 %v1133, 1.0
    %v1646 = vmin.f32 %v1134, 1.0
    %v1647 = vmin.f32 %v1135, 1.0
    %v1648 = vmin.f32 %v1136, 1.0
    %v1649 = vmin.f32 %v1137, 1.0
    %v1650 = vmin.f32 %v1138, 1.0
    %v1651 = vmin.f32 %v1139, 1.0
    %v1652 = vmin.f32 %v1140, 1.0
    %v1653 = vmin.f32 %v1141, 1.0
    %v1654 = vmin.f32 %v1142, 1.0
    %v1655 = vmin.f32 %v1143, 1.0
    %v1656 = vmin.f32 %v1144, 1.0
    %v1657 = vmin.f32 %v1145, 1.0
    %v1658 = vmin.f32 %v1146, 1.0
    %v1659 = vmin.f32 %v1147, 1.0
    %v1660 = vmin.f32 %v1148, 1.0
    %v1661 = vmin.f32 %v1149, 1.0
    %v1662 = vmin.f32 %v1150, 1.0
    %v1663 = vmin.f32 %v1151, 1.0
    %v1664 = vmin.f32 %v1152, 1.0
    %v1665 = vmin.f32 %v1153, 1.0
    %v1666 = vmin.f32 %v1154, 1.0
    %v1667 = vmin.f32 %v1155, 1.0
    %v1668 = vmin.f32 %v1156, 1.0
    %v1669 = vmin.f32 %v1157, 1.0
    %v1670 = vmin.f32 %v1158, 1.0
    %v1671 = vmin.f32 %v1159, 1.0
    %v1672 = vmin.f32 %v1160, 1.0
    %v1673 = vmin.f32 %v1161, 1.0
    %v1674 = vmin.f32 %v1162, 1.0
    %v1675 = vmin.f32 %v1163, 1.0
    %v1676 = vmin.f32 %v1164, 1.0
    %v1677 = vmin.f32 %v1165, 1.0
    %v1678 = vmin.f32 %v1166, 1.0
    %v1679 = vmin.f32 %v1167, 1.0
    %v1680 = vmin.f32 %v1168, 1.0
    %v1681 = vmin.f32 %v1169, 1.0
    %v1682 = vmin.f32 %v1170, 1.0
    %v1683 = vmin.f32 %v1171, 1.0
    %v1684 = vmin.f32 %v1172, 1.0
    %v1685 = vmin.f32 %v1173, 1.0
    %v1686 = vmin.f32 %v1174, 1.0
    %v1687 = vmin.f32 %v1175, 1.0
    %v1688 = vmin.f32 %v1176, 1.0
    %v1689 = vmin.f32 %v1177, 1.0
    %v1690 = vmin.f32 %v1178, 1.0
    %v1691 = vmin.f32 %v1179, 1.0
    %v1692 = vmin.f32 %v1180, 1.0
    %v1693 = vmin.f32 %v1181, 1.0
    %v1694 = vmin.f32 %v1182, 1.0
    %v1695 = vmin.f32 %v1183, 1.0
    %v1696 = vmin.f32 %v1184, 1.0
    %v1697 = vmin.f32 %v1185, 1.0
    %v1698 = vmin.f32 %v1186, 1.0
    %v1699 = vmin.f32 %v1187, 1.0
    %v1700 = vmin.f32 %v1188, 1.0
    %v1701 = vmin.f32 %v1189, 1.0
    %v1702 = vmin.f32 %v1190, 1.0
    %v1703 = vmin.f32 %v1191, 1.0
    %v1704 = vmin.f32 %v1192, 1.0
    %v1705 = vmin.f32 %v1193, 1.0
    %v1706 = vmin.f32 %v1194, 1.0
    %v1707 = vmin.f32 %v1195, 1.0
    %v1708 = vmin.f32 %v1196, 1.0
    %v1709 = vmin.f32 %v1197, 1.0
    %v1710 = vmin.f32 %v1198, 1.0
    %v1711 = vmin.f32 %v1199, 1.0
    %v1712 = vmin.f32 %v1200, 1.0
    %v1713 = vmin.f32 %v1201, 1.0
    %v1714 = vmin.f32 %v1202, 1.0
    %v1715 = vmin.f32 %v1203, 1.0
    %v1716 = vmin.f32 %v1204, 1.0
    %v1717 = vmin.f32 %v1205, 1.0
    %v1718 = vmin.f32 %v1206, 1.0
    %v1719 = vmin.f32 %v1207, 1.0
    %v1720 = vmin.f32 %v1208, 1.0
    %v1721 = vmin.f32 %v1209, 1.0
    %v1722 = vmin.f32 %v1210, 1.0
    %v1723 = vmin.f32 %v1211, 1.0
    %v1724 = vmin.f32 %v1212, 1.0
    %v1725 = vmin.f32 %v1213, 1.0
    %v1726 = vmin.f32 %v1214, 1.0
    %v1727 = vmin.f32 %v1215, 1.0
    %v1728 = vmin.f32 %v1216, 1.0
    %v1729 = vmin.f32 %v1217, 1.0
    %v1730 = vmin.f32 %v1218, 1.0
    %v1731 = vmin.f32 %v1219, 1.0
    %v1732 = vmin.f32 %v1220, 1.0
    %v1733 = vmin.f32 %v1221, 1.0
    %v1734 = vmin.f32 %v1222, 1.0
    %v1735 = vmin.f32 %v1223, 1.0
    %v1736 = vmin.f32 %v1224, 1.0
    %v1737 = vmin.f32 %v1225, 1.0
    %v1738 = vmin.f32 %v1226, 1.0
    %v1739 = vmin.f32 %v1227, 1.0
    %v1740 = vmin.f32 %v1228, 1.0
    %v1741 = vmin.f32 %v1229, 1.0
    %v1742 = vmin.f32 %v1230, 1.0
    %v1743 = vmin.f32 %v1231, 1.0
    %v1744 = vmin.f32 %v1232, 1.0
    %v1745 = vmin.f32 %v1233, 1.0
    %v1746 = vmin.f32 %v1234, 1.0
    %v1747 = vmin.f32 %v1235, 1.0
    %v1748 = vmin.f32 %v1236, 1.0
    %v1749 = vmin.f32 %v1237, 1.0
    %v1750 = vmin.f32 %v1238, 1.0
    %v1751 = vmin.f32 %v1239, 1.0
    %v1752 = vmin.f32 %v1240, 1.0
    %v1753 = vmin.f32 %v1241, 1.0
    %v1754 = vmin.f32 %v1242, 1.0
    %v1755 = vmin.f32 %v1243, 1.0
    %v1756 = vmin.f32 %v1244, 1.0
    %v1757 = vmin.f32 %v1245, 1.0
    %v1758 = vmin.f32 %v1246, 1.0
    %v1759 = vmin.f32 %v1247, 1.0
    %v1760 = vmin.f32 %v1248, 1.0
    %v1761 = vmin.f32 %v1249, 1.0
    %v1762 = vmin.f32 %v1250, 1.0
    %v1763 = vmin.f32 %v1251, 1.0
    %v1764 = vmin.f32 %v1252, 1.0
    %v1765 = vmin.f32 %v1253, 1.0
    %v1766 = vmin.f32 %v1254, 1.0
    %v1767 = vmin.f32 %v1255, 1.0
    %v1768 = vmin.f32 %v1256, 1.0
    %v1769 = vmin.f32 %v1257, 1.0
    %v1770 = vmin.f32 %v1258, 1.0
    %v1771 = vmin.f32 %v1259, 1.0
    %v1772 = vmin.f32 %v1260, 1.0
    %v1773 = vmin.f32 %v1261, 1.0
    %v1774 = vmin.f32 %v1262, 1.0
    %v1775 = vmin.f32 %v1263, 1.0
    %v1776 = vmin.f32 %v1264, 1.0
    %v1777 = vmin.f32 %v1265, 1.0
    %v1778 = vmin.f32 %v1266, 1.0
    %v1779 = vmin.f32 %v1267, 1.0
    %v1780 = vmin.f32 %v1268, 1.0
    %v1781 = vmin.f32 %v1269, 1.0
    %v1782 = vmin.f32 %v1270, 1.0
    %v1783 = vmin.f32 %v1271, 1.0
    %v1784 = vmin.f32 %v1272, 1.0
    %v1785 = vmin.f32 %v1273, 1.0
    %v1786 = vmin.f32 %v1274, 1.0
    %v1787 = vmin.f32 %v1275, 1.0
    %v1788 = vmin.f32 %v1276, 1.0
    %v1789 = vmin.f32 %v1277, 1.0
    %v1790 = vmin.f32 %v1278, 1.0
    %v1791 = vmin.f32 %v1279, 1.0
    %v1792 = vmin.f32 %v1280, 1.0
    %v1793 = vmin.f32 %v1281, 1.0
    %v1794 = vmin.f32 %v1282, 1.0
    %v1795 = vmin.f32 %v1283, 1.0
    %v1796 = vmin.f32 %v1284, 1.0
    %v1797 = vmin.f32 %v1285, 1.0
    %v1798 = vmin.f32 %v1286, 1.0
    %v1799 = vmin.f32 %v1287, 1.0
    %v1800 = vmin.f32 %v1288, 1.0
    %v1801 = vmin.f32 %v1289, 1.0
    %v1802 = vmin.f32 %v1290, 1.0
    %v1803 = vmin.f32 %v1291, 1.0
    %v1804 = vmin.f32 %v1292, 1.0
    %v1805 = vmin.f32 %v1293, 1.0
    %v1806 = vmin.f32 %v1294, 1.0
    %v1807 = vmin.f32 %v1295, 1.0
    %v1808 = vmin.f32 %v1296, 1.0
    %v1809 = vmin.f32 %v1297, 1.0
    %v1810 = vmin.f32 %v1298, 1.0
    %v1811 = vmin.f32 %v1299, 1.0
    %v1812 = vmin.f32 %v1300, 1.0
    %v1813 = vmin.f32 %v1301, 1.0
    %v1814 = vmin.f32 %v1302, 1.0
    %v1815 = vmin.f32 %v1303, 1.0
    %v1816 = vmin.f32 %v1304, 1.0
    %v1817 = vmin.f32 %v1305, 1.0
    %v1818 = vmin.f32 %v1306, 1.0
    %v1819 = vmin.f32 %v1307, 1.0
    %v1820 = vmin.f32 %v1308, 1.0
    %v1821 = vmin.f32 %v1309, 1.0
    %v1822 = vmin.f32 %v1310, 1.0
    %v1823 = vmin.f32 %v1311, 1.0
    %v1824 = vmin.f32 %v1312, 1.0
    %v1825 = vmin.f32 %v1313, 1.0
    %v1826 = vmin.f32 %v1314, 1.0
    %v1827 = vmin.f32 %v1315, 1.0
    %v1828 = vmin.f32 %v1316, 1.0
    %v1829 = vmin.f32 %v1317, 1.0
    %v1830 = vmin.f32 %v1318, 1.0
    %v1831 = vmin.f32 %v1319, 1.0
    %v1832 = vmin.f32 %v1320, 1.0
    %v1833 = vmin.f32 %v1321, 1.0
    %v1834 = vmin.f32 %v1322, 1.0
    %v1835 = vmin.f32 %v1323, 1.0
    %v1836 = vmin.f32 %v1324, 1.0
    %v1837 = vmin.f32 %v1325, 1.0
    %v1838 = vmin.f32 %v1326, 1.0
    %v1839 = vmin.f32 %v1327, 1.0
    %v1840 = vmin.f32 %v1328, 1.0
    %v1841 = vmin.f32 %v1329, 1.0
    %v1842 = vmin.f32 %v1330, 1.0
    %v1843 = vmin.f32 %v1331, 1.0
    %v1844 = vmin.f32 %v1332, 1.0
    %v1845 = vmin.f32 %v1333, 1.0
    %v1846 = vmin.f32 %v1334, 1.0
    %v1847 = vmin.f32 %v1335, 1.0
    %v1848 = vmin.f32 %v1336, 1.0
    %v1849 = vmin.f32 %v1337, 1.0
    %v1850 = vmin.f32 %v1338, 1.0
    %v1851 = vmin.f32 %v1339, 1.0
    %v1852 = vmin.f32 %v1340, 1.0
    %v1853 = vmin.f32 %v1341, 1.0
    %v1854 = vmin.f32 %v1342, 1.0
    %v1855 = vmin.f32 %v1343, 1.0
    %v1856 = vmin.f32 %v1344, 1.0
    %v1857 = vmin.f32 %v1345, 1.0
    %v1858 = vmin.f32 %v1346, 1.0
    %v1859 = vmin.f32 %v1347, 1.0
    %v1860 = vmin.f32 %v1348, 1.0
    %v1861 = vmin.f32 %v1349, 1.0
    %v1862 = vmin.f32 %v1350, 1.0
    %v1863 = vmin.f32 %v1351, 1.0
    %v1864 = vmin.f32 %v1352, 1.0
    %v1865 = vmin.f32 %v1353, 1.0
    %v1866 = vmin.f32 %v1354, 1.0
    %v1867 = vmin.f32 %v1355, 1.0
    %v1868 = vmin.f32 %v1356, 1.0
    %v1869 = vmin.f32 %v1357, 1.0
    %v1870 = vmin.f32 %v1358, 1.0
    %v1871 = vmin.f32 %v1359, 1.0
    %v1872 = vmin.f32 %v1360, 1.0
    %v1873 = vmin.f32 %v1361, 1.0
    %v1874 = vmin.f32 %v1362, 1.0
    %v1875 = vmin.f32 %v1363, 1.0
    %v1876 = vmin.f32 %v1364, 1.0
    %v1877 = vmin.f32 %v1365, 1.0
    %v1878 = vmin.f32 %v1366, 1.0
    %v1879 = vmin.f32 %v1367, 1.0
    %v1880 = vmin.f32 %v1368, 1.0
    %v1881 = vmin.f32 %v1369, 1.0
    %v1882 = vmin.f32 %v1370, 1.0
    %v1883 = vmin.f32 %v1371, 1.0
    %v1884 = vmin.f32 %v1372, 1.0
    %v1885 = vmin.f32 %v1373, 1.0
    %v1886 = vmin.f32 %v1374, 1.0
    %v1887 = vmin.f32 %v1375, 1.0
    %v1888 = vmin.f32 %v1376, 1.0
    %v1889 = vmin.f32 %v1377, 1.0
    %v1890 = vmin.f32 %v1378, 1.0
    %v1891 = vmin.f32 %v1379, 1.0
    %v1892 = vmin.f32 %v1380, 1.0
    %v1893 = vmin.f32 %v1381, 1.0
    %v1894 = vmin.f32 %v1382, 1.0
    %v1895 = vmin.f32 %v1383, 1.0
    %v1896 = vmin.f32 %v1384, 1.0
    %v1897 = vmin.f32 %v1385, 1.0
    %v1898 = vmin.f32 %v1386, 1.0
    %v1899 = vmin.f32 %v1387, 1.0
    %v1900 = vmin.f32 %v1388, 1.0
    %v1901 = vmin.f32 %v1389, 1.0
    %v1902 = vmin.f32 %v1390, 1.0
    %v1903 = vmin.f32 %v1391, 1.0
    %v1904 = vmin.f32 %v1392, 1.0
    %v1905 = vmin.f32 %v1393, 1.0
    %v1906 = vmin.f32 %v1394, 1.0
    %v1907 = vmin.f32 %v1395, 1.0
    %v1908 = vmin.f32 %v1396, 1.0
    %v1909 = vmin.f32 %v1397, 1.0
    %v1910 = vmin.f32 %v1398, 1.0
    %v1911 = vmin.f32 %v1399, 1.0
    %v1912 = vmin.f32 %v1400, 1.0
    %v1913 = vmin.f32 %v1401, 1.0
    %v1914 = vmin.f32 %v1402, 1.0
    %v1915 = vmin.f32 %v1403, 1.0
    %v1916 = vmin.f32 %v1404, 1.0
    %v1917 = vmin.f32 %v1405, 1.0
    %v1918 = vmin.f32 %v1406, 1.0
    %v1919 = vmin.f32 %v1407, 1.0
    %v1920 = vmin.f32 %v1408, 1.0
    %v1921 = vmin.f32 %v1409, 1.0
    %v1922 = vmin.f32 %v1410, 1.0
    %v1923 = vmin.f32 %v1411, 1.0
    %v1924 = vmin.f32 %v1412, 1.0
    %v1925 = vmin.f32 %v1413, 1.0
    %v1926 = vmin.f32 %v1414, 1.0
    %v1927 = vmin.f32 %v1415, 1.0
    %v1928 = vmin.f32 %v1416, 1.0
    %v1929 = vmin.f32 %v1417, 1.0
    %v1930 = vmin.f32 %v1418, 1.0
    %v1931 = vmin.f32 %v1419, 1.0
    %v1932 = vmin.f32 %v1420, 1.0
    %v1933 = vmin.f32 %v1421, 1.0
    %v1934 = vmin.f32 %v1422, 1.0
    %v1935 = vmin.f32 %v1423, 1.0
    %v1936 = vmin.f32 %v1424, 1.0
    %v1937 = vmin.f32 %v1425, 1.0
    %v1938 = vmin.f32 %v1426, 1.0
    %v1939 = vmin.f32 %v1427, 1.0
    %v1940 = vmin.f32 %v1428, 1.0
    %v1941 = vmin.f32 %v1429, 1.0
    %v1942 = vmin.f32 %v1430, 1.0
    %v1943 = vmin.f32 %v1431, 1.0
    %v1944 = vmin.f32 %v1432, 1.0
    %v1945 = vmin.f32 %v1433, 1.0
    %v1946 = vmin.f32 %v1434, 1.0
    %v1947 = vmin.f32 %v1435, 1.0
    %v1948 = vmin.f32 %v1436, 1.0
    %v1949 = vmin.f32 %v1437, 1.0
    %v1950 = vmin.f32 %v1438, 1.0
    %v1951 = vmin.f32 %v1439, 1.0
    %v1952 = vmin.f32 %v1440, 1.0
    %v1953 = vmin.f32 %v1441, 1.0
    %v1954 = vmin.f32 %v1442, 1.0
    %v1955 = vmin.f32 %v1443, 1.0
    %v1956 = vmin.f32 %v1444, 1.0
    %v1957 = vmin.f32 %v1445, 1.0
    %v1958 = vmin.f32 %v1446, 1.0
    %v1959 = vmin.f32 %v1447, 1.0
    %v1960 = vmin.f32 %v1448, 1.0
    %v1961 = vmin.f32 %v1449, 1.0
    %v1962 = vmin.f32 %v1450, 1.0
    %v1963 = vmin.f32 %v1451, 1.0
    %v1964 = vmin.f32 %v1452, 1.0
    %v1965 = vmin.f32 %v1453, 1.0
    %v1966 = vmin.f32 %v1454, 1.0
    %v1967 = vmin.f32 %v1455, 1.0
    %v1968 = vmin.f32 %v1456, 1.0
    %v1969 = vmin.f32 %v1457, 1.0
    %v1970 = vmin.f32 %v1458, 1.0
    %v1971 = vmin.f32 %v1459, 1.0
    %v1972 = vmin.f32 %v1460, 1.0
    %v1973 = vmin.f32 %v1461, 1.0
    %v1974 = vmin.f32 %v1462, 1.0
    %v1975 = vmin.f32 %v1463, 1.0
    %v1976 = vmin.f32 %v1464, 1.0
    %v1977 = vmin.f32 %v1465, 1.0
    %v1978 = vmin.f32 %v1466, 1.0
    %v1979 = vmin.f32 %v1467, 1.0
    %v1980 = vmin.f32 %v1468, 1.0
    %v1981 = vmin.f32 %v1469, 1.0
    %v1982 = vmin.f32 %v1470, 1.0
    %v1983 = vmin.f32 %v1471, 1.0
    %v1984 = vmin.f32 %v1472, 1.0
    %v1985 = vmin.f32 %v1473, 1.0
    %v1986 = vmin.f32 %v1474, 1.0
    %v1987 = vmin.f32 %v1475, 1.0
    %v1988 = vmin.f32 %v1476, 1.0
    %v1989 = vmin.f32 %v1477, 1.0
    %v1990 = vmin.f32 %v1478, 1.0
    %v1991 = vmin.f32 %v1479, 1.0
    %v1992 = vmin.f32 %v1480, 1.0
    %v1993 = vmin.f32 %v1481, 1.0
    %v1994 = vmin.f32 %v1482, 1.0
    %v1995 = vmin.f32 %v1483, 1.0
    %v1996 = vmin.f32 %v1484, 1.0
    %v1997 = vmin.f32 %v1485, 1.0
    %v1998 = vmin.f32 %v1486, 1.0
    %v1999 = vmin.f32 %v1487, 1.0
    %v2000 = vmin.f32 %v1488, 1.0
    %v2001 = vmin.f32 %v1489, 1.0
    %v2002 = vmin.f32 %v1490, 1.0
    %v2003 = vmin.f32 %v1491, 1.0
    %v2004 = vmin.f32 %v1492, 1.0
    %v2005 = vmin.f32 %v1493, 1.0
    %v2006 = vmin.f32 %v1494, 1.0
    %v2007 = vmin.f32 %v1495, 1.0
    %v2008 = vmin.f32 %v1496, 1.0
    %v2009 = vmin.f32 %v1497, 1.0
    %v2010 = vmin.f32 %v1498, 1.0
    %v2011 = vmin.f32 %v1499, 1.0
    %v2012 = vmin.f32 %v1500, 1.0
    %v2013 = vmin.f32 %v1501, 1.0
    %v2014 = vmin.f32 %v1502, 1.0
    %v2015 = vmin.f32 %v1503, 1.0
    %v2016 = vmin.f32 %v1504, 1.0
    %v2017 = vmin.f32 %v1505, 1.0
    %v2018 = vmin.f32 %v1506, 1.0
    %v2019 = vmin.f32 %v1507, 1.0
    %v2020 = vmin.f32 %v1508, 1.0
    %v2021 = vmin.f32 %v1509, 1.0
    %v2022 = vmin.f32 %v1510, 1.0
    %v2023 = vmin.f32 %v1511, 1.0
    %v2024 = vmin.f32 %v1512, 1.0
    %v2025 = vmin.f32 %v1513, 1.0
    %v2026 = vmin.f32 %v1514, 1.0
    %v2027 = vmin.f32 %v1515, 1.0
    %v2028 = vmin.f32 %v1516, 1.0
    %v2029 = vmin.f32 %v1517, 1.0
    %v2030 = vmin.f32 %v1518, 1.0
    %v2031 = vmin.f32 %v1519, 1.0
    %v2032 = vmin.f32 %v1520, 1.0
    %v2033 = vmin.f32 %v1521, 1.0
    %v2034 = vmin.f32 %v1522, 1.0
    %v2035 = vmin.f32 %v1523, 1.0
    %v2036 = vmin.f32 %v1524, 1.0
    %v2037 = vmin.f32 %v1525, 1.0
    %v2038 = vmin.f32 %v1526, 1.0
    %v2039 = vmin.f32 %v1527, 1.0
    %v2040 = vmin.f32 %v1528, 1.0
    %v2041 = vmin.f32 %v1529, 1.0
    %v2042 = vmin.f32 %v1530, 1.0
    %v2043 = vmin.f32 %v1531, 1.0
    %v2044 = vmin.f32 %v1532, 1.0
    %v2045 = vmin.f32 %v1533, 1.0
    %v2046 = vmin.f32 %v1534, 1.0
    %v2047 = vmin.f32 %v1535, 1.0
    %v2048 = vmin.f32 %v1536, 1.0
    %v2049 = vmin.f32 %v1537, 1.0
    %v2050 = vmin.f32 %v1538, 1.0
    %v2051 = vmin.f32 %v1539, 1.0
    %v2052 = vmin.f32 %v1540, 1.0
    %v2053 = vmin.f32 %v1541, 1.0
    %v2054 = vmin.f32 %v1542, 1.0
    %v2055 = vmin.f32 %v1543, 1.0
    %v2056 = vmin.f32 %v1544, 1.0
    %v2057 = vmin.f32 %v1545, 1.0
    %v2058 = vmin.f32 %v1546, 1.0
    %v2059 = vmin.f32 %v1547, 1.0
    %v2060 = vmin.f32 %v1548, 1.0
    %v2061 = vmin.f32 %v1549, 1.0
    %v2062 = vmin.f32 %v1550, 1.0
    %v2063 = vmin.f32 %v1551, 1.0
    %v2064 = vmin.f32 %v1552, 1.0
    %v2065 = vmin.f32 %v1553, 1.0
    %v2066 = vmin.f32 %v1554, 1.0
    %v2067 = vmin.f32 %v1555, 1.0
    %v2068 = vmin.f32 %v1556, 1.0
    %v2069 = vmin.f32 %v1557, 1.0
    %v2070 = vmin.f32 %v1558, 1.0
    %v2071 = vmin.f32 %v1559, 1.0
    %v2072 = vmin.f32 %v1560, 1.0
    %v2073 = vmin.f32 %v1561, 1.0
    %v2074 = vmin.f32 %v1562, 1.0
    %v2075 = vmin.f32 %v1563, 1.0
    %v2076 = vmin.f32 %v1564, 1.0
    %v2077 = vmin.f32 %v1565, 1.0
    %v2078 = vmin.f32 %v1566, 1.0
    %v2079 = vmin.f32 %v1567, 1.0
    %v2080 = vmin.f32 %v1568, 1.0
    %v2081 = vmin.f32 %v1569, 1.0
    %v2082 = vmin.f32 %v1570, 1.0
    %v2083 = vmin.f32 %v1571, 1.0
    %v2084 = vmin.f32 %v1572, 1.0
    %v2085 = vmin.f32 %v1573, 1.0
    %v2086 = vmin.f32 %v1574, 1.0
    %v2087 = vmin.f32 %v1575, 1.0
    %v2088 = vmin.f32 %v1576, 1.0
    %v2089 = vmin.f32 %v1577, 1.0
    %v2090 = vmin.f32 %v1578, 1.0
    %v2091 = vmin.f32 %v1579, 1.0
    %v2092 = vmin.f32 %v1580, 1.0
    %v2093 = vmin.f32 %v1581, 1.0
    %v2094 = vmin.f32 %v1582, 1.0
    %v2095 = vmin.f32 %v1583, 1.0
    %v2096 = vmin.f32 %v1584, 1.0
    %v2097 = vmin.f32 %v1585, 1.0
    %v2098 = vstv %s48
    %v2099 = vmul.f32 %v2098, %v1586
    %v2100 = vmul.f32 %v2098, %v1587
    %v2101 = vmul.f32 %v2098, %v1588
    %v2102 = vmul.f32 %v2098, %v1589
    %v2103 = vmul.f32 %v2098, %v1590
    %v2104 = vmul.f32 %v2098, %v1591
    %v2105 = vmul.f32 %v2098, %v1592
    %v2106 = vmul.f32 %v2098, %v1593
    %v2107 = vmul.f32 %v2098, %v1594
    %v2108 = vmul.f32 %v2098, %v1595
    %v2109 = vmul.f32 %v2098, %v1596
    %v2110 = vmul.f32 %v2098, %v1597
    %v2111 = vmul.f32 %v2098, %v1598
    %v2112 = vmul.f32 %v2098, %v1599
    %v2113 = vmul.f32 %v2098, %v1600
    %v2114 = vmul.f32 %v2098, %v1601
    %v2115 = vmul.f32 %v2098, %v1602
    %v2116 = vmul.f32 %v2098, %v1603
    %v2117 = vmul.f32 %v2098, %v1604
    %v2118 = vmul.f32 %v2098, %v1605
    %v2119 = vmul.f32 %v2098, %v1606
    %v2120 = vmul.f32 %v2098, %v1607
    %v2121 = vmul.f32 %v2098, %v1608
    %v2122 = vmul.f32 %v2098, %v1609
    %v2123 = vmul.f32 %v2098, %v1610
    %v2124 = vmul.f32 %v2098, %v1611
    %v2125 = vmul.f32 %v2098, %v1612
    %v2126 = vmul.f32 %v2098, %v1613
    %v2127 = vmul.f32 %v2098, %v1614
    %v2128 = vmul.f32 %v2098, %v1615
    %v2129 = vmul.f32 %v2098, %v1616
    %v2130 = vmul.f32 %v2098, %v1617
    %v2131 = vmul.f32 %v2098, %v1618
    %v2132 = vmul.f32 %v2098, %v1619
    %v2133 = vmul.f32 %v2098, %v1620
    %v2134 = vmul.f32 %v2098, %v1621
    %v2135 = vmul.f32 %v2098, %v1622
    %v2136 = vmul.f32 %v2098, %v1623
    %v2137 = vmul.f32 %v2098, %v1624
    %v2138 = vmul.f32 %v2098, %v1625
    %v2139 = vmul.f32 %v2098, %v1626
    %v2140 = vmul.f32 %v2098, %v1627
    %v2141 = vmul.f32 %v2098, %v1628
    %v2142 = vmul.f32 %v2098, %v1629
    %v2143 = vmul.f32 %v2098, %v1630
    %v2144 = vmul.f32 %v2098, %v1631
    %v2145 = vmul.f32 %v2098, %v1632
    %v2146 = vmul.f32 %v2098, %v1633
    %v2147 = vmul.f32 %v2098, %v1634
    %v2148 = vmul.f32 %v2098, %v1635
    %v2149 = vmul.f32 %v2098, %v1636
    %v2150 = vmul.f32 %v2098, %v1637
    %v2151 = vmul.f32 %v2098, %v1638
    %v2152 = vmul.f32 %v2098, %v1639
    %v2153 = vmul.f32 %v2098, %v1640
    %v2154 = vmul.f32 %v2098, %v1641
    %v2155 = vmul.f32 %v2098, %v1642
    %v2156 = vmul.f32 %v2098, %v1643
    %v2157 = vmul.f32 %v2098, %v1644
    %v2158 = vmul.f32 %v2098, %v1645
    %v2159 = vmul.f32 %v2098, %v1646
    %v2160 = vmul.f32 %v2098, %v1647
    %v2161 = vmul.f32 %v2098, %v1648
    %v2162 = vmul.f32 %v2098, %v1649
    %v2163 = vmul.f32 %v2098, %v1650
    %v2164 = vmul.f32 %v2098, %v1651
    %v2165 = vmul.f32 %v2098, %v1652
    %v2166 = vmul.f32 %v2098, %v1653
    %v2167 = vmul.f32 %v2098, %v1654
    %v2168 = vmul.f32 %v2098, %v1655
    %v2169 = vmul.f32 %v2098, %v1656
    %v2170 = vmul.f32 %v2098, %v1657
    %v2171 = vmul.f32 %v2098, %v1658
    %v2172 = vmul.f32 %v2098, %v1659
    %v2173 = vmul.f32 %v2098, %v1660
    %v2174 = vmul.f32 %v2098, %v1661
    %v2175 = vmul.f32 %v2098, %v1662
    %v2176 = vmul.f32 %v2098, %v1663
    %v2177 = vmul.f32 %v2098, %v1664
    %v2178 = vmul.f32 %v2098, %v1665
    %v2179 = vmul.f32 %v2098, %v1666
    %v2180 = vmul.f32 %v2098, %v1667
    %v2181 = vmul.f32 %v2098, %v1668
    %v2182 = vmul.f32 %v2098, %v1669
    %v2183 = vmul.f32 %v2098, %v1670
    %v2184 = vmul.f32 %v2098, %v1671
    %v2185 = vmul.f32 %v2098, %v1672
    %v2186 = vmul.f32 %v2098, %v1673
    %v2187 = vmul.f32 %v2098, %v1674
    %v2188 = vmul.f32 %v2098, %v1675
    %v2189 = vmul.f32 %v2098, %v1676
    %v2190 = vmul.f32 %v2098, %v1677
    %v2191 = vmul.f32 %v2098, %v1678
    %v2192 = vmul.f32 %v2098, %v1679
    %v2193 = vmul.f32 %v2098, %v1680
    %v2194 = vmul.f32 %v2098, %v1681
    %v2195 = vmul.f32 %v2098, %v1682
    %v2196 = vmul.f32 %v2098, %v1683
    %v2197 = vmul.f32 %v2098, %v1684
    %v2198 = vmul.f32 %v2098, %v1685
    %v2199 = vmul.f32 %v2098, %v1686
    %v2200 = vmul.f32 %v2098, %v1687
    %v2201 = vmul.f32 %v2098, %v1688
    %v2202 = vmul.f32 %v2098, %v1689
    %v2203 = vmul.f32 %v2098, %v1690
    %v2204 = vmul.f32 %v2098, %v1691
    %v2205 = vmul.f32 %v2098, %v1692
    %v2206 = vmul.f32 %v2098, %v1693
    %v2207 = vmul.f32 %v2098, %v1694
    %v2208 = vmul.f32 %v2098, %v1695
    %v2209 = vmul.f32 %v2098, %v1696
    %v2210 = vmul.f32 %v2098, %v1697
    %v2211 = vmul.f32 %v2098, %v1698
    %v2212 = vmul.f32 %v2098, %v1699
    %v2213 = vmul.f32 %v2098, %v1700
    %v2214 = vmul.f32 %v2098, %v1701
    %v2215 = vmul.f32 %v2098, %v1702
    %v2216 = vmul.f32 %v2098, %v1703
    %v2217 = vmul.f32 %v2098, %v1704
    %v2218 = vmul.f32 %v2098, %v1705
    %v2219 = vmul.f32 %v2098, %v1706
    %v2220 = vmul.f32 %v2098, %v1707
    %v2221 = vmul.f32 %v2098, %v1708
    %v2222 = vmul.f32 %v2098, %v1709
    %v2223 = vmul.f32 %v2098, %v1710
    %v2224 = vmul.f32 %v2098, %v1711
    %v2225 = vmul.f32 %v2098, %v1712
    %v2226 = vmul.f32 %v2098, %v1713
    %v2227 = vmul.f32 %v2098, %v1714
    %v2228 = vmul.f32 %v2098, %v1715
    %v2229 = vmul.f32 %v2098, %v1716
    %v2230 = vmul.f32 %v2098, %v1717
    %v2231 = vmul.f32 %v2098, %v1718
    %v2232 = vmul.f32 %v2098, %v1719
    %v2233 = vmul.f32 %v2098, %v1720
    %v2234 = vmul.f32 %v2098, %v1721
    %v2235 = vmul.f32 %v2098, %v1722
    %v2236 = vmul.f32 %v2098, %v1723
    %v2237 = vmul.f32 %v2098, %v1724
    %v2238 = vmul.f32 %v2098, %v1725
    %v2239 = vmul.f32 %v2098, %v1726
    %v2240 = vmul.f32 %v2098, %v1727
    %v2241 = vmul.f32 %v2098, %v1728
    %v2242 = vmul.f32 %v2098, %v1729
    %v2243 = vmul.f32 %v2098, %v1730
    %v2244 = vmul.f32 %v2098, %v1731
    %v2245 = vmul.f32 %v2098, %v1732
    %v2246 = vmul.f32 %v2098, %v1733
    %v2247 = vmul.f32 %v2098, %v1734
    %v2248 = vmul.f32 %v2098, %v1735
    %v2249 = vmul.f32 %v2098, %v1736
    %v2250 = vmul.f32 %v2098, %v1737
    %v2251 = vmul.f32 %v2098, %v1738
    %v2252 = vmul.f32 %v2098, %v1739
    %v2253 = vmul.f32 %v2098, %v1740
    %v2254 = vmul.f32 %v2098, %v1741
    %v2255 = vmul.f32 %v2098, %v1742
    %v2256 = vmul.f32 %v2098, %v1743
    %v2257 = vmul.f32 %v2098, %v1744
    %v2258 = vmul.f32 %v2098, %v1745
    %v2259 = vmul.f32 %v2098, %v1746
    %v2260 = vmul.f32 %v2098, %v1747
    %v2261 = vmul.f32 %v2098, %v1748
    %v2262 = vmul.f32 %v2098, %v1749
    %v2263 = vmul.f32 %v2098, %v1750
    %v2264 = vmul.f32 %v2098, %v1751
    %v2265 = vmul.f32 %v2098, %v1752
    %v2266 = vmul.f32 %v2098, %v1753
    %v2267 = vmul.f32 %v2098, %v1754
    %v2268 = vmul.f32 %v2098, %v1755
    %v2269 = vmul.f32 %v2098, %v1756
    %v2270 = vmul.f32 %v2098, %v1757
    %v2271 = vmul.f32 %v2098, %v1758
    %v2272 = vmul.f32 %v2098, %v1759
    %v2273 = vmul.f32 %v2098, %v1760
    %v2274 = vmul.f32 %v2098, %v1761
    %v2275 = vmul.f32 %v2098, %v1762
    %v2276 = vmul.f32 %v2098, %v1763
    %v2277 = vmul.f32 %v2098, %v1764
    %v2278 = vmul.f32 %v2098, %v1765
    %v2279 = vmul.f32 %v2098, %v1766
    %v2280 = vmul.f32 %v2098, %v1767
    %v2281 = vmul.f32 %v2098, %v1768
    %v2282 = vmul.f32 %v2098, %v1769
    %v2283 = vmul.f32 %v2098, %v1770
    %v2284 = vmul.f32 %v2098, %v1771
    %v2285 = vmul.f32 %v2098, %v1772
    %v2286 = vmul.f32 %v2098, %v1773
    %v2287 = vmul.f32 %v2098, %v1774
    %v2288 = vmul.f32 %v2098, %v1775
    %v2289 = vmul.f32 %v2098, %v1776
    %v2290 = vmul.f32 %v2098, %v1777
    %v2291 = vmul.f32 %v2098, %v1778
    %v2292 = vmul.f32 %v2098, %v1779
    %v2293 = vmul.f32 %v2098, %v1780
    %v2294 = vmul.f32 %v2098, %v1781
    %v2295 = vmul.f32 %v2098, %v1782
    %v2296 = vmul.f32 %v2098, %v1783
    %v2297 = vmul.f32 %v2098, %v1784
    %v2298 = vmul.f32 %v2098, %v1785
    %v2299 = vmul.f32 %v2098, %v1786
    %v2300 = vmul.f32 %v2098, %v1787
    %v2301 = vmul.f32 %v2098, %v1788
    %v2302 = vmul.f32 %v2098, %v1789
    %v2303 = vmul.f32 %v2098, %v1790
    %v2304 = vmul.f32 %v2098, %v1791
    %v2305 = vmul.f32 %v2098, %v1792
    %v2306 = vmul.f32 %v2098, %v1793
    %v2307 = vmul.f32 %v2098, %v1794
    %v2308 = vmul.f32 %v2098, %v1795
    %v2309 = vmul.f32 %v2098, %v1796
    %v2310 = vmul.f32 %v2098, %v1797
    %v2311 = vmul.f32 %v2098, %v1798
    %v2312 = vmul.f32 %v2098, %v1799
    %v2313 = vmul.f32 %v2098, %v1800
    %v2314 = vmul.f32 %v2098, %v1801
    %v2315 = vmul.f32 %v2098, %v1802
    %v2316 = vmul.f32 %v2098, %v1803
    %v2317 = vmul.f32 %v2098, %v1804
    %v2318 = vmul.f32 %v2098, %v1805
    %v2319 = vmul.f32 %v2098, %v1806
    %v2320 = vmul.f32 %v2098, %v1807
    %v2321 = vmul.f32 %v2098, %v1808
    %v2322 = vmul.f32 %v2098, %v1809
    %v2323 = vmul.f32 %v2098, %v1810
    %v2324 = vmul.f32 %v2098, %v1811
    %v2325 = vmul.f32 %v2098, %v1812
    %v2326 = vmul.f32 %v2098, %v1813
    %v2327 = vmul.f32 %v2098, %v1814
    %v2328 = vmul.f32 %v2098, %v1815
    %v2329 = vmul.f32 %v2098, %v1816
    %v2330 = vmul.f32 %v2098, %v1817
    %v2331 = vmul.f32 %v2098, %v1818
    %v2332 = vmul.f32 %v2098, %v1819
    %v2333 = vmul.f32 %v2098, %v1820
    %v2334 = vmul.f32 %v2098, %v1821
    %v2335 = vmul.f32 %v2098, %v1822
    %v2336 = vmul.f32 %v2098, %v1823
    %v2337 = vmul.f32 %v2098, %v1824
    %v2338 = vmul.f32 %v2098, %v1825
    %v2339 = vmul.f32 %v2098, %v1826
    %v2340 = vmul.f32 %v2098, %v1827
    %v2341 = vmul.f32 %v2098, %v1828
    %v2342 = vmul.f32 %v2098, %v1829
    %v2343 = vmul.f32 %v2098, %v1830
    %v2344 = vmul.f32 %v2098, %v1831
    %v2345 = vmul.f32 %v2098, %v1832
    %v2346 = vmul.f32 %v2098, %v1833
    %v2347 = vmul.f32 %v2098, %v1834
    %v2348 = vmul.f32 %v2098, %v1835
    %v2349 = vmul.f32 %v2098, %v1836
    %v2350 = vmul.f32 %v2098, %v1837
    %v2351 = vmul.f32 %v2098, %v1838
    %v2352 = vmul.f32 %v2098, %v1839
    %v2353 = vmul.f32 %v2098, %v1840
    %v2354 = vmul.f32 %v2098, %v1841
    %v2355 = vmul.f32 %v2098, %v1842
    %v2356 = vmul.f32 %v2098, %v1843
    %v2357 = vmul.f32 %v2098, %v1844
    %v2358 = vmul.f32 %v2098, %v1845
    %v2359 = vmul.f32 %v2098, %v1846
    %v2360 = vmul.f32 %v2098, %v1847
    %v2361 = vmul.f32 %v2098, %v1848
    %v2362 = vmul.f32 %v2098, %v1849
    %v2363 = vmul.f32 %v2098, %v1850
    %v2364 = vmul.f32 %v2098, %v1851
    %v2365 = vmul.f32 %v2098, %v1852
    %v2366 = vmul.f32 %v2098, %v1853
    %v2367 = vmul.f32 %v2098, %v1854
    %v2368 = vmul.f32 %v2098, %v1855
    %v2369 = vmul.f32 %v2098, %v1856
    %v2370 = vmul.f32 %v2098, %v1857
    %v2371 = vmul.f32 %v2098, %v1858
    %v2372 = vmul.f32 %v2098, %v1859
    %v2373 = vmul.f32 %v2098, %v1860
    %v2374 = vmul.f32 %v2098, %v1861
    %v2375 = vmul.f32 %v2098, %v1862
    %v2376 = vmul.f32 %v2098, %v1863
    %v2377 = vmul.f32 %v2098, %v1864
    %v2378 = vmul.f32 %v2098, %v1865
    %v2379 = vmul.f32 %v2098, %v1866
    %v2380 = vmul.f32 %v2098, %v1867
    %v2381 = vmul.f32 %v2098, %v1868
    %v2382 = vmul.f32 %v2098, %v1869
    %v2383 = vmul.f32 %v2098, %v1870
    %v2384 = vmul.f32 %v2098, %v1871
    %v2385 = vmul.f32 %v2098, %v1872
    %v2386 = vmul.f32 %v2098, %v1873
    %v2387 = vmul.f32 %v2098, %v1874
    %v2388 = vmul.f32 %v2098, %v1875
    %v2389 = vmul.f32 %v2098, %v1876
    %v2390 = vmul.f32 %v2098, %v1877
    %v2391 = vmul.f32 %v2098, %v1878
    %v2392 = vmul.f32 %v2098, %v1879
    %v2393 = vmul.f32 %v2098, %v1880
    %v2394 = vmul.f32 %v2098, %v1881
    %v2395 = vmul.f32 %v2098, %v1882
    %v2396 = vmul.f32 %v2098, %v1883
    %v2397 = vmul.f32 %v2098, %v1884
    %v2398 = vmul.f32 %v2098, %v1885
    %v2399 = vmul.f32 %v2098, %v1886
    %v2400 = vmul.f32 %v2098, %v1887
    %v2401 = vmul.f32 %v2098, %v1888
    %v2402 = vmul.f32 %v2098, %v1889
    %v2403 = vmul.f32 %v2098, %v1890
    %v2404 = vmul.f32 %v2098, %v1891
    %v2405 = vmul.f32 %v2098, %v1892
    %v2406 = vmul.f32 %v2098, %v1893
    %v2407 = vmul.f32 %v2098, %v1894
    %v2408 = vmul.f32 %v2098, %v1895
    %v2409 = vmul.f32 %v2098, %v1896
    %v2410 = vmul.f32 %v2098, %v1897
    %v2411 = vmul.f32 %v2098, %v1898
    %v2412 = vmul.f32 %v2098, %v1899
    %v2413 = vmul.f32 %v2098, %v1900
    %v2414 = vmul.f32 %v2098, %v1901
    %v2415 = vmul.f32 %v2098, %v1902
    %v2416 = vmul.f32 %v2098, %v1903
    %v2417 = vmul.f32 %v2098, %v1904
    %v2418 = vmul.f32 %v2098, %v1905
    %v2419 = vmul.f32 %v2098, %v1906
    %v2420 = vmul.f32 %v2098, %v1907
    %v2421 = vmul.f32 %v2098, %v1908
    %v2422 = vmul.f32 %v2098, %v1909
    %v2423 = vmul.f32 %v2098, %v1910
    %v2424 = vmul.f32 %v2098, %v1911
    %v2425 = vmul.f32 %v2098, %v1912
    %v2426 = vmul.f32 %v2098, %v1913
    %v2427 = vmul.f32 %v2098, %v1914
    %v2428 = vmul.f32 %v2098, %v1915
    %v2429 = vmul.f32 %v2098, %v1916
    %v2430 = vmul.f32 %v2098, %v1917
    %v2431 = vmul.f32 %v2098, %v1918
    %v2432 = vmul.f32 %v2098, %v1919
    %v2433 = vmul.f32 %v2098, %v1920
    %v2434 = vmul.f32 %v2098, %v1921
    %v2435 = vmul.f32 %v2098, %v1922
    %v2436 = vmul.f32 %v2098, %v1923
    %v2437 = vmul.f32 %v2098, %v1924
    %v2438 = vmul.f32 %v2098, %v1925
    %v2439 = vmul.f32 %v2098, %v1926
    %v2440 = vmul.f32 %v2098, %v1927
    %v2441 = vmul.f32 %v2098, %v1928
    %v2442 = vmul.f32 %v2098, %v1929
    %v2443 = vmul.f32 %v2098, %v1930
    %v2444 = vmul.f32 %v2098, %v1931
    %v2445 = vmul.f32 %v2098, %v1932
    %v2446 = vmul.f32 %v2098, %v1933
    %v2447 = vmul.f32 %v2098, %v1934
    %v2448 = vmul.f32 %v2098, %v1935
    %v2449 = vmul.f32 %v2098, %v1936
    %v2450 = vmul.f32 %v2098, %v1937
    %v2451 = vmul.f32 %v2098, %v1938
    %v2452 = vmul.f32 %v2098, %v1939
    %v2453 = vmul.f32 %v2098, %v1940
    %v2454 = vmul.f32 %v2098, %v1941
    %v2455 = vmul.f32 %v2098, %v1942
    %v2456 = vmul.f32 %v2098, %v1943
    %v2457 = vmul.f32 %v2098, %v1944
    %v2458 = vmul.f32 %v2098, %v1945
    %v2459 = vmul.f32 %v2098, %v1946
    %v2460 = vmul.f32 %v2098, %v1947
    %v2461 = vmul.f32 %v2098, %v1948
    %v2462 = vmul.f32 %v2098, %v1949
    %v2463 = vmul.f32 %v2098, %v1950
    %v2464 = vmul.f32 %v2098, %v1951
    %v2465 = vmul.f32 %v2098, %v1952
    %v2466 = vmul.f32 %v2098, %v1953
    %v2467 = vmul.f32 %v2098, %v1954
    %v2468 = vmul.f32 %v2098, %v1955
    %v2469 = vmul.f32 %v2098, %v1956
    %v2470 = vmul.f32 %v2098, %v1957
    %v2471 = vmul.f32 %v2098, %v1958
    %v2472 = vmul.f32 %v2098, %v1959
    %v2473 = vmul.f32 %v2098, %v1960
    %v2474 = vmul.f32 %v2098, %v1961
    %v2475 = vmul.f32 %v2098, %v1962
    %v2476 = vmul.f32 %v2098, %v1963
    %v2477 = vmul.f32 %v2098, %v1964
    %v2478 = vmul.f32 %v2098, %v1965
    %v2479 = vmul.f32 %v2098, %v1966
    %v2480 = vmul.f32 %v2098, %v1967
    %v2481 = vmul.f32 %v2098, %v1968
    %v2482 = vmul.f32 %v2098, %v1969
    %v2483 = vmul.f32 %v2098, %v1970
    %v2484 = vmul.f32 %v2098, %v1971
    %v2485 = vmul.f32 %v2098, %v1972
    %v2486 = vmul.f32 %v2098, %v1973
    %v2487 = vmul.f32 %v2098, %v1974
    %v2488 = vmul.f32 %v2098, %v1975
    %v2489 = vmul.f32 %v2098, %v1976
    %v2490 = vmul.f32 %v2098, %v1977
    %v2491 = vmul.f32 %v2098, %v1978
    %v2492 = vmul.f32 %v2098, %v1979
    %v2493 = vmul.f32 %v2098, %v1980
    %v2494 = vmul.f32 %v2098, %v1981
    %v2495 = vmul.f32 %v2098, %v1982
    %v2496 = vmul.f32 %v2098, %v1983
    %v2497 = vmul.f32 %v2098, %v1984
    %v2498 = vmul.f32 %v2098, %v1985
    %v2499 = vmul.f32 %v2098, %v1986
    %v2500 = vmul.f32 %v2098, %v1987
    %v2501 = vmul.f32 %v2098, %v1988
    %v2502 = vmul.f32 %v2098, %v1989
    %v2503 = vmul.f32 %v2098, %v1990
    %v2504 = vmul.f32 %v2098, %v1991
    %v2505 = vmul.f32 %v2098, %v1992
    %v2506 = vmul.f32 %v2098, %v1993
    %v2507 = vmul.f32 %v2098, %v1994
    %v2508 = vmul.f32 %v2098, %v1995
    %v2509 = vmul.f32 %v2098, %v1996
    %v2510 = vmul.f32 %v2098, %v1997
    %v2511 = vmul.f32 %v2098, %v1998
    %v2512 = vmul.f32 %v2098, %v1999
    %v2513 = vmul.f32 %v2098, %v2000
    %v2514 = vmul.f32 %v2098, %v2001
    %v2515 = vmul.f32 %v2098, %v2002
    %v2516 = vmul.f32 %v2098, %v2003
    %v2517 = vmul.f32 %v2098, %v2004
    %v2518 = vmul.f32 %v2098, %v2005
    %v2519 = vmul.f32 %v2098, %v2006
    %v2520 = vmul.f32 %v2098, %v2007
    %v2521 = vmul.f32 %v2098, %v2008
    %v2522 = vmul.f32 %v2098, %v2009
    %v2523 = vmul.f32 %v2098, %v2010
    %v2524 = vmul.f32 %v2098, %v2011
    %v2525 = vmul.f32 %v2098, %v2012
    %v2526 = vmul.f32 %v2098, %v2013
    %v2527 = vmul.f32 %v2098, %v2014
    %v2528 = vmul.f32 %v2098, %v2015
    %v2529 = vmul.f32 %v2098, %v2016
    %v2530 = vmul.f32 %v2098, %v2017
    %v2531 = vmul.f32 %v2098, %v2018
    %v2532 = vmul.f32 %v2098, %v2019
    %v2533 = vmul.f32 %v2098, %v2020
    %v2534 = vmul.f32 %v2098, %v2021
    %v2535 = vmul.f32 %v2098, %v2022
    %v2536 = vmul.f32 %v2098, %v2023
    %v2537 = vmul.f32 %v2098, %v2024
    %v2538 = vmul.f32 %v2098, %v2025
    %v2539 = vmul.f32 %v2098, %v2026
    %v2540 = vmul.f32 %v2098, %v2027
    %v2541 = vmul.f32 %v2098, %v2028
    %v2542 = vmul.f32 %v2098, %v2029
    %v2543 = vmul.f32 %v2098, %v2030
    %v2544 = vmul.f32 %v2098, %v2031
    %v2545 = vmul.f32 %v2098, %v2032
    %v2546 = vmul.f32 %v2098, %v2033
    %v2547 = vmul.f32 %v2098, %v2034
    %v2548 = vmul.f32 %v2098, %v2035
    %v2549 = vmul.f32 %v2098, %v2036
    %v2550 = vmul.f32 %v2098, %v2037
    %v2551 = vmul.f32 %v2098, %v2038
    %v2552 = vmul.f32 %v2098, %v2039
    %v2553 = vmul.f32 %v2098, %v2040
    %v2554 = vmul.f32 %v2098, %v2041
    %v2555 = vmul.f32 %v2098, %v2042
    %v2556 = vmul.f32 %v2098, %v2043
    %v2557 = vmul.f32 %v2098, %v2044
    %v2558 = vmul.f32 %v2098, %v2045
    %v2559 = vmul.f32 %v2098, %v2046
    %v2560 = vmul.f32 %v2098, %v2047
    %v2561 = vmul.f32 %v2098, %v2048
    %v2562 = vmul.f32 %v2098, %v2049
    %v2563 = vmul.f32 %v2098, %v2050
    %v2564 = vmul.f32 %v2098, %v2051
    %v2565 = vmul.f32 %v2098, %v2052
    %v2566 = vmul.f32 %v2098, %v2053
    %v2567 = vmul.f32 %v2098, %v2054
    %v2568 = vmul.f32 %v2098, %v2055
    %v2569 = vmul.f32 %v2098, %v2056
    %v2570 = vmul.f32 %v2098, %v2057
    %v2571 = vmul.f32 %v2098, %v2058
    %v2572 = vmul.f32 %v2098, %v2059
    %v2573 = vmul.f32 %v2098, %v2060
    %v2574 = vmul.f32 %v2098, %v2061
    %v2575 = vmul.f32 %v2098, %v2062
    %v2576 = vmul.f32 %v2098, %v2063
    %v2577 = vmul.f32 %v2098, %v2064
    %v2578 = vmul.f32 %v2098, %v2065
    %v2579 = vmul.f32 %v2098, %v2066
    %v2580 = vmul.f32 %v2098, %v2067
    %v2581 = vmul.f32 %v2098, %v2068
    %v2582 = vmul.f32 %v2098, %v2069
    %v2583 = vmul.f32 %v2098, %v2070
    %v2584 = vmul.f32 %v2098, %v2071
    %v2585 = vmul.f32 %v2098, %v2072
    %v2586 = vmul.f32 %v2098, %v2073
    %v2587 = vmul.f32 %v2098, %v2074
    %v2588 = vmul.f32 %v2098, %v2075
    %v2589 = vmul.f32 %v2098, %v2076
    %v2590 = vmul.f32 %v2098, %v2077
    %v2591 = vmul.f32 %v2098, %v2078
    %v2592 = vmul.f32 %v2098, %v2079
    %v2593 = vmul.f32 %v2098, %v2080
    %v2594 = vmul.f32 %v2098, %v2081
    %v2595 = vmul.f32 %v2098, %v2082
    %v2596 = vmul.f32 %v2098, %v2083
    %v2597 = vmul.f32 %v2098, %v2084
    %v2598 = vmul.f32 %v2098, %v2085
    %v2599 = vmul.f32 %v2098, %v2086
    %v2600 = vmul.f32 %v2098, %v2087
    %v2601 = vmul.f32 %v2098, %v2088
    %v2602 = vmul.f32 %v2098, %v2089
    %v2603 = vmul.f32 %v2098, %v2090
    %v2604 = vmul.f32 %v2098, %v2091
    %v2605 = vmul.f32 %v2098, %v2092
    %v2606 = vmul.f32 %v2098, %v2093
    %v2607 = vmul.f32 %v2098, %v2094
    %v2608 = vmul.f32 %v2098, %v2095
    %v2609 = vmul.f32 %v2098, %v2096
    %v2610 = vmul.f32 %v2098, %v2097
    %v2611 = vstv %s49
    %v2612 = vsub.f32 %v2611, %v562
    %v2613 = vsub.f32 %v2611, %v563
    %v2614 = vsub.f32 %v2611, %v564
    %v2615 = vsub.f32 %v2611, %v565
    %v2616 = vsub.f32 %v2611, %v566
    %v2617 = vsub.f32 %v2611, %v567
    %v2618 = vsub.f32 %v2611, %v568
    %v2619 = vsub.f32 %v2611, %v569
    %v2620 = vsub.f32 %v2611, %v570
    %v2621 = vsub.f32 %v2611, %v571
    %v2622 = vsub.f32 %v2611, %v572
    %v2623 = vsub.f32 %v2611, %v573
    %v2624 = vsub.f32 %v2611, %v574
    %v2625 = vsub.f32 %v2611, %v575
    %v2626 = vsub.f32 %v2611, %v576
    %v2627 = vsub.f32 %v2611, %v577
    %v2628 = vsub.f32 %v2611, %v578
    %v2629 = vsub.f32 %v2611, %v579
    %v2630 = vsub.f32 %v2611, %v580
    %v2631 = vsub.f32 %v2611, %v581
    %v2632 = vsub.f32 %v2611, %v582
    %v2633 = vsub.f32 %v2611, %v583
    %v2634 = vsub.f32 %v2611, %v584
    %v2635 = vsub.f32 %v2611, %v585
    %v2636 = vsub.f32 %v2611, %v586
    %v2637 = vsub.f32 %v2611, %v587
    %v2638 = vsub.f32 %v2611, %v588
    %v2639 = vsub.f32 %v2611, %v589
    %v2640 = vsub.f32 %v2611, %v590
    %v2641 = vsub.f32 %v2611, %v591
    %v2642 = vsub.f32 %v2611, %v592
    %v2643 = vsub.f32 %v2611, %v593
    %v2644 = vsub.f32 %v2611, %v594
    %v2645 = vsub.f32 %v2611, %v595
    %v2646 = vsub.f32 %v2611, %v596
    %v2647 = vsub.f32 %v2611, %v597
    %v2648 = vsub.f32 %v2611, %v598
    %v2649 = vsub.f32 %v2611, %v599
    %v2650 = vsub.f32 %v2611, %v600
    %v2651 = vsub.f32 %v2611, %v601
    %v2652 = vsub.f32 %v2611, %v602
    %v2653 = vsub.f32 %v2611, %v603
    %v2654 = vsub.f32 %v2611, %v604
    %v2655 = vsub.f32 %v2611, %v605
    %v2656 = vsub.f32 %v2611, %v606
    %v2657 = vsub.f32 %v2611, %v607
    %v2658 = vsub.f32 %v2611, %v608
    %v2659 = vsub.f32 %v2611, %v609
    %v2660 = vsub.f32 %v2611, %v610
    %v2661 = vsub.f32 %v2611, %v611
    %v2662 = vsub.f32 %v2611, %v612
    %v2663 = vsub.f32 %v2611, %v613
    %v2664 = vsub.f32 %v2611, %v614
    %v2665 = vsub.f32 %v2611, %v615
    %v2666 = vsub.f32 %v2611, %v616
    %v2667 = vsub.f32 %v2611, %v617
    %v2668 = vsub.f32 %v2611, %v618
    %v2669 = vsub.f32 %v2611, %v619
    %v2670 = vsub.f32 %v2611, %v620
    %v2671 = vsub.f32 %v2611, %v621
    %v2672 = vsub.f32 %v2611, %v622
    %v2673 = vsub.f32 %v2611, %v623
    %v2674 = vsub.f32 %v2611, %v624
    %v2675 = vsub.f32 %v2611, %v625
    %v2676 = vsub.f32 %v2611, %v626
    %v2677 = vsub.f32 %v2611, %v627
    %v2678 = vsub.f32 %v2611, %v628
    %v2679 = vsub.f32 %v2611, %v629
    %v2680 = vsub.f32 %v2611, %v630
    %v2681 = vsub.f32 %v2611, %v631
    %v2682 = vsub.f32 %v2611, %v632
    %v2683 = vsub.f32 %v2611, %v633
    %v2684 = vsub.f32 %v2611, %v634
    %v2685 = vsub.f32 %v2611, %v635
    %v2686 = vsub.f32 %v2611, %v636
    %v2687 = vsub.f32 %v2611, %v637
    %v2688 = vsub.f32 %v2611, %v638
    %v2689 = vsub.f32 %v2611, %v639
    %v2690 = vsub.f32 %v2611, %v640
    %v2691 = vsub.f32 %v2611, %v641
    %v2692 = vsub.f32 %v2611, %v642
    %v2693 = vsub.f32 %v2611, %v643
    %v2694 = vsub.f32 %v2611, %v644
    %v2695 = vsub.f32 %v2611, %v645
    %v2696 = vsub.f32 %v2611, %v646
    %v2697 = vsub.f32 %v2611, %v647
    %v2698 = vsub.f32 %v2611, %v648
    %v2699 = vsub.f32 %v2611, %v649
    %v2700 = vsub.f32 %v2611, %v650
    %v2701 = vsub.f32 %v2611, %v651
    %v2702 = vsub.f32 %v2611, %v652
    %v2703 = vsub.f32 %v2611, %v653
    %v2704 = vsub.f32 %v2611, %v654
    %v2705 = vsub.f32 %v2611, %v655
    %v2706 = vsub.f32 %v2611, %v656
    %v2707 = vsub.f32 %v2611, %v657
    %v2708 = vsub.f32 %v2611, %v658
    %v2709 = vsub.f32 %v2611, %v659
    %v2710 = vsub.f32 %v2611, %v660
    %v2711 = vsub.f32 %v2611, %v661
    %v2712 = vsub.f32 %v2611, %v662
    %v2713 = vsub.f32 %v2611, %v663
    %v2714 = vsub.f32 %v2611, %v664
    %v2715 = vsub.f32 %v2611, %v665
    %v2716 = vsub.f32 %v2611, %v666
    %v2717 = vsub.f32 %v2611, %v667
    %v2718 = vsub.f32 %v2611, %v668
    %v2719 = vsub.f32 %v2611, %v669
    %v2720 = vsub.f32 %v2611, %v670
    %v2721 = vsub.f32 %v2611, %v671
    %v2722 = vsub.f32 %v2611, %v672
    %v2723 = vsub.f32 %v2611, %v673
    %v2724 = vsub.f32 %v2611, %v674
    %v2725 = vsub.f32 %v2611, %v675
    %v2726 = vsub.f32 %v2611, %v676
    %v2727 = vsub.f32 %v2611, %v677
    %v2728 = vsub.f32 %v2611, %v678
    %v2729 = vsub.f32 %v2611, %v679
    %v2730 = vsub.f32 %v2611, %v680
    %v2731 = vsub.f32 %v2611, %v681
    %v2732 = vsub.f32 %v2611, %v682
    %v2733 = vsub.f32 %v2611, %v683
    %v2734 = vsub.f32 %v2611, %v684
    %v2735 = vsub.f32 %v2611, %v685
    %v2736 = vsub.f32 %v2611, %v686
    %v2737 = vsub.f32 %v2611, %v687
    %v2738 = vsub.f32 %v2611, %v688
    %v2739 = vsub.f32 %v2611, %v689
    %v2740 = vsub.f32 %v2611, %v690
    %v2741 = vsub.f32 %v2611, %v691
    %v2742 = vsub.f32 %v2611, %v692
    %v2743 = vsub.f32 %v2611, %v693
    %v2744 = vsub.f32 %v2611, %v694
    %v2745 = vsub.f32 %v2611, %v695
    %v2746 = vsub.f32 %v2611, %v696
    %v2747 = vsub.f32 %v2611, %v697
    %v2748 = vsub.f32 %v2611, %v698
    %v2749 = vsub.f32 %v2611, %v699
    %v2750 = vsub.f32 %v2611, %v700
    %v2751 = vsub.f32 %v2611, %v701
    %v2752 = vsub.f32 %v2611, %v702
    %v2753 = vsub.f32 %v2611, %v703
    %v2754 = vsub.f32 %v2611, %v704
    %v2755 = vsub.f32 %v2611, %v705
    %v2756 = vsub.f32 %v2611, %v706
    %v2757 = vsub.f32 %v2611, %v707
    %v2758 = vsub.f32 %v2611, %v708
    %v2759 = vsub.f32 %v2611, %v709
    %v2760 = vsub.f32 %v2611, %v710
    %v2761 = vsub.f32 %v2611, %v711
    %v2762 = vsub.f32 %v2611, %v712
    %v2763 = vsub.f32 %v2611, %v713
    %v2764 = vsub.f32 %v2611, %v714
    %v2765 = vsub.f32 %v2611, %v715
    %v2766 = vsub.f32 %v2611, %v716
    %v2767 = vsub.f32 %v2611, %v717
    %v2768 = vsub.f32 %v2611, %v718
    %v2769 = vsub.f32 %v2611, %v719
    %v2770 = vsub.f32 %v2611, %v720
    %v2771 = vsub.f32 %v2611, %v721
    %v2772 = vsub.f32 %v2611, %v722
    %v2773 = vsub.f32 %v2611, %v723
    %v2774 = vsub.f32 %v2611, %v724
    %v2775 = vsub.f32 %v2611, %v725
    %v2776 = vsub.f32 %v2611, %v726
    %v2777 = vsub.f32 %v2611, %v727
    %v2778 = vsub.f32 %v2611, %v728
    %v2779 = vsub.f32 %v2611, %v729
    %v2780 = vsub.f32 %v2611, %v730
    %v2781 = vsub.f32 %v2611, %v731
    %v2782 = vsub.f32 %v2611, %v732
    %v2783 = vsub.f32 %v2611, %v733
    %v2784 = vsub.f32 %v2611, %v734
    %v2785 = vsub.f32 %v2611, %v735
    %v2786 = vsub.f32 %v2611, %v736
    %v2787 = vsub.f32 %v2611, %v737
    %v2788 = vsub.f32 %v2611, %v738
    %v2789 = vsub.f32 %v2611, %v739
    %v2790 = vsub.f32 %v2611, %v740
    %v2791 = vsub.f32 %v2611, %v741
    %v2792 = vsub.f32 %v2611, %v742
    %v2793 = vsub.f32 %v2611, %v743
    %v2794 = vsub.f32 %v2611, %v744
    %v2795 = vsub.f32 %v2611, %v745
    %v2796 = vsub.f32 %v2611, %v746
    %v2797 = vsub.f32 %v2611, %v747
    %v2798 = vsub.f32 %v2611, %v748
    %v2799 = vsub.f32 %v2611, %v749
    %v2800 = vsub.f32 %v2611, %v750
    %v2801 = vsub.f32 %v2611, %v751
    %v2802 = vsub.f32 %v2611, %v752
    %v2803 = vsub.f32 %v2611, %v753
    %v2804 = vsub.f32 %v2611, %v754
    %v2805 = vsub.f32 %v2611, %v755
    %v2806 = vsub.f32 %v2611, %v756
    %v2807 = vsub.f32 %v2611, %v757
    %v2808 = vsub.f32 %v2611, %v758
    %v2809 = vsub.f32 %v2611, %v759
    %v2810 = vsub.f32 %v2611, %v760
    %v2811 = vsub.f32 %v2611, %v761
    %v2812 = vsub.f32 %v2611, %v762
    %v2813 = vsub.f32 %v2611, %v763
    %v2814 = vsub.f32 %v2611, %v764
    %v2815 = vsub.f32 %v2611, %v765
    %v2816 = vsub.f32 %v2611, %v766
    %v2817 = vsub.f32 %v2611, %v767
    %v2818 = vsub.f32 %v2611, %v768
    %v2819 = vsub.f32 %v2611, %v769
    %v2820 = vsub.f32 %v2611, %v770
    %v2821 = vsub.f32 %v2611, %v771
    %v2822 = vsub.f32 %v2611, %v772
    %v2823 = vsub.f32 %v2611, %v773
    %v2824 = vsub.f32 %v2611, %v774
    %v2825 = vsub.f32 %v2611, %v775
    %v2826 = vsub.f32 %v2611, %v776
    %v2827 = vsub.f32 %v2611, %v777
    %v2828 = vsub.f32 %v2611, %v778
    %v2829 = vsub.f32 %v2611, %v779
    %v2830 = vsub.f32 %v2611, %v780
    %v2831 = vsub.f32 %v2611, %v781
    %v2832 = vsub.f32 %v2611, %v782
    %v2833 = vsub.f32 %v2611, %v783
    %v2834 = vsub.f32 %v2611, %v784
    %v2835 = vsub.f32 %v2611, %v785
    %v2836 = vsub.f32 %v2611, %v786
    %v2837 = vsub.f32 %v2611, %v787
    %v2838 = vsub.f32 %v2611, %v788
    %v2839 = vsub.f32 %v2611, %v789
    %v2840 = vsub.f32 %v2611, %v790
    %v2841 = vsub.f32 %v2611, %v791
    %v2842 = vsub.f32 %v2611, %v792
    %v2843 = vsub.f32 %v2611, %v793
    %v2844 = vsub.f32 %v2611, %v794
    %v2845 = vsub.f32 %v2611, %v795
    %v2846 = vsub.f32 %v2611, %v796
    %v2847 = vsub.f32 %v2611, %v797
    %v2848 = vsub.f32 %v2611, %v798
    %v2849 = vsub.f32 %v2611, %v799
    %v2850 = vsub.f32 %v2611, %v800
    %v2851 = vsub.f32 %v2611, %v801
    %v2852 = vsub.f32 %v2611, %v802
    %v2853 = vsub.f32 %v2611, %v803
    %v2854 = vsub.f32 %v2611, %v804
    %v2855 = vsub.f32 %v2611, %v805
    %v2856 = vsub.f32 %v2611, %v806
    %v2857 = vsub.f32 %v2611, %v807
    %v2858 = vsub.f32 %v2611, %v808
    %v2859 = vsub.f32 %v2611, %v809
    %v2860 = vsub.f32 %v2611, %v810
    %v2861 = vsub.f32 %v2611, %v811
    %v2862 = vsub.f32 %v2611, %v812
    %v2863 = vsub.f32 %v2611, %v813
    %v2864 = vsub.f32 %v2611, %v814
    %v2865 = vsub.f32 %v2611, %v815
    %v2866 = vsub.f32 %v2611, %v816
    %v2867 = vsub.f32 %v2611, %v817
    %v2868 = vsub.f32 %v2611, %v818
    %v2869 = vsub.f32 %v2611, %v819
    %v2870 = vsub.f32 %v2611, %v820
    %v2871 = vsub.f32 %v2611, %v821
    %v2872 = vsub.f32 %v2611, %v822
    %v2873 = vsub.f32 %v2611, %v823
    %v2874 = vsub.f32 %v2611, %v824
    %v2875 = vsub.f32 %v2611, %v825
    %v2876 = vsub.f32 %v2611, %v826
    %v2877 = vsub.f32 %v2611, %v827
    %v2878 = vsub.f32 %v2611, %v828
    %v2879 = vsub.f32 %v2611, %v829
    %v2880 = vsub.f32 %v2611, %v830
    %v2881 = vsub.f32 %v2611, %v831
    %v2882 = vsub.f32 %v2611, %v832
    %v2883 = vsub.f32 %v2611, %v833
    %v2884 = vsub.f32 %v2611, %v834
    %v2885 = vsub.f32 %v2611, %v835
    %v2886 = vsub.f32 %v2611, %v836
    %v2887 = vsub.f32 %v2611, %v837
    %v2888 = vsub.f32 %v2611, %v838
    %v2889 = vsub.f32 %v2611, %v839
    %v2890 = vsub.f32 %v2611, %v840
    %v2891 = vsub.f32 %v2611, %v841
    %v2892 = vsub.f32 %v2611, %v842
    %v2893 = vsub.f32 %v2611, %v843
    %v2894 = vsub.f32 %v2611, %v844
    %v2895 = vsub.f32 %v2611, %v845
    %v2896 = vsub.f32 %v2611, %v846
    %v2897 = vsub.f32 %v2611, %v847
    %v2898 = vsub.f32 %v2611, %v848
    %v2899 = vsub.f32 %v2611, %v849
    %v2900 = vsub.f32 %v2611, %v850
    %v2901 = vsub.f32 %v2611, %v851
    %v2902 = vsub.f32 %v2611, %v852
    %v2903 = vsub.f32 %v2611, %v853
    %v2904 = vsub.f32 %v2611, %v854
    %v2905 = vsub.f32 %v2611, %v855
    %v2906 = vsub.f32 %v2611, %v856
    %v2907 = vsub.f32 %v2611, %v857
    %v2908 = vsub.f32 %v2611, %v858
    %v2909 = vsub.f32 %v2611, %v859
    %v2910 = vsub.f32 %v2611, %v860
    %v2911 = vsub.f32 %v2611, %v861
    %v2912 = vsub.f32 %v2611, %v862
    %v2913 = vsub.f32 %v2611, %v863
    %v2914 = vsub.f32 %v2611, %v864
    %v2915 = vsub.f32 %v2611, %v865
    %v2916 = vsub.f32 %v2611, %v866
    %v2917 = vsub.f32 %v2611, %v867
    %v2918 = vsub.f32 %v2611, %v868
    %v2919 = vsub.f32 %v2611, %v869
    %v2920 = vsub.f32 %v2611, %v870
    %v2921 = vsub.f32 %v2611, %v871
    %v2922 = vsub.f32 %v2611, %v872
    %v2923 = vsub.f32 %v2611, %v873
    %v2924 = vsub.f32 %v2611, %v874
    %v2925 = vsub.f32 %v2611, %v875
    %v2926 = vsub.f32 %v2611, %v876
    %v2927 = vsub.f32 %v2611, %v877
    %v2928 = vsub.f32 %v2611, %v878
    %v2929 = vsub.f32 %v2611, %v879
    %v2930 = vsub.f32 %v2611, %v880
    %v2931 = vsub.f32 %v2611, %v881
    %v2932 = vsub.f32 %v2611, %v882
    %v2933 = vsub.f32 %v2611, %v883
    %v2934 = vsub.f32 %v2611, %v884
    %v2935 = vsub.f32 %v2611, %v885
    %v2936 = vsub.f32 %v2611, %v886
    %v2937 = vsub.f32 %v2611, %v887
    %v2938 = vsub.f32 %v2611, %v888
    %v2939 = vsub.f32 %v2611, %v889
    %v2940 = vsub.f32 %v2611, %v890
    %v2941 = vsub.f32 %v2611, %v891
    %v2942 = vsub.f32 %v2611, %v892
    %v2943 = vsub.f32 %v2611, %v893
    %v2944 = vsub.f32 %v2611, %v894
    %v2945 = vsub.f32 %v2611, %v895
    %v2946 = vsub.f32 %v2611, %v896
    %v2947 = vsub.f32 %v2611, %v897
    %v2948 = vsub.f32 %v2611, %v898
    %v2949 = vsub.f32 %v2611, %v899
    %v2950 = vsub.f32 %v2611, %v900
    %v2951 = vsub.f32 %v2611, %v901
    %v2952 = vsub.f32 %v2611, %v902
    %v2953 = vsub.f32 %v2611, %v903
    %v2954 = vsub.f32 %v2611, %v904
    %v2955 = vsub.f32 %v2611, %v905
    %v2956 = vsub.f32 %v2611, %v906
    %v2957 = vsub.f32 %v2611, %v907
    %v2958 = vsub.f32 %v2611, %v908
    %v2959 = vsub.f32 %v2611, %v909
    %v2960 = vsub.f32 %v2611, %v910
    %v2961 = vsub.f32 %v2611, %v911
    %v2962 = vsub.f32 %v2611, %v912
    %v2963 = vsub.f32 %v2611, %v913
    %v2964 = vsub.f32 %v2611, %v914
    %v2965 = vsub.f32 %v2611, %v915
    %v2966 = vsub.f32 %v2611, %v916
    %v2967 = vsub.f32 %v2611, %v917
    %v2968 = vsub.f32 %v2611, %v918
    %v2969 = vsub.f32 %v2611, %v919
    %v2970 = vsub.f32 %v2611, %v920
    %v2971 = vsub.f32 %v2611, %v921
    %v2972 = vsub.f32 %v2611, %v922
    %v2973 = vsub.f32 %v2611, %v923
    %v2974 = vsub.f32 %v2611, %v924
    %v2975 = vsub.f32 %v2611, %v925
    %v2976 = vsub.f32 %v2611, %v926
    %v2977 = vsub.f32 %v2611, %v927
    %v2978 = vsub.f32 %v2611, %v928
    %v2979 = vsub.f32 %v2611, %v929
    %v2980 = vsub.f32 %v2611, %v930
    %v2981 = vsub.f32 %v2611, %v931
    %v2982 = vsub.f32 %v2611, %v932
    %v2983 = vsub.f32 %v2611, %v933
    %v2984 = vsub.f32 %v2611, %v934
    %v2985 = vsub.f32 %v2611, %v935
    %v2986 = vsub.f32 %v2611, %v936
    %v2987 = vsub.f32 %v2611, %v937
    %v2988 = vsub.f32 %v2611, %v938
    %v2989 = vsub.f32 %v2611, %v939
    %v2990 = vsub.f32 %v2611, %v940
    %v2991 = vsub.f32 %v2611, %v941
    %v2992 = vsub.f32 %v2611, %v942
    %v2993 = vsub.f32 %v2611, %v943
    %v2994 = vsub.f32 %v2611, %v944
    %v2995 = vsub.f32 %v2611, %v945
    %v2996 = vsub.f32 %v2611, %v946
    %v2997 = vsub.f32 %v2611, %v947
    %v2998 = vsub.f32 %v2611, %v948
    %v2999 = vsub.f32 %v2611, %v949
    %v3000 = vsub.f32 %v2611, %v950
    %v3001 = vsub.f32 %v2611, %v951
    %v3002 = vsub.f32 %v2611, %v952
    %v3003 = vsub.f32 %v2611, %v953
    %v3004 = vsub.f32 %v2611, %v954
    %v3005 = vsub.f32 %v2611, %v955
    %v3006 = vsub.f32 %v2611, %v956
    %v3007 = vsub.f32 %v2611, %v957
    %v3008 = vsub.f32 %v2611, %v958
    %v3009 = vsub.f32 %v2611, %v959
    %v3010 = vsub.f32 %v2611, %v960
    %v3011 = vsub.f32 %v2611, %v961
    %v3012 = vsub.f32 %v2611, %v962
    %v3013 = vsub.f32 %v2611, %v963
    %v3014 = vsub.f32 %v2611, %v964
    %v3015 = vsub.f32 %v2611, %v965
    %v3016 = vsub.f32 %v2611, %v966
    %v3017 = vsub.f32 %v2611, %v967
    %v3018 = vsub.f32 %v2611, %v968
    %v3019 = vsub.f32 %v2611, %v969
    %v3020 = vsub.f32 %v2611, %v970
    %v3021 = vsub.f32 %v2611, %v971
    %v3022 = vsub.f32 %v2611, %v972
    %v3023 = vsub.f32 %v2611, %v973
    %v3024 = vsub.f32 %v2611, %v974
    %v3025 = vsub.f32 %v2611, %v975
    %v3026 = vsub.f32 %v2611, %v976
    %v3027 = vsub.f32 %v2611, %v977
    %v3028 = vsub.f32 %v2611, %v978
    %v3029 = vsub.f32 %v2611, %v979
    %v3030 = vsub.f32 %v2611, %v980
    %v3031 = vsub.f32 %v2611, %v981
    %v3032 = vsub.f32 %v2611, %v982
    %v3033 = vsub.f32 %v2611, %v983
    %v3034 = vsub.f32 %v2611, %v984
    %v3035 = vsub.f32 %v2611, %v985
    %v3036 = vsub.f32 %v2611, %v986
    %v3037 = vsub.f32 %v2611, %v987
    %v3038 = vsub.f32 %v2611, %v988
    %v3039 = vsub.f32 %v2611, %v989
    %v3040 = vsub.f32 %v2611, %v990
    %v3041 = vsub.f32 %v2611, %v991
    %v3042 = vsub.f32 %v2611, %v992
    %v3043 = vsub.f32 %v2611, %v993
    %v3044 = vsub.f32 %v2611, %v994
    %v3045 = vsub.f32 %v2611, %v995
    %v3046 = vsub.f32 %v2611, %v996
    %v3047 = vsub.f32 %v2611, %v997
    %v3048 = vsub.f32 %v2611, %v998
    %v3049 = vsub.f32 %v2611, %v999
    %v3050 = vsub.f32 %v2611, %v1000
    %v3051 = vsub.f32 %v2611, %v1001
    %v3052 = vsub.f32 %v2611, %v1002
    %v3053 = vsub.f32 %v2611, %v1003
    %v3054 = vsub.f32 %v2611, %v1004
    %v3055 = vsub.f32 %v2611, %v1005
    %v3056 = vsub.f32 %v2611, %v1006
    %v3057 = vsub.f32 %v2611, %v1007
    %v3058 = vsub.f32 %v2611, %v1008
    %v3059 = vsub.f32 %v2611, %v1009
    %v3060 = vsub.f32 %v2611, %v1010
    %v3061 = vsub.f32 %v2611, %v1011
    %v3062 = vsub.f32 %v2611, %v1012
    %v3063 = vsub.f32 %v2611, %v1013
    %v3064 = vsub.f32 %v2611, %v1014
    %v3065 = vsub.f32 %v2611, %v1015
    %v3066 = vsub.f32 %v2611, %v1016
    %v3067 = vsub.f32 %v2611, %v1017
    %v3068 = vsub.f32 %v2611, %v1018
    %v3069 = vsub.f32 %v2611, %v1019
    %v3070 = vsub.f32 %v2611, %v1020
    %v3071 = vsub.f32 %v2611, %v1021
    %v3072 = vsub.f32 %v2611, %v1022
    %v3073 = vsub.f32 %v2611, %v1023
    %v3074 = vsub.f32 %v2611, %v1024
    %v3075 = vsub.f32 %v2611, %v1025
    %v3076 = vsub.f32 %v2611, %v1026
    %v3077 = vsub.f32 %v2611, %v1027
    %v3078 = vsub.f32 %v2611, %v1028
    %v3079 = vsub.f32 %v2611, %v1029
    %v3080 = vsub.f32 %v2611, %v1030
    %v3081 = vsub.f32 %v2611, %v1031
    %v3082 = vsub.f32 %v2611, %v1032
    %v3083 = vsub.f32 %v2611, %v1033
    %v3084 = vsub.f32 %v2611, %v1034
    %v3085 = vsub.f32 %v2611, %v1035
    %v3086 = vsub.f32 %v2611, %v1036
    %v3087 = vsub.f32 %v2611, %v1037
    %v3088 = vsub.f32 %v2611, %v1038
    %v3089 = vsub.f32 %v2611, %v1039
    %v3090 = vsub.f32 %v2611, %v1040
    %v3091 = vsub.f32 %v2611, %v1041
    %v3092 = vsub.f32 %v2611, %v1042
    %v3093 = vsub.f32 %v2611, %v1043
    %v3094 = vsub.f32 %v2611, %v1044
    %v3095 = vsub.f32 %v2611, %v1045
    %v3096 = vsub.f32 %v2611, %v1046
    %v3097 = vsub.f32 %v2611, %v1047
    %v3098 = vsub.f32 %v2611, %v1048
    %v3099 = vsub.f32 %v2611, %v1049
    %v3100 = vsub.f32 %v2611, %v1050
    %v3101 = vsub.f32 %v2611, %v1051
    %v3102 = vsub.f32 %v2611, %v1052
    %v3103 = vsub.f32 %v2611, %v1053
    %v3104 = vsub.f32 %v2611, %v1054
    %v3105 = vsub.f32 %v2611, %v1055
    %v3106 = vsub.f32 %v2611, %v1056
    %v3107 = vsub.f32 %v2611, %v1057
    %v3108 = vsub.f32 %v2611, %v1058
    %v3109 = vsub.f32 %v2611, %v1059
    %v3110 = vsub.f32 %v2611, %v1060
    %v3111 = vsub.f32 %v2611, %v1061
    %v3112 = vsub.f32 %v2611, %v1062
    %v3113 = vsub.f32 %v2611, %v1063
    %v3114 = vsub.f32 %v2611, %v1064
    %v3115 = vsub.f32 %v2611, %v1065
    %v3116 = vsub.f32 %v2611, %v1066
    %v3117 = vsub.f32 %v2611, %v1067
    %v3118 = vsub.f32 %v2611, %v1068
    %v3119 = vsub.f32 %v2611, %v1069
    %v3120 = vsub.f32 %v2611, %v1070
    %v3121 = vsub.f32 %v2611, %v1071
    %v3122 = vsub.f32 %v2611, %v1072
    %v3123 = vsub.f32 %v2611, %v1073
    %v3124 = vmul.f32 %v2099, %v2612
    %v3125 = vmul.f32 %v2100, %v2613
    %v3126 = vmul.f32 %v2101, %v2614
    %v3127 = vmul.f32 %v2102, %v2615
    %v3128 = vmul.f32 %v2103, %v2616
    %v3129 = vmul.f32 %v2104, %v2617
    %v3130 = vmul.f32 %v2105, %v2618
    %v3131 = vmul.f32 %v2106, %v2619
    %v3132 = vmul.f32 %v2107, %v2620
    %v3133 = vmul.f32 %v2108, %v2621
    %v3134 = vmul.f32 %v2109, %v2622
    %v3135 = vmul.f32 %v2110, %v2623
    %v3136 = vmul.f32 %v2111, %v2624
    %v3137 = vmul.f32 %v2112, %v2625
    %v3138 = vmul.f32 %v2113, %v2626
    %v3139 = vmul.f32 %v2114, %v2627
    %v3140 = vmul.f32 %v2115, %v2628
    %v3141 = vmul.f32 %v2116, %v2629
    %v3142 = vmul.f32 %v2117, %v2630
    %v3143 = vmul.f32 %v2118, %v2631
    %v3144 = vmul.f32 %v2119, %v2632
    %v3145 = vmul.f32 %v2120, %v2633
    %v3146 = vmul.f32 %v2121, %v2634
    %v3147 = vmul.f32 %v2122, %v2635
    %v3148 = vmul.f32 %v2123, %v2636
    %v3149 = vmul.f32 %v2124, %v2637
    %v3150 = vmul.f32 %v2125, %v2638
    %v3151 = vmul.f32 %v2126, %v2639
    %v3152 = vmul.f32 %v2127, %v2640
    %v3153 = vmul.f32 %v2128, %v2641
    %v3154 = vmul.f32 %v2129, %v2642
    %v3155 = vmul.f32 %v2130, %v2643
    %v3156 = vmul.f32 %v2131, %v2644
    %v3157 = vmul.f32 %v2132, %v2645
    %v3158 = vmul.f32 %v2133, %v2646
    %v3159 = vmul.f32 %v2134, %v2647
    %v3160 = vmul.f32 %v2135, %v2648
    %v3161 = vmul.f32 %v2136, %v2649
    %v3162 = vmul.f32 %v2137, %v2650
    %v3163 = vmul.f32 %v2138, %v2651
    %v3164 = vmul.f32 %v2139, %v2652
    %v3165 = vmul.f32 %v2140, %v2653
    %v3166 = vmul.f32 %v2141, %v2654
    %v3167 = vmul.f32 %v2142, %v2655
    %v3168 = vmul.f32 %v2143, %v2656
    %v3169 = vmul.f32 %v2144, %v2657
    %v3170 = vmul.f32 %v2145, %v2658
    %v3171 = vmul.f32 %v2146, %v2659
    %v3172 = vmul.f32 %v2147, %v2660
    %v3173 = vmul.f32 %v2148, %v2661
    %v3174 = vmul.f32 %v2149, %v2662
    %v3175 = vmul.f32 %v2150, %v2663
    %v3176 = vmul.f32 %v2151, %v2664
    %v3177 = vmul.f32 %v2152, %v2665
    %v3178 = vmul.f32 %v2153, %v2666
    %v3179 = vmul.f32 %v2154, %v2667
    %v3180 = vmul.f32 %v2155, %v2668
    %v3181 = vmul.f32 %v2156, %v2669
    %v3182 = vmul.f32 %v2157, %v2670
    %v3183 = vmul.f32 %v2158, %v2671
    %v3184 = vmul.f32 %v2159, %v2672
    %v3185 = vmul.f32 %v2160, %v2673
    %v3186 = vmul.f32 %v2161, %v2674
    %v3187 = vmul.f32 %v2162, %v2675
    %v3188 = vmul.f32 %v2163, %v2676
    %v3189 = vmul.f32 %v2164, %v2677
    %v3190 = vmul.f32 %v2165, %v2678
    %v3191 = vmul.f32 %v2166, %v2679
    %v3192 = vmul.f32 %v2167, %v2680
    %v3193 = vmul.f32 %v2168, %v2681
    %v3194 = vmul.f32 %v2169, %v2682
    %v3195 = vmul.f32 %v2170, %v2683
    %v3196 = vmul.f32 %v2171, %v2684
    %v3197 = vmul.f32 %v2172, %v2685
    %v3198 = vmul.f32 %v2173, %v2686
    %v3199 = vmul.f32 %v2174, %v2687
    %v3200 = vmul.f32 %v2175, %v2688
    %v3201 = vmul.f32 %v2176, %v2689
    %v3202 = vmul.f32 %v2177, %v2690
    %v3203 = vmul.f32 %v2178, %v2691
    %v3204 = vmul.f32 %v2179, %v2692
    %v3205 = vmul.f32 %v2180, %v2693
    %v3206 = vmul.f32 %v2181, %v2694
    %v3207 = vmul.f32 %v2182, %v2695
    %v3208 = vmul.f32 %v2183, %v2696
    %v3209 = vmul.f32 %v2184, %v2697
    %v3210 = vmul.f32 %v2185, %v2698
    %v3211 = vmul.f32 %v2186, %v2699
    %v3212 = vmul.f32 %v2187, %v2700
    %v3213 = vmul.f32 %v2188, %v2701
    %v3214 = vmul.f32 %v2189, %v2702
    %v3215 = vmul.f32 %v2190, %v2703
    %v3216 = vmul.f32 %v2191, %v2704
    %v3217 = vmul.f32 %v2192, %v2705
    %v3218 = vmul.f32 %v2193, %v2706
    %v3219 = vmul.f32 %v2194, %v2707
    %v3220 = vmul.f32 %v2195, %v2708
    %v3221 = vmul.f32 %v2196, %v2709
    %v3222 = vmul.f32 %v2197, %v2710
    %v3223 = vmul.f32 %v2198, %v2711
    %v3224 = vmul.f32 %v2199, %v2712
    %v3225 = vmul.f32 %v2200, %v2713
    %v3226 = vmul.f32 %v2201, %v2714
    %v3227 = vmul.f32 %v2202, %v2715
    %v3228 = vmul.f32 %v2203, %v2716
    %v3229 = vmul.f32 %v2204, %v2717
    %v3230 = vmul.f32 %v2205, %v2718
    %v3231 = vmul.f32 %v2206, %v2719
    %v3232 = vmul.f32 %v2207, %v2720
    %v3233 = vmul.f32 %v2208, %v2721
    %v3234 = vmul.f32 %v2209, %v2722
    %v3235 = vmul.f32 %v2210, %v2723
    %v3236 = vmul.f32 %v2211, %v2724
    %v3237 = vmul.f32 %v2212, %v2725
    %v3238 = vmul.f32 %v2213, %v2726
    %v3239 = vmul.f32 %v2214, %v2727
    %v3240 = vmul.f32 %v2215, %v2728
    %v3241 = vmul.f32 %v2216, %v2729
    %v3242 = vmul.f32 %v2217, %v2730
    %v3243 = vmul.f32 %v2218, %v2731
    %v3244 = vmul.f32 %v2219, %v2732
    %v3245 = vmul.f32 %v2220, %v2733
    %v3246 = vmul.f32 %v2221, %v2734
    %v3247 = vmul.f32 %v2222, %v2735
    %v3248 = vmul.f32 %v2223, %v2736
    %v3249 = vmul.f32 %v2224, %v2737
    %v3250 = vmul.f32 %v2225, %v2738
    %v3251 = vmul.f32 %v2226, %v2739
    %v3252 = vmul.f32 %v2227, %v2740
    %v3253 = vmul.f32 %v2228, %v2741
    %v3254 = vmul.f32 %v2229, %v2742
    %v3255 = vmul.f32 %v2230, %v2743
    %v3256 = vmul.f32 %v2231, %v2744
    %v3257 = vmul.f32 %v2232, %v2745
    %v3258 = vmul.f32 %v2233, %v2746
    %v3259 = vmul.f32 %v2234, %v2747
    %v3260 = vmul.f32 %v2235, %v2748
    %v3261 = vmul.f32 %v2236, %v2749
    %v3262 = vmul.f32 %v2237, %v2750
    %v3263 = vmul.f32 %v2238, %v2751
    %v3264 = vmul.f32 %v2239, %v2752
    %v3265 = vmul.f32 %v2240, %v2753
    %v3266 = vmul.f32 %v2241, %v2754
    %v3267 = vmul.f32 %v2242, %v2755
    %v3268 = vmul.f32 %v2243, %v2756
    %v3269 = vmul.f32 %v2244, %v2757
    %v3270 = vmul.f32 %v2245, %v2758
    %v3271 = vmul.f32 %v2246, %v2759
    %v3272 = vmul.f32 %v2247, %v2760
    %v3273 = vmul.f32 %v2248, %v2761
    %v3274 = vmul.f32 %v2249, %v2762
    %v3275 = vmul.f32 %v2250, %v2763
    %v3276 = vmul.f32 %v2251, %v2764
    %v3277 = vmul.f32 %v2252, %v2765
    %v3278 = vmul.f32 %v2253, %v2766
    %v3279 = vmul.f32 %v2254, %v2767
    %v3280 = vmul.f32 %v2255, %v2768
    %v3281 = vmul.f32 %v2256, %v2769
    %v3282 = vmul.f32 %v2257, %v2770
    %v3283 = vmul.f32 %v2258, %v2771
    %v3284 = vmul.f32 %v2259, %v2772
    %v3285 = vmul.f32 %v2260, %v2773
    %v3286 = vmul.f32 %v2261, %v2774
    %v3287 = vmul.f32 %v2262, %v2775
    %v3288 = vmul.f32 %v2263, %v2776
    %v3289 = vmul.f32 %v2264, %v2777
    %v3290 = vmul.f32 %v2265, %v2778
    %v3291 = vmul.f32 %v2266, %v2779
    %v3292 = vmul.f32 %v2267, %v2780
    %v3293 = vmul.f32 %v2268, %v2781
    %v3294 = vmul.f32 %v2269, %v2782
    %v3295 = vmul.f32 %v2270, %v2783
    %v3296 = vmul.f32 %v2271, %v2784
    %v3297 = vmul.f32 %v2272, %v2785
    %v3298 = vmul.f32 %v2273, %v2786
    %v3299 = vmul.f32 %v2274, %v2787
    %v3300 = vmul.f32 %v2275, %v2788
    %v3301 = vmul.f32 %v2276, %v2789
    %v3302 = vmul.f32 %v2277, %v2790
    %v3303 = vmul.f32 %v2278, %v2791
    %v3304 = vmul.f32 %v2279, %v2792
    %v3305 = vmul.f32 %v2280, %v2793
    %v3306 = vmul.f32 %v2281, %v2794
    %v3307 = vmul.f32 %v2282, %v2795
    %v3308 = vmul.f32 %v2283, %v2796
    %v3309 = vmul.f32 %v2284, %v2797
    %v3310 = vmul.f32 %v2285, %v2798
    %v3311 = vmul.f32 %v2286, %v2799
    %v3312 = vmul.f32 %v2287, %v2800
    %v3313 = vmul.f32 %v2288, %v2801
    %v3314 = vmul.f32 %v2289, %v2802
    %v3315 = vmul.f32 %v2290, %v2803
    %v3316 = vmul.f32 %v2291, %v2804
    %v3317 = vmul.f32 %v2292, %v2805
    %v3318 = vmul.f32 %v2293, %v2806
    %v3319 = vmul.f32 %v2294, %v2807
    %v3320 = vmul.f32 %v2295, %v2808
    %v3321 = vmul.f32 %v2296, %v2809
    %v3322 = vmul.f32 %v2297, %v2810
    %v3323 = vmul.f32 %v2298, %v2811
    %v3324 = vmul.f32 %v2299, %v2812
    %v3325 = vmul.f32 %v2300, %v2813
    %v3326 = vmul.f32 %v2301, %v2814
    %v3327 = vmul.f32 %v2302, %v2815
    %v3328 = vmul.f32 %v2303, %v2816
    %v3329 = vmul.f32 %v2304, %v2817
    %v3330 = vmul.f32 %v2305, %v2818
    %v3331 = vmul.f32 %v2306, %v2819
    %v3332 = vmul.f32 %v2307, %v2820
    %v3333 = vmul.f32 %v2308, %v2821
    %v3334 = vmul.f32 %v2309, %v2822
    %v3335 = vmul.f32 %v2310, %v2823
    %v3336 = vmul.f32 %v2311, %v2824
    %v3337 = vmul.f32 %v2312, %v2825
    %v3338 = vmul.f32 %v2313, %v2826
    %v3339 = vmul.f32 %v2314, %v2827
    %v3340 = vmul.f32 %v2315, %v2828
    %v3341 = vmul.f32 %v2316, %v2829
    %v3342 = vmul.f32 %v2317, %v2830
    %v3343 = vmul.f32 %v2318, %v2831
    %v3344 = vmul.f32 %v2319, %v2832
    %v3345 = vmul.f32 %v2320, %v2833
    %v3346 = vmul.f32 %v2321, %v2834
    %v3347 = vmul.f32 %v2322, %v2835
    %v3348 = vmul.f32 %v2323, %v2836
    %v3349 = vmul.f32 %v2324, %v2837
    %v3350 = vmul.f32 %v2325, %v2838
    %v3351 = vmul.f32 %v2326, %v2839
    %v3352 = vmul.f32 %v2327, %v2840
    %v3353 = vmul.f32 %v2328, %v2841
    %v3354 = vmul.f32 %v2329, %v2842
    %v3355 = vmul.f32 %v2330, %v2843
    %v3356 = vmul.f32 %v2331, %v2844
    %v3357 = vmul.f32 %v2332, %v2845
    %v3358 = vmul.f32 %v2333, %v2846
    %v3359 = vmul.f32 %v2334, %v2847
    %v3360 = vmul.f32 %v2335, %v2848
    %v3361 = vmul.f32 %v2336, %v2849
    %v3362 = vmul.f32 %v2337, %v2850
    %v3363 = vmul.f32 %v2338, %v2851
    %v3364 = vmul.f32 %v2339, %v2852
    %v3365 = vmul.f32 %v2340, %v2853
    %v3366 = vmul.f32 %v2341, %v2854
    %v3367 = vmul.f32 %v2342, %v2855
    %v3368 = vmul.f32 %v2343, %v2856
    %v3369 = vmul.f32 %v2344, %v2857
    %v3370 = vmul.f32 %v2345, %v2858
    %v3371 = vmul.f32 %v2346, %v2859
    %v3372 = vmul.f32 %v2347, %v2860
    %v3373 = vmul.f32 %v2348, %v2861
    %v3374 = vmul.f32 %v2349, %v2862
    %v3375 = vmul.f32 %v2350, %v2863
    %v3376 = vmul.f32 %v2351, %v2864
    %v3377 = vmul.f32 %v2352, %v2865
    %v3378 = vmul.f32 %v2353, %v2866
    %v3379 = vmul.f32 %v2354, %v2867
    %v3380 = vmul.f32 %v2355, %v2868
    %v3381 = vmul.f32 %v2356, %v2869
    %v3382 = vmul.f32 %v2357, %v2870
    %v3383 = vmul.f32 %v2358, %v2871
    %v3384 = vmul.f32 %v2359, %v2872
    %v3385 = vmul.f32 %v2360, %v2873
    %v3386 = vmul.f32 %v2361, %v2874
    %v3387 = vmul.f32 %v2362, %v2875
    %v3388 = vmul.f32 %v2363, %v2876
    %v3389 = vmul.f32 %v2364, %v2877
    %v3390 = vmul.f32 %v2365, %v2878
    %v3391 = vmul.f32 %v2366, %v2879
    %v3392 = vmul.f32 %v2367, %v2880
    %v3393 = vmul.f32 %v2368, %v2881
    %v3394 = vmul.f32 %v2369, %v2882
    %v3395 = vmul.f32 %v2370, %v2883
    %v3396 = vmul.f32 %v2371, %v2884
    %v3397 = vmul.f32 %v2372, %v2885
    %v3398 = vmul.f32 %v2373, %v2886
    %v3399 = vmul.f32 %v2374, %v2887
    %v3400 = vmul.f32 %v2375, %v2888
    %v3401 = vmul.f32 %v2376, %v2889
    %v3402 = vmul.f32 %v2377, %v2890
    %v3403 = vmul.f32 %v2378, %v2891
    %v3404 = vmul.f32 %v2379, %v2892
    %v3405 = vmul.f32 %v2380, %v2893
    %v3406 = vmul.f32 %v2381, %v2894
    %v3407 = vmul.f32 %v2382, %v2895
    %v3408 = vmul.f32 %v2383, %v2896
    %v3409 = vmul.f32 %v2384, %v2897
    %v3410 = vmul.f32 %v2385, %v2898
    %v3411 = vmul.f32 %v2386, %v2899
    %v3412 = vmul.f32 %v2387, %v2900
    %v3413 = vmul.f32 %v2388, %v2901
    %v3414 = vmul.f32 %v2389, %v2902
    %v3415 = vmul.f32 %v2390, %v2903
    %v3416 = vmul.f32 %v2391, %v2904
    %v3417 = vmul.f32 %v2392, %v2905
    %v3418 = vmul.f32 %v2393, %v2906
    %v3419 = vmul.f32 %v2394, %v2907
    %v3420 = vmul.f32 %v2395, %v2908
    %v3421 = vmul.f32 %v2396, %v2909
    %v3422 = vmul.f32 %v2397, %v2910
    %v3423 = vmul.f32 %v2398, %v2911
    %v3424 = vmul.f32 %v2399, %v2912
    %v3425 = vmul.f32 %v2400, %v2913
    %v3426 = vmul.f32 %v2401, %v2914
    %v3427 = vmul.f32 %v2402, %v2915
    %v3428 = vmul.f32 %v2403, %v2916
    %v3429 = vmul.f32 %v2404, %v2917
    %v3430 = vmul.f32 %v2405, %v2918
    %v3431 = vmul.f32 %v2406, %v2919
    %v3432 = vmul.f32 %v2407, %v2920
    %v3433 = vmul.f32 %v2408, %v2921
    %v3434 = vmul.f32 %v2409, %v2922
    %v3435 = vmul.f32 %v2410, %v2923
    %v3436 = vmul.f32 %v2411, %v2924
    %v3437 = vmul.f32 %v2412, %v2925
    %v3438 = vmul.f32 %v2413, %v2926
    %v3439 = vmul.f32 %v2414, %v2927
    %v3440 = vmul.f32 %v2415, %v2928
    %v3441 = vmul.f32 %v2416, %v2929
    %v3442 = vmul.f32 %v2417, %v2930
    %v3443 = vmul.f32 %v2418, %v2931
    %v3444 = vmul.f32 %v2419, %v2932
    %v3445 = vmul.f32 %v2420, %v2933
    %v3446 = vmul.f32 %v2421, %v2934
    %v3447 = vmul.f32 %v2422, %v2935
    %v3448 = vmul.f32 %v2423, %v2936
    %v3449 = vmul.f32 %v2424, %v2937
    %v3450 = vmul.f32 %v2425, %v2938
    %v3451 = vmul.f32 %v2426, %v2939
    %v3452 = vmul.f32 %v2427, %v2940
    %v3453 = vmul.f32 %v2428, %v2941
    %v3454 = vmul.f32 %v2429, %v2942
    %v3455 = vmul.f32 %v2430, %v2943
    %v3456 = vmul.f32 %v2431, %v2944
    %v3457 = vmul.f32 %v2432, %v2945
    %v3458 = vmul.f32 %v2433, %v2946
    %v3459 = vmul.f32 %v2434, %v2947
    %v3460 = vmul.f32 %v2435, %v2948
    %v3461 = vmul.f32 %v2436, %v2949
    %v3462 = vmul.f32 %v2437, %v2950
    %v3463 = vmul.f32 %v2438, %v2951
    %v3464 = vmul.f32 %v2439, %v2952
    %v3465 = vmul.f32 %v2440, %v2953
    %v3466 = vmul.f32 %v2441, %v2954
    %v3467 = vmul.f32 %v2442, %v2955
    %v3468 = vmul.f32 %v2443, %v2956
    %v3469 = vmul.f32 %v2444, %v2957
    %v3470 = vmul.f32 %v2445, %v2958
    %v3471 = vmul.f32 %v2446, %v2959
    %v3472 = vmul.f32 %v2447, %v2960
    %v3473 = vmul.f32 %v2448, %v2961
    %v3474 = vmul.f32 %v2449, %v2962
    %v3475 = vmul.f32 %v2450, %v2963
    %v3476 = vmul.f32 %v2451, %v2964
    %v3477 = vmul.f32 %v2452, %v2965
    %v3478 = vmul.f32 %v2453, %v2966
    %v3479 = vmul.f32 %v2454, %v2967
    %v3480 = vmul.f32 %v2455, %v2968
    %v3481 = vmul.f32 %v2456, %v2969
    %v3482 = vmul.f32 %v2457, %v2970
    %v3483 = vmul.f32 %v2458, %v2971
    %v3484 = vmul.f32 %v2459, %v2972
    %v3485 = vmul.f32 %v2460, %v2973
    %v3486 = vmul.f32 %v2461, %v2974
    %v3487 = vmul.f32 %v2462, %v2975
    %v3488 = vmul.f32 %v2463, %v2976
    %v3489 = vmul.f32 %v2464, %v2977
    %v3490 = vmul.f32 %v2465, %v2978
    %v3491 = vmul.f32 %v2466, %v2979
    %v3492 = vmul.f32 %v2467, %v2980
    %v3493 = vmul.f32 %v2468, %v2981
    %v3494 = vmul.f32 %v2469, %v2982
    %v3495 = vmul.f32 %v2470, %v2983
    %v3496 = vmul.f32 %v2471, %v2984
    %v3497 = vmul.f32 %v2472, %v2985
    %v3498 = vmul.f32 %v2473, %v2986
    %v3499 = vmul.f32 %v2474, %v2987
    %v3500 = vmul.f32 %v2475, %v2988
    %v3501 = vmul.f32 %v2476, %v2989
    %v3502 = vmul.f32 %v2477, %v2990
    %v3503 = vmul.f32 %v2478, %v2991
    %v3504 = vmul.f32 %v2479, %v2992
    %v3505 = vmul.f32 %v2480, %v2993
    %v3506 = vmul.f32 %v2481, %v2994
    %v3507 = vmul.f32 %v2482, %v2995
    %v3508 = vmul.f32 %v2483, %v2996
    %v3509 = vmul.f32 %v2484, %v2997
    %v3510 = vmul.f32 %v2485, %v2998
    %v3511 = vmul.f32 %v2486, %v2999
    %v3512 = vmul.f32 %v2487, %v3000
    %v3513 = vmul.f32 %v2488, %v3001
    %v3514 = vmul.f32 %v2489, %v3002
    %v3515 = vmul.f32 %v2490, %v3003
    %v3516 = vmul.f32 %v2491, %v3004
    %v3517 = vmul.f32 %v2492, %v3005
    %v3518 = vmul.f32 %v2493, %v3006
    %v3519 = vmul.f32 %v2494, %v3007
    %v3520 = vmul.f32 %v2495, %v3008
    %v3521 = vmul.f32 %v2496, %v3009
    %v3522 = vmul.f32 %v2497, %v3010
    %v3523 = vmul.f32 %v2498, %v3011
    %v3524 = vmul.f32 %v2499, %v3012
    %v3525 = vmul.f32 %v2500, %v3013
    %v3526 = vmul.f32 %v2501, %v3014
    %v3527 = vmul.f32 %v2502, %v3015
    %v3528 = vmul.f32 %v2503, %v3016
    %v3529 = vmul.f32 %v2504, %v3017
    %v3530 = vmul.f32 %v2505, %v3018
    %v3531 = vmul.f32 %v2506, %v3019
    %v3532 = vmul.f32 %v2507, %v3020
    %v3533 = vmul.f32 %v2508, %v3021
    %v3534 = vmul.f32 %v2509, %v3022
    %v3535 = vmul.f32 %v2510, %v3023
    %v3536 = vmul.f32 %v2511, %v3024
    %v3537 = vmul.f32 %v2512, %v3025
    %v3538 = vmul.f32 %v2513, %v3026
    %v3539 = vmul.f32 %v2514, %v3027
    %v3540 = vmul.f32 %v2515, %v3028
    %v3541 = vmul.f32 %v2516, %v3029
    %v3542 = vmul.f32 %v2517, %v3030
    %v3543 = vmul.f32 %v2518, %v3031
    %v3544 = vmul.f32 %v2519, %v3032
    %v3545 = vmul.f32 %v2520, %v3033
    %v3546 = vmul.f32 %v2521, %v3034
    %v3547 = vmul.f32 %v2522, %v3035
    %v3548 = vmul.f32 %v2523, %v3036
    %v3549 = vmul.f32 %v2524, %v3037
    %v3550 = vmul.f32 %v2525, %v3038
    %v3551 = vmul.f32 %v2526, %v3039
    %v3552 = vmul.f32 %v2527, %v3040
    %v3553 = vmul.f32 %v2528, %v3041
    %v3554 = vmul.f32 %v2529, %v3042
    %v3555 = vmul.f32 %v2530, %v3043
    %v3556 = vmul.f32 %v2531, %v3044
    %v3557 = vmul.f32 %v2532, %v3045
    %v3558 = vmul.f32 %v2533, %v3046
    %v3559 = vmul.f32 %v2534, %v3047
    %v3560 = vmul.f32 %v2535, %v3048
    %v3561 = vmul.f32 %v2536, %v3049
    %v3562 = vmul.f32 %v2537, %v3050
    %v3563 = vmul.f32 %v2538, %v3051
    %v3564 = vmul.f32 %v2539, %v3052
    %v3565 = vmul.f32 %v2540, %v3053
    %v3566 = vmul.f32 %v2541, %v3054
    %v3567 = vmul.f32 %v2542, %v3055
    %v3568 = vmul.f32 %v2543, %v3056
    %v3569 = vmul.f32 %v2544, %v3057
    %v3570 = vmul.f32 %v2545, %v3058
    %v3571 = vmul.f32 %v2546, %v3059
    %v3572 = vmul.f32 %v2547, %v3060
    %v3573 = vmul.f32 %v2548, %v3061
    %v3574 = vmul.f32 %v2549, %v3062
    %v3575 = vmul.f32 %v2550, %v3063
    %v3576 = vmul.f32 %v2551, %v3064
    %v3577 = vmul.f32 %v2552, %v3065
    %v3578 = vmul.f32 %v2553, %v3066
    %v3579 = vmul.f32 %v2554, %v3067
    %v3580 = vmul.f32 %v2555, %v3068
    %v3581 = vmul.f32 %v2556, %v3069
    %v3582 = vmul.f32 %v2557, %v3070
    %v3583 = vmul.f32 %v2558, %v3071
    %v3584 = vmul.f32 %v2559, %v3072
    %v3585 = vmul.f32 %v2560, %v3073
    %v3586 = vmul.f32 %v2561, %v3074
    %v3587 = vmul.f32 %v2562, %v3075
    %v3588 = vmul.f32 %v2563, %v3076
    %v3589 = vmul.f32 %v2564, %v3077
    %v3590 = vmul.f32 %v2565, %v3078
    %v3591 = vmul.f32 %v2566, %v3079
    %v3592 = vmul.f32 %v2567, %v3080
    %v3593 = vmul.f32 %v2568, %v3081
    %v3594 = vmul.f32 %v2569, %v3082
    %v3595 = vmul.f32 %v2570, %v3083
    %v3596 = vmul.f32 %v2571, %v3084
    %v3597 = vmul.f32 %v2572, %v3085
    %v3598 = vmul.f32 %v2573, %v3086
    %v3599 = vmul.f32 %v2574, %v3087
    %v3600 = vmul.f32 %v2575, %v3088
    %v3601 = vmul.f32 %v2576, %v3089
    %v3602 = vmul.f32 %v2577, %v3090
    %v3603 = vmul.f32 %v2578, %v3091
    %v3604 = vmul.f32 %v2579, %v3092
    %v3605 = vmul.f32 %v2580, %v3093
    %v3606 = vmul.f32 %v2581, %v3094
    %v3607 = vmul.f32 %v2582, %v3095
    %v3608 = vmul.f32 %v2583, %v3096
    %v3609 = vmul.f32 %v2584, %v3097
    %v3610 = vmul.f32 %v2585, %v3098
    %v3611 = vmul.f32 %v2586, %v3099
    %v3612 = vmul.f32 %v2587, %v3100
    %v3613 = vmul.f32 %v2588, %v3101
    %v3614 = vmul.f32 %v2589, %v3102
    %v3615 = vmul.f32 %v2590, %v3103
    %v3616 = vmul.f32 %v2591, %v3104
    %v3617 = vmul.f32 %v2592, %v3105
    %v3618 = vmul.f32 %v2593, %v3106
    %v3619 = vmul.f32 %v2594, %v3107
    %v3620 = vmul.f32 %v2595, %v3108
    %v3621 = vmul.f32 %v2596, %v3109
    %v3622 = vmul.f32 %v2597, %v3110
    %v3623 = vmul.f32 %v2598, %v3111
    %v3624 = vmul.f32 %v2599, %v3112
    %v3625 = vmul.f32 %v2600, %v3113
    %v3626 = vmul.f32 %v2601, %v3114
    %v3627 = vmul.f32 %v2602, %v3115
    %v3628 = vmul.f32 %v2603, %v3116
    %v3629 = vmul.f32 %v2604, %v3117
    %v3630 = vmul.f32 %v2605, %v3118
    %v3631 = vmul.f32 %v2606, %v3119
    %v3632 = vmul.f32 %v2607, %v3120
    %v3633 = vmul.f32 %v2608, %v3121
    %v3634 = vmul.f32 %v2609, %v3122
    %v3635 = vmul.f32 %v2610, %v3123
    %3636 = vst [vmem:[#allocation9] sm:$0xff] %v3124
    %3637 = vst [vmem:[#allocation9 + $0x8] sm:$0xff] %v3125
    %3638 = vst [vmem:[#allocation9 + $0x10] sm:$0xff] %v3126
    %3639 = vst [vmem:[#allocation9 + $0x18] sm:$0xff] %v3127
    %3640 = vst [vmem:[#allocation9 + $0x20] sm:$0xff] %v3128
    %3641 = vst [vmem:[#allocation9 + $0x28] sm:$0xff] %v3129
    %3642 = vst [vmem:[#allocation9 + $0x30] sm:$0xff] %v3130
    %3643 = vst [vmem:[#allocation9 + $0x38] sm:$0xff] %v3131
    %3644 = vst [vmem:[#allocation9 + $0x40] sm:$0xff] %v3132
    %3645 = vst [vmem:[#allocation9 + $0x48] sm:$0xff] %v3133
    %3646 = vst [vmem:[#allocation9 + $0x50] sm:$0xff] %v3134
    %3647 = vst [vmem:[#allocation9 + $0x58] sm:$0xff] %v3135
    %3648 = vst [vmem:[#allocation9 + $0x60] sm:$0xff] %v3136
    %3649 = vst [vmem:[#allocation9 + $0x68] sm:$0xff] %v3137
    %3650 = vst [vmem:[#allocation9 + $0x70] sm:$0xff] %v3138
    %3651 = vst [vmem:[#allocation9 + $0x78] sm:$0xff] %v3139
    %3652 = vst [vmem:[#allocation9 + $0x80] sm:$0xff] %v3140
    %3653 = vst [vmem:[#allocation9 + $0x88] sm:$0xff] %v3141
    %3654 = vst [vmem:[#allocation9 + $0x90] sm:$0xff] %v3142
    %3655 = vst [vmem:[#allocation9 + $0x98] sm:$0xff] %v3143
    %3656 = vst [vmem:[#allocation9 + $0xa0] sm:$0xff] %v3144
    %3657 = vst [vmem:[#allocation9 + $0xa8] sm:$0xff] %v3145
    %3658 = vst [vmem:[#allocation9 + $0xb0] sm:$0xff] %v3146
    %3659 = vst [vmem:[#allocation9 + $0xb8] sm:$0xff] %v3147
    %3660 = vst [vmem:[#allocation9 + $0xc0] sm:$0xff] %v3148
    %3661 = vst [vmem:[#allocation9 + $0xc8] sm:$0xff] %v3149
    %3662 = vst [vmem:[#allocation9 + $0xd0] sm:$0xff] %v3150
    %3663 = vst [vmem:[#allocation9 + $0xd8] sm:$0xff] %v3151
    %3664 = vst [vmem:[#allocation9 + $0xe0] sm:$0xff] %v3152
    %3665 = vst [vmem:[#allocation9 + $0xe8] sm:$0xff] %v3153
    %3666 = vst [vmem:[#allocation9 + $0xf0] sm:$0xff] %v3154
    %3667 = vst [vmem:[#allocation9 + $0xf8] sm:$0xff] %v3155
    %3668 = vst [vmem:[#allocation9 + $0x100] sm:$0xff] %v3156
    %3669 = vst [vmem:[#allocation9 + $0x108] sm:$0xff] %v3157
    %3670 = vst [vmem:[#allocation9 + $0x110] sm:$0xff] %v3158
    %3671 = vst [vmem:[#allocation9 + $0x118] sm:$0xff] %v3159
    %3672 = vst [vmem:[#allocation9 + $0x120] sm:$0xff] %v3160
    %3673 = vst [vmem:[#allocation9 + $0x128] sm:$0xff] %v3161
    %3674 = vst [vmem:[#allocation9 + $0x130] sm:$0xff] %v3162
    %3675 = vst [vmem:[#allocation9 + $0x138] sm:$0xff] %v3163
    %3676 = vst [vmem:[#allocation9 + $0x140] sm:$0xff] %v3164
    %3677 = vst [vmem:[#allocation9 + $0x148] sm:$0xff] %v3165
    %3678 = vst [vmem:[#allocation9 + $0x150] sm:$0xff] %v3166
    %3679 = vst [vmem:[#allocation9 + $0x158] sm:$0xff] %v3167
    %3680 = vst [vmem:[#allocation9 + $0x160] sm:$0xff] %v3168
    %3681 = vst [vmem:[#allocation9 + $0x168] sm:$0xff] %v3169
    %3682 = vst [vmem:[#allocation9 + $0x170] sm:$0xff] %v3170
    %3683 = vst [vmem:[#allocation9 + $0x178] sm:$0xff] %v3171
    %3684 = vst [vmem:[#allocation9 + $0x180] sm:$0xff] %v3172
    %3685 = vst [vmem:[#allocation9 + $0x188] sm:$0xff] %v3173
    %3686 = vst [vmem:[#allocation9 + $0x190] sm:$0xff] %v3174
    %3687 = vst [vmem:[#allocation9 + $0x198] sm:$0xff] %v3175
    %3688 = vst [vmem:[#allocation9 + $0x1a0] sm:$0xff] %v3176
    %3689 = vst [vmem:[#allocation9 + $0x1a8] sm:$0xff] %v3177
    %3690 = vst [vmem:[#allocation9 + $0x1b0] sm:$0xff] %v3178
    %3691 = vst [vmem:[#allocation9 + $0x1b8] sm:$0xff] %v3179
    %3692 = vst [vmem:[#allocation9 + $0x1c0] sm:$0xff] %v3180
    %3693 = vst [vmem:[#allocation9 + $0x1c8] sm:$0xff] %v3181
    %3694 = vst [vmem:[#allocation9 + $0x1d0] sm:$0xff] %v3182
    %3695 = vst [vmem:[#allocation9 + $0x1d8] sm:$0xff] %v3183
    %3696 = vst [vmem:[#allocation9 + $0x1e0] sm:$0xff] %v3184
    %3697 = vst [vmem:[#allocation9 + $0x1e8] sm:$0xff] %v3185
    %3698 = vst [vmem:[#allocation9 + $0x1f0] sm:$0xff] %v3186
    %3699 = vst [vmem:[#allocation9 + $0x1f8] sm:$0xff] %v3187
    %3700 = vst [vmem:[#allocation9 + $0x200] sm:$0xff] %v3188
    %3701 = vst [vmem:[#allocation9 + $0x208] sm:$0xff] %v3189
    %3702 = vst [vmem:[#allocation9 + $0x210] sm:$0xff] %v3190
    %3703 = vst [vmem:[#allocation9 + $0x218] sm:$0xff] %v3191
    %3704 = vst [vmem:[#allocation9 + $0x220] sm:$0xff] %v3192
    %3705 = vst [vmem:[#allocation9 + $0x228] sm:$0xff] %v3193
    %3706 = vst [vmem:[#allocation9 + $0x230] sm:$0xff] %v3194
    %3707 = vst [vmem:[#allocation9 + $0x238] sm:$0xff] %v3195
    %3708 = vst [vmem:[#allocation9 + $0x240] sm:$0xff] %v3196
    %3709 = vst [vmem:[#allocation9 + $0x248] sm:$0xff] %v3197
    %3710 = vst [vmem:[#allocation9 + $0x250] sm:$0xff] %v3198
    %3711 = vst [vmem:[#allocation9 + $0x258] sm:$0xff] %v3199
    %3712 = vst [vmem:[#allocation9 + $0x260] sm:$0xff] %v3200
    %3713 = vst [vmem:[#allocation9 + $0x268] sm:$0xff] %v3201
    %3714 = vst [vmem:[#allocation9 + $0x270] sm:$0xff] %v3202
    %3715 = vst [vmem:[#allocation9 + $0x278] sm:$0xff] %v3203
    %3716 = vst [vmem:[#allocation9 + $0x280] sm:$0xff] %v3204
    %3717 = vst [vmem:[#allocation9 + $0x288] sm:$0xff] %v3205
    %3718 = vst [vmem:[#allocation9 + $0x290] sm:$0xff] %v3206
    %3719 = vst [vmem:[#allocation9 + $0x298] sm:$0xff] %v3207
    %3720 = vst [vmem:[#allocation9 + $0x2a0] sm:$0xff] %v3208
    %3721 = vst [vmem:[#allocation9 + $0x2a8] sm:$0xff] %v3209
    %3722 = vst [vmem:[#allocation9 + $0x2b0] sm:$0xff] %v3210
    %3723 = vst [vmem:[#allocation9 + $0x2b8] sm:$0xff] %v3211
    %3724 = vst [vmem:[#allocation9 + $0x2c0] sm:$0xff] %v3212
    %3725 = vst [vmem:[#allocation9 + $0x2c8] sm:$0xff] %v3213
    %3726 = vst [vmem:[#allocation9 + $0x2d0] sm:$0xff] %v3214
    %3727 = vst [vmem:[#allocation9 + $0x2d8] sm:$0xff] %v3215
    %3728 = vst [vmem:[#allocation9 + $0x2e0] sm:$0xff] %v3216
    %3729 = vst [vmem:[#allocation9 + $0x2e8] sm:$0xff] %v3217
    %3730 = vst [vmem:[#allocation9 + $0x2f0] sm:$0xff] %v3218
    %3731 = vst [vmem:[#allocation9 + $0x2f8] sm:$0xff] %v3219
    %3732 = vst [vmem:[#allocation9 + $0x300] sm:$0xff] %v3220
    %3733 = vst [vmem:[#allocation9 + $0x308] sm:$0xff] %v3221
    %3734 = vst [vmem:[#allocation9 + $0x310] sm:$0xff] %v3222
    %3735 = vst [vmem:[#allocation9 + $0x318] sm:$0xff] %v3223
    %3736 = vst [vmem:[#allocation9 + $0x320] sm:$0xff] %v3224
    %3737 = vst [vmem:[#allocation9 + $0x328] sm:$0xff] %v3225
    %3738 = vst [vmem:[#allocation9 + $0x330] sm:$0xff] %v3226
    %3739 = vst [vmem:[#allocation9 + $0x338] sm:$0xff] %v3227
    %3740 = vst [vmem:[#allocation9 + $0x340] sm:$0xff] %v3228
    %3741 = vst [vmem:[#allocation9 + $0x348] sm:$0xff] %v3229
    %3742 = vst [vmem:[#allocation9 + $0x350] sm:$0xff] %v3230
    %3743 = vst [vmem:[#allocation9 + $0x358] sm:$0xff] %v3231
    %3744 = vst [vmem:[#allocation9 + $0x360] sm:$0xff] %v3232
    %3745 = vst [vmem:[#allocation9 + $0x368] sm:$0xff] %v3233
    %3746 = vst [vmem:[#allocation9 + $0x370] sm:$0xff] %v3234
    %3747 = vst [vmem:[#allocation9 + $0x378] sm:$0xff] %v3235
    %3748 = vst [vmem:[#allocation9 + $0x380] sm:$0xff] %v3236
    %3749 = vst [vmem:[#allocation9 + $0x388] sm:$0xff] %v3237
    %3750 = vst [vmem:[#allocation9 + $0x390] sm:$0xff] %v3238
    %3751 = vst [vmem:[#allocation9 + $0x398] sm:$0xff] %v3239
    %3752 = vst [vmem:[#allocation9 + $0x3a0] sm:$0xff] %v3240
    %3753 = vst [vmem:[#allocation9 + $0x3a8] sm:$0xff] %v3241
    %3754 = vst [vmem:[#allocation9 + $0x3b0] sm:$0xff] %v3242
    %3755 = vst [vmem:[#allocation9 + $0x3b8] sm:$0xff] %v3243
    %3756 = vst [vmem:[#allocation9 + $0x3c0] sm:$0xff] %v3244
    %3757 = vst [vmem:[#allocation9 + $0x3c8] sm:$0xff] %v3245
    %3758 = vst [vmem:[#allocation9 + $0x3d0] sm:$0xff] %v3246
    %3759 = vst [vmem:[#allocation9 + $0x3d8] sm:$0xff] %v3247
    %3760 = vst [vmem:[#allocation9 + $0x3e0] sm:$0xff] %v3248
    %3761 = vst [vmem:[#allocation9 + $0x3e8] sm:$0xff] %v3249
    %3762 = vst [vmem:[#allocation9 + $0x3f0] sm:$0xff] %v3250
    %3763 = vst [vmem:[#allocation9 + $0x3f8] sm:$0xff] %v3251
    %3764 = vst [vmem:[#allocation9 + $0x400] sm:$0xff] %v3252
    %3765 = vst [vmem:[#allocation9 + $0x408] sm:$0xff] %v3253
    %3766 = vst [vmem:[#allocation9 + $0x410] sm:$0xff] %v3254
    %3767 = vst [vmem:[#allocation9 + $0x418] sm:$0xff] %v3255
    %3768 = vst [vmem:[#allocation9 + $0x420] sm:$0xff] %v3256
    %3769 = vst [vmem:[#allocation9 + $0x428] sm:$0xff] %v3257
    %3770 = vst [vmem:[#allocation9 + $0x430] sm:$0xff] %v3258
    %3771 = vst [vmem:[#allocation9 + $0x438] sm:$0xff] %v3259
    %3772 = vst [vmem:[#allocation9 + $0x440] sm:$0xff] %v3260
    %3773 = vst [vmem:[#allocation9 + $0x448] sm:$0xff] %v3261
    %3774 = vst [vmem:[#allocation9 + $0x450] sm:$0xff] %v3262
    %3775 = vst [vmem:[#allocation9 + $0x458] sm:$0xff] %v3263
    %3776 = vst [vmem:[#allocation9 + $0x460] sm:$0xff] %v3264
    %3777 = vst [vmem:[#allocation9 + $0x468] sm:$0xff] %v3265
    %3778 = vst [vmem:[#allocation9 + $0x470] sm:$0xff] %v3266
    %3779 = vst [vmem:[#allocation9 + $0x478] sm:$0xff] %v3267
    %3780 = vst [vmem:[#allocation9 + $0x480] sm:$0xff] %v3268
    %3781 = vst [vmem:[#allocation9 + $0x488] sm:$0xff] %v3269
    %3782 = vst [vmem:[#allocation9 + $0x490] sm:$0xff] %v3270
    %3783 = vst [vmem:[#allocation9 + $0x498] sm:$0xff] %v3271
    %3784 = vst [vmem:[#allocation9 + $0x4a0] sm:$0xff] %v3272
    %3785 = vst [vmem:[#allocation9 + $0x4a8] sm:$0xff] %v3273
    %3786 = vst [vmem:[#allocation9 + $0x4b0] sm:$0xff] %v3274
    %3787 = vst [vmem:[#allocation9 + $0x4b8] sm:$0xff] %v3275
    %3788 = vst [vmem:[#allocation9 + $0x4c0] sm:$0xff] %v3276
    %3789 = vst [vmem:[#allocation9 + $0x4c8] sm:$0xff] %v3277
    %3790 = vst [vmem:[#allocation9 + $0x4d0] sm:$0xff] %v3278
    %3791 = vst [vmem:[#allocation9 + $0x4d8] sm:$0xff] %v3279
    %3792 = vst [vmem:[#allocation9 + $0x4e0] sm:$0xff] %v3280
    %3793 = vst [vmem:[#allocation9 + $0x4e8] sm:$0xff] %v3281
    %3794 = vst [vmem:[#allocation9 + $0x4f0] sm:$0xff] %v3282
    %3795 = vst [vmem:[#allocation9 + $0x4f8] sm:$0xff] %v3283
    %3796 = vst [vmem:[#allocation9 + $0x500] sm:$0xff] %v3284
    %3797 = vst [vmem:[#allocation9 + $0x508] sm:$0xff] %v3285
    %3798 = vst [vmem:[#allocation9 + $0x510] sm:$0xff] %v3286
    %3799 = vst [vmem:[#allocation9 + $0x518] sm:$0xff] %v3287
    %3800 = vst [vmem:[#allocation9 + $0x520] sm:$0xff] %v3288
    %3801 = vst [vmem:[#allocation9 + $0x528] sm:$0xff] %v3289
    %3802 = vst [vmem:[#allocation9 + $0x530] sm:$0xff] %v3290
    %3803 = vst [vmem:[#allocation9 + $0x538] sm:$0xff] %v3291
    %3804 = vst [vmem:[#allocation9 + $0x540] sm:$0xff] %v3292
    %3805 = vst [vmem:[#allocation9 + $0x548] sm:$0xff] %v3293
    %3806 = vst [vmem:[#allocation9 + $0x550] sm:$0xff] %v3294
    %3807 = vst [vmem:[#allocation9 + $0x558] sm:$0xff] %v3295
    %3808 = vst [vmem:[#allocation9 + $0x560] sm:$0xff] %v3296
    %3809 = vst [vmem:[#allocation9 + $0x568] sm:$0xff] %v3297
    %3810 = vst [vmem:[#allocation9 + $0x570] sm:$0xff] %v3298
    %3811 = vst [vmem:[#allocation9 + $0x578] sm:$0xff] %v3299
    %3812 = vst [vmem:[#allocation9 + $0x580] sm:$0xff] %v3300
    %3813 = vst [vmem:[#allocation9 + $0x588] sm:$0xff] %v3301
    %3814 = vst [vmem:[#allocation9 + $0x590] sm:$0xff] %v3302
    %3815 = vst [vmem:[#allocation9 + $0x598] sm:$0xff] %v3303
    %3816 = vst [vmem:[#allocation9 + $0x5a0] sm:$0xff] %v3304
    %3817 = vst [vmem:[#allocation9 + $0x5a8] sm:$0xff] %v3305
    %3818 = vst [vmem:[#allocation9 + $0x5b0] sm:$0xff] %v3306
    %3819 = vst [vmem:[#allocation9 + $0x5b8] sm:$0xff] %v3307
    %3820 = vst [vmem:[#allocation9 + $0x5c0] sm:$0xff] %v3308
    %3821 = vst [vmem:[#allocation9 + $0x5c8] sm:$0xff] %v3309
    %3822 = vst [vmem:[#allocation9 + $0x5d0] sm:$0xff] %v3310
    %3823 = vst [vmem:[#allocation9 + $0x5d8] sm:$0xff] %v3311
    %3824 = vst [vmem:[#allocation9 + $0x5e0] sm:$0xff] %v3312
    %3825 = vst [vmem:[#allocation9 + $0x5e8] sm:$0xff] %v3313
    %3826 = vst [vmem:[#allocation9 + $0x5f0] sm:$0xff] %v3314
    %3827 = vst [vmem:[#allocation9 + $0x5f8] sm:$0xff] %v3315
    %3828 = vst [vmem:[#allocation9 + $0x600] sm:$0xff] %v3316
    %3829 = vst [vmem:[#allocation9 + $0x608] sm:$0xff] %v3317
    %3830 = vst [vmem:[#allocation9 + $0x610] sm:$0xff] %v3318
    %3831 = vst [vmem:[#allocation9 + $0x618] sm:$0xff] %v3319
    %3832 = vst [vmem:[#allocation9 + $0x620] sm:$0xff] %v3320
    %3833 = vst [vmem:[#allocation9 + $0x628] sm:$0xff] %v3321
    %3834 = vst [vmem:[#allocation9 + $0x630] sm:$0xff] %v3322
    %3835 = vst [vmem:[#allocation9 + $0x638] sm:$0xff] %v3323
    %3836 = vst [vmem:[#allocation9 + $0x640] sm:$0xff] %v3324
    %3837 = vst [vmem:[#allocation9 + $0x648] sm:$0xff] %v3325
    %3838 = vst [vmem:[#allocation9 + $0x650] sm:$0xff] %v3326
    %3839 = vst [vmem:[#allocation9 + $0x658] sm:$0xff] %v3327
    %3840 = vst [vmem:[#allocation9 + $0x660] sm:$0xff] %v3328
    %3841 = vst [vmem:[#allocation9 + $0x668] sm:$0xff] %v3329
    %3842 = vst [vmem:[#allocation9 + $0x670] sm:$0xff] %v3330
    %3843 = vst [vmem:[#allocation9 + $0x678] sm:$0xff] %v3331
    %3844 = vst [vmem:[#allocation9 + $0x680] sm:$0xff] %v3332
    %3845 = vst [vmem:[#allocation9 + $0x688] sm:$0xff] %v3333
    %3846 = vst [vmem:[#allocation9 + $0x690] sm:$0xff] %v3334
    %3847 = vst [vmem:[#allocation9 + $0x698] sm:$0xff] %v3335
    %3848 = vst [vmem:[#allocation9 + $0x6a0] sm:$0xff] %v3336
    %3849 = vst [vmem:[#allocation9 + $0x6a8] sm:$0xff] %v3337
    %3850 = vst [vmem:[#allocation9 + $0x6b0] sm:$0xff] %v3338
    %3851 = vst [vmem:[#allocation9 + $0x6b8] sm:$0xff] %v3339
    %3852 = vst [vmem:[#allocation9 + $0x6c0] sm:$0xff] %v3340
    %3853 = vst [vmem:[#allocation9 + $0x6c8] sm:$0xff] %v3341
    %3854 = vst [vmem:[#allocation9 + $0x6d0] sm:$0xff] %v3342
    %3855 = vst [vmem:[#allocation9 + $0x6d8] sm:$0xff] %v3343
    %3856 = vst [vmem:[#allocation9 + $0x6e0] sm:$0xff] %v3344
    %3857 = vst [vmem:[#allocation9 + $0x6e8] sm:$0xff] %v3345
    %3858 = vst [vmem:[#allocation9 + $0x6f0] sm:$0xff] %v3346
    %3859 = vst [vmem:[#allocation9 + $0x6f8] sm:$0xff] %v3347
    %3860 = vst [vmem:[#allocation9 + $0x700] sm:$0xff] %v3348
    %3861 = vst [vmem:[#allocation9 + $0x708] sm:$0xff] %v3349
    %3862 = vst [vmem:[#allocation9 + $0x710] sm:$0xff] %v3350
    %3863 = vst [vmem:[#allocation9 + $0x718] sm:$0xff] %v3351
    %3864 = vst [vmem:[#allocation9 + $0x720] sm:$0xff] %v3352
    %3865 = vst [vmem:[#allocation9 + $0x728] sm:$0xff] %v3353
    %3866 = vst [vmem:[#allocation9 + $0x730] sm:$0xff] %v3354
    %3867 = vst [vmem:[#allocation9 + $0x738] sm:$0xff] %v3355
    %3868 = vst [vmem:[#allocation9 + $0x740] sm:$0xff] %v3356
    %3869 = vst [vmem:[#allocation9 + $0x748] sm:$0xff] %v3357
    %3870 = vst [vmem:[#allocation9 + $0x750] sm:$0xff] %v3358
    %3871 = vst [vmem:[#allocation9 + $0x758] sm:$0xff] %v3359
    %3872 = vst [vmem:[#allocation9 + $0x760] sm:$0xff] %v3360
    %3873 = vst [vmem:[#allocation9 + $0x768] sm:$0xff] %v3361
    %3874 = vst [vmem:[#allocation9 + $0x770] sm:$0xff] %v3362
    %3875 = vst [vmem:[#allocation9 + $0x778] sm:$0xff] %v3363
    %3876 = vst [vmem:[#allocation9 + $0x780] sm:$0xff] %v3364
    %3877 = vst [vmem:[#allocation9 + $0x788] sm:$0xff] %v3365
    %3878 = vst [vmem:[#allocation9 + $0x790] sm:$0xff] %v3366
    %3879 = vst [vmem:[#allocation9 + $0x798] sm:$0xff] %v3367
    %3880 = vst [vmem:[#allocation9 + $0x7a0] sm:$0xff] %v3368
    %3881 = vst [vmem:[#allocation9 + $0x7a8] sm:$0xff] %v3369
    %3882 = vst [vmem:[#allocation9 + $0x7b0] sm:$0xff] %v3370
    %3883 = vst [vmem:[#allocation9 + $0x7b8] sm:$0xff] %v3371
    %3884 = vst [vmem:[#allocation9 + $0x7c0] sm:$0xff] %v3372
    %3885 = vst [vmem:[#allocation9 + $0x7c8] sm:$0xff] %v3373
    %3886 = vst [vmem:[#allocation9 + $0x7d0] sm:$0xff] %v3374
    %3887 = vst [vmem:[#allocation9 + $0x7d8] sm:$0xff] %v3375
    %3888 = vst [vmem:[#allocation9 + $0x7e0] sm:$0xff] %v3376
    %3889 = vst [vmem:[#allocation9 + $0x7e8] sm:$0xff] %v3377
    %3890 = vst [vmem:[#allocation9 + $0x7f0] sm:$0xff] %v3378
    %3891 = vst [vmem:[#allocation9 + $0x7f8] sm:$0xff] %v3379
    %3892 = vst [vmem:[#allocation9 + $0x800] sm:$0xff] %v3380
    %3893 = vst [vmem:[#allocation9 + $0x808] sm:$0xff] %v3381
    %3894 = vst [vmem:[#allocation9 + $0x810] sm:$0xff] %v3382
    %3895 = vst [vmem:[#allocation9 + $0x818] sm:$0xff] %v3383
    %3896 = vst [vmem:[#allocation9 + $0x820] sm:$0xff] %v3384
    %3897 = vst [vmem:[#allocation9 + $0x828] sm:$0xff] %v3385
    %3898 = vst [vmem:[#allocation9 + $0x830] sm:$0xff] %v3386
    %3899 = vst [vmem:[#allocation9 + $0x838] sm:$0xff] %v3387
    %3900 = vst [vmem:[#allocation9 + $0x840] sm:$0xff] %v3388
    %3901 = vst [vmem:[#allocation9 + $0x848] sm:$0xff] %v3389
    %3902 = vst [vmem:[#allocation9 + $0x850] sm:$0xff] %v3390
    %3903 = vst [vmem:[#allocation9 + $0x858] sm:$0xff] %v3391
    %3904 = vst [vmem:[#allocation9 + $0x860] sm:$0xff] %v3392
    %3905 = vst [vmem:[#allocation9 + $0x868] sm:$0xff] %v3393
    %3906 = vst [vmem:[#allocation9 + $0x870] sm:$0xff] %v3394
    %3907 = vst [vmem:[#allocation9 + $0x878] sm:$0xff] %v3395
    %3908 = vst [vmem:[#allocation9 + $0x880] sm:$0xff] %v3396
    %3909 = vst [vmem:[#allocation9 + $0x888] sm:$0xff] %v3397
    %3910 = vst [vmem:[#allocation9 + $0x890] sm:$0xff] %v3398
    %3911 = vst [vmem:[#allocation9 + $0x898] sm:$0xff] %v3399
    %3912 = vst [vmem:[#allocation9 + $0x8a0] sm:$0xff] %v3400
    %3913 = vst [vmem:[#allocation9 + $0x8a8] sm:$0xff] %v3401
    %3914 = vst [vmem:[#allocation9 + $0x8b0] sm:$0xff] %v3402
    %3915 = vst [vmem:[#allocation9 + $0x8b8] sm:$0xff] %v3403
    %3916 = vst [vmem:[#allocation9 + $0x8c0] sm:$0xff] %v3404
    %3917 = vst [vmem:[#allocation9 + $0x8c8] sm:$0xff] %v3405
    %3918 = vst [vmem:[#allocation9 + $0x8d0] sm:$0xff] %v3406
    %3919 = vst [vmem:[#allocation9 + $0x8d8] sm:$0xff] %v3407
    %3920 = vst [vmem:[#allocation9 + $0x8e0] sm:$0xff] %v3408
    %3921 = vst [vmem:[#allocation9 + $0x8e8] sm:$0xff] %v3409
    %3922 = vst [vmem:[#allocation9 + $0x8f0] sm:$0xff] %v3410
    %3923 = vst [vmem:[#allocation9 + $0x8f8] sm:$0xff] %v3411
    %3924 = vst [vmem:[#allocation9 + $0x900] sm:$0xff] %v3412
    %3925 = vst [vmem:[#allocation9 + $0x908] sm:$0xff] %v3413
    %3926 = vst [vmem:[#allocation9 + $0x910] sm:$0xff] %v3414
    %3927 = vst [vmem:[#allocation9 + $0x918] sm:$0xff] %v3415
    %3928 = vst [vmem:[#allocation9 + $0x920] sm:$0xff] %v3416
    %3929 = vst [vmem:[#allocation9 + $0x928] sm:$0xff] %v3417
    %3930 = vst [vmem:[#allocation9 + $0x930] sm:$0xff] %v3418
    %3931 = vst [vmem:[#allocation9 + $0x938] sm:$0xff] %v3419
    %3932 = vst [vmem:[#allocation9 + $0x940] sm:$0xff] %v3420
    %3933 = vst [vmem:[#allocation9 + $0x948] sm:$0xff] %v3421
    %3934 = vst [vmem:[#allocation9 + $0x950] sm:$0xff] %v3422
    %3935 = vst [vmem:[#allocation9 + $0x958] sm:$0xff] %v3423
    %3936 = vst [vmem:[#allocation9 + $0x960] sm:$0xff] %v3424
    %3937 = vst [vmem:[#allocation9 + $0x968] sm:$0xff] %v3425
    %3938 = vst [vmem:[#allocation9 + $0x970] sm:$0xff] %v3426
    %3939 = vst [vmem:[#allocation9 + $0x978] sm:$0xff] %v3427
    %3940 = vst [vmem:[#allocation9 + $0x980] sm:$0xff] %v3428
    %3941 = vst [vmem:[#allocation9 + $0x988] sm:$0xff] %v3429
    %3942 = vst [vmem:[#allocation9 + $0x990] sm:$0xff] %v3430
    %3943 = vst [vmem:[#allocation9 + $0x998] sm:$0xff] %v3431
    %3944 = vst [vmem:[#allocation9 + $0x9a0] sm:$0xff] %v3432
    %3945 = vst [vmem:[#allocation9 + $0x9a8] sm:$0xff] %v3433
    %3946 = vst [vmem:[#allocation9 + $0x9b0] sm:$0xff] %v3434
    %3947 = vst [vmem:[#allocation9 + $0x9b8] sm:$0xff] %v3435
    %3948 = vst [vmem:[#allocation9 + $0x9c0] sm:$0xff] %v3436
    %3949 = vst [vmem:[#allocation9 + $0x9c8] sm:$0xff] %v3437
    %3950 = vst [vmem:[#allocation9 + $0x9d0] sm:$0xff] %v3438
    %3951 = vst [vmem:[#allocation9 + $0x9d8] sm:$0xff] %v3439
    %3952 = vst [vmem:[#allocation9 + $0x9e0] sm:$0xff] %v3440
    %3953 = vst [vmem:[#allocation9 + $0x9e8] sm:$0xff] %v3441
    %3954 = vst [vmem:[#allocation9 + $0x9f0] sm:$0xff] %v3442
    %3955 = vst [vmem:[#allocation9 + $0x9f8] sm:$0xff] %v3443
    %3956 = vst [vmem:[#allocation9 + $0xa00] sm:$0xff] %v3444
    %3957 = vst [vmem:[#allocation9 + $0xa08] sm:$0xff] %v3445
    %3958 = vst [vmem:[#allocation9 + $0xa10] sm:$0xff] %v3446
    %3959 = vst [vmem:[#allocation9 + $0xa18] sm:$0xff] %v3447
    %3960 = vst [vmem:[#allocation9 + $0xa20] sm:$0xff] %v3448
    %3961 = vst [vmem:[#allocation9 + $0xa28] sm:$0xff] %v3449
    %3962 = vst [vmem:[#allocation9 + $0xa30] sm:$0xff] %v3450
    %3963 = vst [vmem:[#allocation9 + $0xa38] sm:$0xff] %v3451
    %3964 = vst [vmem:[#allocation9 + $0xa40] sm:$0xff] %v3452
    %3965 = vst [vmem:[#allocation9 + $0xa48] sm:$0xff] %v3453
    %3966 = vst [vmem:[#allocation9 + $0xa50] sm:$0xff] %v3454
    %3967 = vst [vmem:[#allocation9 + $0xa58] sm:$0xff] %v3455
    %3968 = vst [vmem:[#allocation9 + $0xa60] sm:$0xff] %v3456
    %3969 = vst [vmem:[#allocation9 + $0xa68] sm:$0xff] %v3457
    %3970 = vst [vmem:[#allocation9 + $0xa70] sm:$0xff] %v3458
    %3971 = vst [vmem:[#allocation9 + $0xa78] sm:$0xff] %v3459
    %3972 = vst [vmem:[#allocation9 + $0xa80] sm:$0xff] %v3460
    %3973 = vst [vmem:[#allocation9 + $0xa88] sm:$0xff] %v3461
    %3974 = vst [vmem:[#allocation9 + $0xa90] sm:$0xff] %v3462
    %3975 = vst [vmem:[#allocation9 + $0xa98] sm:$0xff] %v3463
    %3976 = vst [vmem:[#allocation9 + $0xaa0] sm:$0xff] %v3464
    %3977 = vst [vmem:[#allocation9 + $0xaa8] sm:$0xff] %v3465
    %3978 = vst [vmem:[#allocation9 + $0xab0] sm:$0xff] %v3466
    %3979 = vst [vmem:[#allocation9 + $0xab8] sm:$0xff] %v3467
    %3980 = vst [vmem:[#allocation9 + $0xac0] sm:$0xff] %v3468
    %3981 = vst [vmem:[#allocation9 + $0xac8] sm:$0xff] %v3469
    %3982 = vst [vmem:[#allocation9 + $0xad0] sm:$0xff] %v3470
    %3983 = vst [vmem:[#allocation9 + $0xad8] sm:$0xff] %v3471
    %3984 = vst [vmem:[#allocation9 + $0xae0] sm:$0xff] %v3472
    %3985 = vst [vmem:[#allocation9 + $0xae8] sm:$0xff] %v3473
    %3986 = vst [vmem:[#allocation9 + $0xaf0] sm:$0xff] %v3474
    %3987 = vst [vmem:[#allocation9 + $0xaf8] sm:$0xff] %v3475
    %3988 = vst [vmem:[#allocation9 + $0xb00] sm:$0xff] %v3476
    %3989 = vst [vmem:[#allocation9 + $0xb08] sm:$0xff] %v3477
    %3990 = vst [vmem:[#allocation9 + $0xb10] sm:$0xff] %v3478
    %3991 = vst [vmem:[#allocation9 + $0xb18] sm:$0xff] %v3479
    %3992 = vst [vmem:[#allocation9 + $0xb20] sm:$0xff] %v3480
    %3993 = vst [vmem:[#allocation9 + $0xb28] sm:$0xff] %v3481
    %3994 = vst [vmem:[#allocation9 + $0xb30] sm:$0xff] %v3482
    %3995 = vst [vmem:[#allocation9 + $0xb38] sm:$0xff] %v3483
    %3996 = vst [vmem:[#allocation9 + $0xb40] sm:$0xff] %v3484
    %3997 = vst [vmem:[#allocation9 + $0xb48] sm:$0xff] %v3485
    %3998 = vst [vmem:[#allocation9 + $0xb50] sm:$0xff] %v3486
    %3999 = vst [vmem:[#allocation9 + $0xb58] sm:$0xff] %v3487
    %4000 = vst [vmem:[#allocation9 + $0xb60] sm:$0xff] %v3488
    %4001 = vst [vmem:[#allocation9 + $0xb68] sm:$0xff] %v3489
    %4002 = vst [vmem:[#allocation9 + $0xb70] sm:$0xff] %v3490
    %4003 = vst [vmem:[#allocation9 + $0xb78] sm:$0xff] %v3491
    %4004 = vst [vmem:[#allocation9 + $0xb80] sm:$0xff] %v3492
    %4005 = vst [vmem:[#allocation9 + $0xb88] sm:$0xff] %v3493
    %4006 = vst [vmem:[#allocation9 + $0xb90] sm:$0xff] %v3494
    %4007 = vst [vmem:[#allocation9 + $0xb98] sm:$0xff] %v3495
    %4008 = vst [vmem:[#allocation9 + $0xba0] sm:$0xff] %v3496
    %4009 = vst [vmem:[#allocation9 + $0xba8] sm:$0xff] %v3497
    %4010 = vst [vmem:[#allocation9 + $0xbb0] sm:$0xff] %v3498
    %4011 = vst [vmem:[#allocation9 + $0xbb8] sm:$0xff] %v3499
    %4012 = vst [vmem:[#allocation9 + $0xbc0] sm:$0xff] %v3500
    %4013 = vst [vmem:[#allocation9 + $0xbc8] sm:$0xff] %v3501
    %4014 = vst [vmem:[#allocation9 + $0xbd0] sm:$0xff] %v3502
    %4015 = vst [vmem:[#allocation9 + $0xbd8] sm:$0xff] %v3503
    %4016 = vst [vmem:[#allocation9 + $0xbe0] sm:$0xff] %v3504
    %4017 = vst [vmem:[#allocation9 + $0xbe8] sm:$0xff] %v3505
    %4018 = vst [vmem:[#allocation9 + $0xbf0] sm:$0xff] %v3506
    %4019 = vst [vmem:[#allocation9 + $0xbf8] sm:$0xff] %v3507
    %4020 = vst [vmem:[#allocation9 + $0xc00] sm:$0xff] %v3508
    %4021 = vst [vmem:[#allocation9 + $0xc08] sm:$0xff] %v3509
    %4022 = vst [vmem:[#allocation9 + $0xc10] sm:$0xff] %v3510
    %4023 = vst [vmem:[#allocation9 + $0xc18] sm:$0xff] %v3511
    %4024 = vst [vmem:[#allocation9 + $0xc20] sm:$0xff] %v3512
    %4025 = vst [vmem:[#allocation9 + $0xc28] sm:$0xff] %v3513
    %4026 = vst [vmem:[#allocation9 + $0xc30] sm:$0xff] %v3514
    %4027 = vst [vmem:[#allocation9 + $0xc38] sm:$0xff] %v3515
    %4028 = vst [vmem:[#allocation9 + $0xc40] sm:$0xff] %v3516
    %4029 = vst [vmem:[#allocation9 + $0xc48] sm:$0xff] %v3517
    %4030 = vst [vmem:[#allocation9 + $0xc50] sm:$0xff] %v3518
    %4031 = vst [vmem:[#allocation9 + $0xc58] sm:$0xff] %v3519
    %4032 = vst [vmem:[#allocation9 + $0xc60] sm:$0xff] %v3520
    %4033 = vst [vmem:[#allocation9 + $0xc68] sm:$0xff] %v3521
    %4034 = vst [vmem:[#allocation9 + $0xc70] sm:$0xff] %v3522
    %4035 = vst [vmem:[#allocation9 + $0xc78] sm:$0xff] %v3523
    %4036 = vst [vmem:[#allocation9 + $0xc80] sm:$0xff] %v3524
    %4037 = vst [vmem:[#allocation9 + $0xc88] sm:$0xff] %v3525
    %4038 = vst [vmem:[#allocation9 + $0xc90] sm:$0xff] %v3526
    %4039 = vst [vmem:[#allocation9 + $0xc98] sm:$0xff] %v3527
    %4040 = vst [vmem:[#allocation9 + $0xca0] sm:$0xff] %v3528
    %4041 = vst [vmem:[#allocation9 + $0xca8] sm:$0xff] %v3529
    %4042 = vst [vmem:[#allocation9 + $0xcb0] sm:$0xff] %v3530
    %4043 = vst [vmem:[#allocation9 + $0xcb8] sm:$0xff] %v3531
    %4044 = vst [vmem:[#allocation9 + $0xcc0] sm:$0xff] %v3532
    %4045 = vst [vmem:[#allocation9 + $0xcc8] sm:$0xff] %v3533
    %4046 = vst [vmem:[#allocation9 + $0xcd0] sm:$0xff] %v3534
    %4047 = vst [vmem:[#allocation9 + $0xcd8] sm:$0xff] %v3535
    %4048 = vst [vmem:[#allocation9 + $0xce0] sm:$0xff] %v3536
    %4049 = vst [vmem:[#allocation9 + $0xce8] sm:$0xff] %v3537
    %4050 = vst [vmem:[#allocation9 + $0xcf0] sm:$0xff] %v3538
    %4051 = vst [vmem:[#allocation9 + $0xcf8] sm:$0xff] %v3539
    %4052 = vst [vmem:[#allocation9 + $0xd00] sm:$0xff] %v3540
    %4053 = vst [vmem:[#allocation9 + $0xd08] sm:$0xff] %v3541
    %4054 = vst [vmem:[#allocation9 + $0xd10] sm:$0xff] %v3542
    %4055 = vst [vmem:[#allocation9 + $0xd18] sm:$0xff] %v3543
    %4056 = vst [vmem:[#allocation9 + $0xd20] sm:$0xff] %v3544
    %4057 = vst [vmem:[#allocation9 + $0xd28] sm:$0xff] %v3545
    %4058 = vst [vmem:[#allocation9 + $0xd30] sm:$0xff] %v3546
    %4059 = vst [vmem:[#allocation9 + $0xd38] sm:$0xff] %v3547
    %4060 = vst [vmem:[#allocation9 + $0xd40] sm:$0xff] %v3548
    %4061 = vst [vmem:[#allocation9 + $0xd48] sm:$0xff] %v3549
    %4062 = vst [vmem:[#allocation9 + $0xd50] sm:$0xff] %v3550
    %4063 = vst [vmem:[#allocation9 + $0xd58] sm:$0xff] %v3551
    %4064 = vst [vmem:[#allocation9 + $0xd60] sm:$0xff] %v3552
    %4065 = vst [vmem:[#allocation9 + $0xd68] sm:$0xff] %v3553
    %4066 = vst [vmem:[#allocation9 + $0xd70] sm:$0xff] %v3554
    %4067 = vst [vmem:[#allocation9 + $0xd78] sm:$0xff] %v3555
    %4068 = vst [vmem:[#allocation9 + $0xd80] sm:$0xff] %v3556
    %4069 = vst [vmem:[#allocation9 + $0xd88] sm:$0xff] %v3557
    %4070 = vst [vmem:[#allocation9 + $0xd90] sm:$0xff] %v3558
    %4071 = vst [vmem:[#allocation9 + $0xd98] sm:$0xff] %v3559
    %4072 = vst [vmem:[#allocation9 + $0xda0] sm:$0xff] %v3560
    %4073 = vst [vmem:[#allocation9 + $0xda8] sm:$0xff] %v3561
    %4074 = vst [vmem:[#allocation9 + $0xdb0] sm:$0xff] %v3562
    %4075 = vst [vmem:[#allocation9 + $0xdb8] sm:$0xff] %v3563
    %4076 = vst [vmem:[#allocation9 + $0xdc0] sm:$0xff] %v3564
    %4077 = vst [vmem:[#allocation9 + $0xdc8] sm:$0xff] %v3565
    %4078 = vst [vmem:[#allocation9 + $0xdd0] sm:$0xff] %v3566
    %4079 = vst [vmem:[#allocation9 + $0xdd8] sm:$0xff] %v3567
    %4080 = vst [vmem:[#allocation9 + $0xde0] sm:$0xff] %v3568
    %4081 = vst [vmem:[#allocation9 + $0xde8] sm:$0xff] %v3569
    %4082 = vst [vmem:[#allocation9 + $0xdf0] sm:$0xff] %v3570
    %4083 = vst [vmem:[#allocation9 + $0xdf8] sm:$0xff] %v3571
    %4084 = vst [vmem:[#allocation9 + $0xe00] sm:$0xff] %v3572
    %4085 = vst [vmem:[#allocation9 + $0xe08] sm:$0xff] %v3573
    %4086 = vst [vmem:[#allocation9 + $0xe10] sm:$0xff] %v3574
    %4087 = vst [vmem:[#allocation9 + $0xe18] sm:$0xff] %v3575
    %4088 = vst [vmem:[#allocation9 + $0xe20] sm:$0xff] %v3576
    %4089 = vst [vmem:[#allocation9 + $0xe28] sm:$0xff] %v3577
    %4090 = vst [vmem:[#allocation9 + $0xe30] sm:$0xff] %v3578
    %4091 = vst [vmem:[#allocation9 + $0xe38] sm:$0xff] %v3579
    %4092 = vst [vmem:[#allocation9 + $0xe40] sm:$0xff] %v3580
    %4093 = vst [vmem:[#allocation9 + $0xe48] sm:$0xff] %v3581
    %4094 = vst [vmem:[#allocation9 + $0xe50] sm:$0xff] %v3582
    %4095 = vst [vmem:[#allocation9 + $0xe58] sm:$0xff] %v3583
    %4096 = vst [vmem:[#allocation9 + $0xe60] sm:$0xff] %v3584
    %4097 = vst [vmem:[#allocation9 + $0xe68] sm:$0xff] %v3585
    %4098 = vst [vmem:[#allocation9 + $0xe70] sm:$0xff] %v3586
    %4099 = vst [vmem:[#allocation9 + $0xe78] sm:$0xff] %v3587
    %4100 = vst [vmem:[#allocation9 + $0xe80] sm:$0xff] %v3588
    %4101 = vst [vmem:[#allocation9 + $0xe88] sm:$0xff] %v3589
    %4102 = vst [vmem:[#allocation9 + $0xe90] sm:$0xff] %v3590
    %4103 = vst [vmem:[#allocation9 + $0xe98] sm:$0xff] %v3591
    %4104 = vst [vmem:[#allocation9 + $0xea0] sm:$0xff] %v3592
    %4105 = vst [vmem:[#allocation9 + $0xea8] sm:$0xff] %v3593
    %4106 = vst [vmem:[#allocation9 + $0xeb0] sm:$0xff] %v3594
    %4107 = vst [vmem:[#allocation9 + $0xeb8] sm:$0xff] %v3595
    %4108 = vst [vmem:[#allocation9 + $0xec0] sm:$0xff] %v3596
    %4109 = vst [vmem:[#allocation9 + $0xec8] sm:$0xff] %v3597
    %4110 = vst [vmem:[#allocation9 + $0xed0] sm:$0xff] %v3598
    %4111 = vst [vmem:[#allocation9 + $0xed8] sm:$0xff] %v3599
    %4112 = vst [vmem:[#allocation9 + $0xee0] sm:$0xff] %v3600
    %4113 = vst [vmem:[#allocation9 + $0xee8] sm:$0xff] %v3601
    %4114 = vst [vmem:[#allocation9 + $0xef0] sm:$0xff] %v3602
    %4115 = vst [vmem:[#allocation9 + $0xef8] sm:$0xff] %v3603
    %4116 = vst [vmem:[#allocation9 + $0xf00] sm:$0xff] %v3604
    %4117 = vst [vmem:[#allocation9 + $0xf08] sm:$0xff] %v3605
    %4118 = vst [vmem:[#allocation9 + $0xf10] sm:$0xff] %v3606
    %4119 = vst [vmem:[#allocation9 + $0xf18] sm:$0xff] %v3607
    %4120 = vst [vmem:[#allocation9 + $0xf20] sm:$0xff] %v3608
    %4121 = vst [vmem:[#allocation9 + $0xf28] sm:$0xff] %v3609
    %4122 = vst [vmem:[#allocation9 + $0xf30] sm:$0xff] %v3610
    %4123 = vst [vmem:[#allocation9 + $0xf38] sm:$0xff] %v3611
    %4124 = vst [vmem:[#allocation9 + $0xf40] sm:$0xff] %v3612
    %4125 = vst [vmem:[#allocation9 + $0xf48] sm:$0xff] %v3613
    %4126 = vst [vmem:[#allocation9 + $0xf50] sm:$0xff] %v3614
    %4127 = vst [vmem:[#allocation9 + $0xf58] sm:$0xff] %v3615
    %4128 = vst [vmem:[#allocation9 + $0xf60] sm:$0xff] %v3616
    %4129 = vst [vmem:[#allocation9 + $0xf68] sm:$0xff] %v3617
    %4130 = vst [vmem:[#allocation9 + $0xf70] sm:$0xff] %v3618
    %4131 = vst [vmem:[#allocation9 + $0xf78] sm:$0xff] %v3619
    %4132 = vst [vmem:[#allocation9 + $0xf80] sm:$0xff] %v3620
    %4133 = vst [vmem:[#allocation9 + $0xf88] sm:$0xff] %v3621
    %4134 = vst [vmem:[#allocation9 + $0xf90] sm:$0xff] %v3622
    %4135 = vst [vmem:[#allocation9 + $0xf98] sm:$0xff] %v3623
    %4136 = vst [vmem:[#allocation9 + $0xfa0] sm:$0xff] %v3624
    %4137 = vst [vmem:[#allocation9 + $0xfa8] sm:$0xff] %v3625
    %4138 = vst [vmem:[#allocation9 + $0xfb0] sm:$0xff] %v3626
    %4139 = vst [vmem:[#allocation9 + $0xfb8] sm:$0xff] %v3627
    %4140 = vst [vmem:[#allocation9 + $0xfc0] sm:$0xff] %v3628
    %4141 = vst [vmem:[#allocation9 + $0xfc8] sm:$0xff] %v3629
    %4142 = vst [vmem:[#allocation9 + $0xfd0] sm:$0xff] %v3630
    %4143 = vst [vmem:[#allocation9 + $0xfd8] sm:$0xff] %v3631
    %4144 = vst [vmem:[#allocation9 + $0xfe0] sm:$0xff] %v3632
    %4145 = vst [vmem:[#allocation9 + $0xfe8] sm:$0xff] %v3633
    %4146 = vst [vmem:[#allocation9 + $0xff0] sm:$0xff] %v3634
    %4147 = vst [vmem:[#allocation9 + $0xff8] sm:$0xff] %v3635
    // Predicated region
    $region26: #{tpu_custom_call.1} parent=1 // pred_check
      _
    $region27: #{tpu_custom_call.1} parent=1 // pred_check_branch
      %4149 = sbr.rel (0) target = $region29
    $region28: #{tpu_custom_call.1} parent=1 // pred_region
      %s4151 = ssub.s32 65536, 65536
      %4152 = vsyncadd [#allocation6], %s4151
      %s4153 = sshll.u32 [#allocation9], 4
      %s4154 = int_to_ptr.vmem [resolvable:$true] %s4153
      %4159 = dma.vmem_to_hbm [thread:$0]  %s4154, 65536, %s4, [#allocation6], 4096, 4096, 256
    $region29: #{tpu_custom_call.1} parent=1 // pred_fallthru
      _
    // Predicated region
    $region30: #{tpu_custom_call.1} parent=1 // pred_check
      _
    $region31: #{tpu_custom_call.1} parent=1 // pred_check_branch
      %4161 = sbr.rel (0) target = $region33
    $region32: #{tpu_custom_call.1} parent=1 // pred_region
      %4162 = dma.done [#allocation6], 65536
    $region33: #{tpu_custom_call.1} parent=1 // pred_fallthru
      _
    %4163 = vsyncpa [#allocation5], 1
    %4164 = vsyncpa [#allocation8], 1
    %4165 = vsyncpa [#allocation6], 1

</llo_original>
